<compile_context>
chip_gen: v6e
topology: v6e:2x2x1
jax: 0.10.0
libtpu: 0.0.40
codegen_flags: <defaults>
</compile_context>

<pallas_src>
import jax
import jax.numpy as jnp
from jax import lax
from jax.experimental import pallas as pl
from jax.experimental.pallas import tpu as pltpu


def _round_up(x, m):
    return -(-x // m) * m


# ------------------------------------------------------------------ kernel --

def _alexnet_kernel(p_ref, w1_ref, b1_ref, w2_ref, b2_ref, w3_ref, b3_ref,
                    w4_ref, b4_ref, w5_ref, b5_ref, f1w_ref, f1b_ref,
                    f2w_ref, f2b_ref, f3w_ref, f3b_ref, o_ref, x1_scr):
    """Whole AlexNet forward for one block of BB images, entirely in VMEM.

    p_ref:  (1, 16*BB, K1p) bf16 im2col patches of the pool-folded conv1,
            rows ordered (spatial position m, image b) -- m-major.
    x1_scr: (16*BB, 128) f32 scratch holding the ReLU'd conv1 map.
    o_ref:  (1, BB, 128) f32 logits (columns >= 10 are zero padding).
    """
    bb = o_ref.shape[1]
    n_sp = x1_scr.shape[0] // bb                       # 16 spatial positions (4x4)

    # conv1 (AvgPool(3,2) folded into the weights) + bias + ReLU.
    x1 = jnp.dot(p_ref[0], w1_ref[...], preferred_element_type=jnp.float32)
    x1_scr[...] = jnp.maximum(x1 + b1_ref[...], 0.0)

    # conv2 (AvgPool(2,1) folded): its output is 1x1, so it is a dense layer over
    # the flattened 4x4x128 map.  Gather the 16 spatial rows into the lane axis
    # (m-major) to match the prepared (16*128, 256) weight matrix.
    xcat = jnp.concatenate(
        [x1_scr[pl.ds(m * bb, bb), :] for m in range(n_sp)], axis=-1)
    x = jnp.dot(xcat.astype(jnp.bfloat16), w2_ref[...],
                preferred_element_type=jnp.float32) + b2_ref[...]
    x = jnp.maximum(x, 0.0)

    def dense(v, w_ref, b_ref, relu=True):
        y = jnp.dot(v.astype(jnp.bfloat16), w_ref[...],
                    preferred_element_type=jnp.float32) + b_ref[...]
        return jnp.maximum(y, 0.0) if relu else y

    x = dense(x, w3_ref, b3_ref)                  # conv3 (centre tap, 1x1 map)
    x = dense(x, w4_ref, b4_ref)                  # conv4
    x = dense(x, w5_ref, b5_ref)                  # conv5
    x = dense(x, f1w_ref, f1b_ref)                # fc1
    x = dense(x, f2w_ref, f2b_ref)                # fc2
    x = dense(x, f3w_ref, f3b_ref, relu=False)    # fc3
    o_ref[0] = x


# -------------------------------------------------------------- parameters --

def init_params(key):
    """Same parameter shapes / layout as the PyTorch module (NCHW / OIHW)."""
    def conv_p(k, c_out, c_in, ks):
        k1, k2 = jax.random.split(k)
        fan_in = c_in * ks * ks
        w = jax.random.normal(k1, (c_out, c_in, ks, ks), jnp.float32) / jnp.sqrt(fan_in)
        b = jax.random.normal(k2, (c_out,), jnp.float32) * 0.01
        return w, b

    def lin_p(k, n_out, n_in):
        k1, k2 = jax.random.split(k)
        w = jax.random.normal(k1, (n_out, n_in), jnp.float32) / jnp.sqrt(n_in)
        b = jax.random.normal(k2, (n_out,), jnp.float32) * 0.01
        return w, b

    keys = jax.random.split(key, 8)
    return {
        "conv1": conv_p(keys[0], 96, 3, 11),
        "conv2": conv_p(keys[1], 256, 96, 5),
        "conv3": conv_p(keys[2], 384, 256, 3),
        "conv4": conv_p(keys[3], 384, 384, 3),
        "conv5": conv_p(keys[4], 256, 384, 3),
        "fc1": lin_p(keys[5], 256, 256),
        "fc2": lin_p(keys[6], 256, 256),
        "fc3": lin_p(keys[7], 10, 256),
    }


def prepare_params(params):
    """One-time prep: fold the AvgPools into the conv weights, reshape to
    (K, C_out) matmul layout, pad to 128-lane multiples, cast matmul operands to
    bf16 (biases stay f32)."""
    w1, b1 = params["conv1"]; w2, b2 = params["conv2"]
    w3, b3 = params["conv3"]; w4, b4 = params["conv4"]; w5, b5 = params["conv5"]
    f1w, f1b = params["fc1"]; f2w, f2b = params["fc2"]; f3w, f3b = params["fc3"]

    def bias_row(b, cols=None):
        cols = b.shape[0] if cols is None else cols
        return jnp.pad(b.astype(jnp.float32), (0, cols - b.shape[0])).reshape(1, cols)

    # conv1 + AvgPool(3,2)  ->  k=19, s=8, p=9 conv (mean of 9 shifted kernels).
    w1f = jnp.zeros((96, 3, 19, 19), jnp.float32)
    for di in range(3):
        for dj in range(3):
            w1f = w1f.at[:, :, 4 * di:4 * di + 11, 4 * dj:4 * dj + 11].add(w1 / 9.0)
    k1 = 3 * 19 * 19                                    # 1083; channel-major, (kh,kw)-minor
    k1p, c1p = _round_up(k1, 128), _round_up(96, 128)   # 1152, 128
    w1m = jnp.pad(w1f.reshape(96, k1).T, ((0, k1p - k1), (0, c1p - 96)))

    # conv2 + AvgPool(2,1)  ->  dense layer over the flattened 4x4x128 conv1 map;
    # its kernel is the 2x2 box filter (stride 1) of the original 5x5 kernel.
    w2s = (w2[:, :, 0:4, 0:4] + w2[:, :, 0:4, 1:5] +
           w2[:, :, 1:5, 0:4] + w2[:, :, 1:5, 1:5]) * 0.25          # (256, 96, 4, 4)
    w2t = jnp.transpose(w2s, (2, 3, 1, 0))                          # (i, j, c_in, c_out)
    w2t = jnp.pad(w2t, ((0, 0), (0, 0), (0, c1p - 96), (0, 0)))     # pad c_in 96 -> 128
    w2m = w2t.reshape(16 * c1p, 256)                                # row = m*128 + c

    # conv3/4/5 act on a 1x1 map with padding=1 -> only the centre tap contributes.
    def centre(w):
        return w[:, :, 1, 1].T                                      # (c_in, c_out)

    nc_p = _round_up(f3w.shape[0], 128)                             # 10 -> 128
    bf = jnp.bfloat16
    return {
        "w1": w1m.astype(bf), "b1": bias_row(b1, c1p),
        "w2": w2m.astype(bf), "b2": bias_row(b2),
        "w3": centre(w3).astype(bf), "b3": bias_row(b3),
        "w4": centre(w4).astype(bf), "b4": bias_row(b4),
        "w5": centre(w5).astype(bf), "b5": bias_row(b5),
        "f1w": f1w.T.astype(bf), "f1b": bias_row(f1b),
        "f2w": f2w.T.astype(bf), "f2b": bias_row(f2b),
        "f3w": jnp.pad(f3w.T, ((0, 0), (0, nc_p - f3w.shape[0]))).astype(bf),
        "f3b": bias_row(f3b, nc_p),
    }


# ------------------------------------------------------------------ forward --

_WEIGHT_KEYS = ("w1", "b1", "w2", "b2", "w3", "b3", "w4", "b4", "w5", "b5",
                "f1w", "f1b", "f2w", "f2b", "f3w", "f3b")


def _const_spec(shape):
    nd = len(shape)
    return pl.BlockSpec(tuple(int(d) for d in shape),
                        lambda i, _nd=nd: (0,) * _nd)


def alexnet_forward(wp, x, num_classes=10):
    """x: (N, 3, H, W) float32 (PyTorch NCHW). Returns (N, num_classes)."""
    n = x.shape[0]
    bb = max(1, min(8, n // 2))              # images per grid step (>=2 steps for v7x)
    nblk = pl.cdiv(n, bb)
    npad = nblk * bb
    k1p, c1p = wp["w1"].shape                # (1152, 128)
    c_out = wp["f3w"].shape[1]               # 128 (num_classes padded)

    xh = jnp.transpose(x, (0, 2, 3, 1)).astype(jnp.bfloat16)        # NHWC + bf16, once
    if npad != n:
        xh = jnp.pad(xh, ((0, npad - n), (0, 0), (0, 0), (0, 0)))

    # im2col for the pool-folded conv1 (k=19, s=8, p=9); feature order is
    # channel-major, (kh, kw)-minor, matching the prepared w1 matrix.
    p = lax.conv_general_dilated_patches(
        xh, (19, 19), (8, 8), [(9, 9), (9, 9)],
        dimension_numbers=("NHWC", "HWIO", "NHWC"))
    ho, wo, k1 = p.shape[1], p.shape[2], p.shape[3]
    m_sp = ho * wo
    assert (ho, wo) == (4, 4), "input size incompatible with the Flatten->Linear(256) head"

    # Rows ordered (block, spatial m, image-in-block); pad K to the weight's K
    # (jnp.pad only -- no zeros().at[].set() copies).
    p = p.reshape(nblk, bb, m_sp, k1)
    p = jnp.transpose(p, (0, 2, 1, 3)).reshape(nblk, m_sp * bb, k1)
    p = jnp.pad(p, ((0, 0), (0, 0), (0, k1p - k1)))

    in_specs = [pl.BlockSpec((1, m_sp * bb, k1p), lambda i: (i, 0, 0))]
    in_specs += [_const_spec(wp[k].shape) for k in _WEIGHT_KEYS]

    out = pl.pallas_call(
        _alexnet_kernel,
        out_shape=jax.ShapeDtypeStruct((nblk, bb, c_out), jnp.float32),
        grid=(nblk,),
        in_specs=in_specs,
        out_specs=pl.BlockSpec((1, bb, c_out), lambda i: (i, 0, 0)),
        scratch_shapes=[pltpu.VMEM((m_sp * bb, c1p), jnp.float32)],
        compiler_params=pltpu.CompilerParams(
            dimension_semantics=("parallel",)),
    )(p, *(wp[k] for k in _WEIGHT_KEYS))

    return out.reshape(npad, c_out)[:n, :num_classes]


# -------------------------------------------------------- f32 reference ----

def alexnet_reference(params, x):
    """Pure-JAX f32 reference of the PyTorch graph (for the numeric self-check)."""
    hp = lax.Precision.HIGHEST

    def conv(v, wb, stride, pad):
        w, b = wb
        y = lax.conv_general_dilated(
            v, w, (stride, stride), [(pad, pad), (pad, pad)],
            dimension_numbers=("NCHW", "OIHW", "NCHW"), precision=hp)
        return y + b[None, :, None, None]

    def avgpool(v, k, s):
        y = lax.reduce_window(v, 0.0, lax.add, (1, 1, k, k), (1, 1, s, s), "VALID")
        return y / float(k * k)

    v = jnp.maximum(avgpool(conv(x, params["conv1"], 4, 9), 3, 2), 0.0)
    v = jnp.maximum(avgpool(conv(v, params["conv2"], 1, 1), 2, 1), 0.0)
    v = jnp.maximum(conv(v, params["conv3"], 1, 1), 0.0)
    v = jnp.maximum(conv(v, params["conv4"], 1, 1), 0.0)
    v = jnp.maximum(conv(v, params["conv5"], 1, 1), 0.0)
    v = v.reshape(v.shape[0], -1)
    for name in ("fc1", "fc2"):
        w, b = params[name]
        v = jnp.maximum(jnp.dot(v, w.T, precision=hp) + b, 0.0)
    w, b = params["fc3"]
    return jnp.dot(v, w.T, precision=hp) + b


if __name__ == "__main__":
    key = jax.random.PRNGKey(0)
    kp, kx = jax.random.split(key)
    params = init_params(kp)
    prepped = prepare_params(params)          # one-time weight prep (not per step)
    # CIFAR-sized input: the only spatial size compatible with this module's
    # Flatten -> Linear(256, 256) head.
    x = jax.random.normal(kx, (2, 3, 32, 32), jnp.float32)

    out = jax.jit(alexnet_forward)(prepped, x)
    jax.block_until_ready(out)
    assert out.shape == (2, 10)

    # Numeric self-check vs. the unfused f32 reference of the same graph
    # (kernel uses bf16 matmul operands -> loose tolerance).
    ref = jax.jit(alexnet_reference)(params, x)
    err = float(jnp.max(jnp.abs(out - ref)))
    scale = float(jnp.max(jnp.abs(ref)))
    assert err <= 0.1 * scale + 0.05, f"mismatch vs reference: err={err}, scale={scale}"
    print("KERNEL_OK")
</pallas_src>

<mosaic_0001>
module attributes {stable_mosaic.version = 11 : i64} {
  func.func @_alexnet_kernel(%arg0: i32, %arg1: memref<1x16x1152xbf16, #tpu.memory_space<vmem>>, %arg2: memref<1152x128xbf16, #tpu.memory_space<vmem>>, %arg3: memref<1x128xf32, #tpu.memory_space<vmem>>, %arg4: memref<2048x256xbf16, #tpu.memory_space<vmem>>, %arg5: memref<1x256xf32, #tpu.memory_space<vmem>>, %arg6: memref<256x384xbf16, #tpu.memory_space<vmem>>, %arg7: memref<1x384xf32, #tpu.memory_space<vmem>>, %arg8: memref<384x384xbf16, #tpu.memory_space<vmem>>, %arg9: memref<1x384xf32, #tpu.memory_space<vmem>>, %arg10: memref<384x256xbf16, #tpu.memory_space<vmem>>, %arg11: memref<1x256xf32, #tpu.memory_space<vmem>>, %arg12: memref<256x256xbf16, #tpu.memory_space<vmem>>, %arg13: memref<1x256xf32, #tpu.memory_space<vmem>>, %arg14: memref<256x256xbf16, #tpu.memory_space<vmem>>, %arg15: memref<1x256xf32, #tpu.memory_space<vmem>>, %arg16: memref<256x128xbf16, #tpu.memory_space<vmem>>, %arg17: memref<1x128xf32, #tpu.memory_space<vmem>>, %arg18: memref<1x1x128xf32, #tpu.memory_space<vmem>>, %arg19: memref<16x128xf32, #tpu.memory_space<vmem>>) attributes {dimension_semantics = [#tpu.dimension_semantics<parallel>], iteration_bounds = array<i64: 2>, scalar_prefetch = 0 : i64, scratch_operands = 1 : i64, tpu.core_type = #tpu.core_type<tc>, window_params = [{transform_indices = @transform_0, window_bounds = array<i64: 1, 16, 1152>}, {pipeline_mode = #tpu.pipeline_mode<synchronous>, transform_indices = @transform_1, window_bounds = array<i64: 1152, 128>}, {pipeline_mode = #tpu.pipeline_mode<synchronous>, transform_indices = @transform_2, window_bounds = array<i64: 1, 128>}, {pipeline_mode = #tpu.pipeline_mode<synchronous>, transform_indices = @transform_3, window_bounds = array<i64: 2048, 256>}, {pipeline_mode = #tpu.pipeline_mode<synchronous>, transform_indices = @transform_4, window_bounds = array<i64: 1, 256>}, {pipeline_mode = #tpu.pipeline_mode<synchronous>, transform_indices = @transform_5, window_bounds = array<i64: 256, 384>}, {pipeline_mode = #tpu.pipeline_mode<synchronous>, transform_indices = @transform_6, window_bounds = array<i64: 1, 384>}, {pipeline_mode = #tpu.pipeline_mode<synchronous>, transform_indices = @transform_7, window_bounds = array<i64: 384, 384>}, {pipeline_mode = #tpu.pipeline_mode<synchronous>, transform_indices = @transform_8, window_bounds = array<i64: 1, 384>}, {pipeline_mode = #tpu.pipeline_mode<synchronous>, transform_indices = @transform_9, window_bounds = array<i64: 384, 256>}, {pipeline_mode = #tpu.pipeline_mode<synchronous>, transform_indices = @transform_10, window_bounds = array<i64: 1, 256>}, {pipeline_mode = #tpu.pipeline_mode<synchronous>, transform_indices = @transform_11, window_bounds = array<i64: 256, 256>}, {pipeline_mode = #tpu.pipeline_mode<synchronous>, transform_indices = @transform_12, window_bounds = array<i64: 1, 256>}, {pipeline_mode = #tpu.pipeline_mode<synchronous>, transform_indices = @transform_13, window_bounds = array<i64: 256, 256>}, {pipeline_mode = #tpu.pipeline_mode<synchronous>, transform_indices = @transform_14, window_bounds = array<i64: 1, 256>}, {pipeline_mode = #tpu.pipeline_mode<synchronous>, transform_indices = @transform_15, window_bounds = array<i64: 256, 128>}, {pipeline_mode = #tpu.pipeline_mode<synchronous>, transform_indices = @transform_16, window_bounds = array<i64: 1, 128>}, {transform_indices = @transform_17, window_bounds = array<i64: 1, 1, 128>}]} {
    %c0 = arith.constant 0 : index
    %c0_0 = arith.constant 0 : index
    %c0_1 = arith.constant 0 : index
    %0 = vector.load %arg1[%c0, %c0_0, %c0_1] : memref<1x16x1152xbf16, #tpu.memory_space<vmem>>, vector<1x16x1152xbf16>
    %1 = vector.shape_cast %0 : vector<1x16x1152xbf16> to vector<16x1152xbf16>
    %c0_2 = arith.constant 0 : index
    %c0_3 = arith.constant 0 : index
    %2 = vector.load %arg2[%c0_2, %c0_3] : memref<1152x128xbf16, #tpu.memory_space<vmem>>, vector<1152x128xbf16>
    %cst = arith.constant dense<0.000000e+00> : vector<16x128xf32>
    %3 = tpu.matmul %1, %2, %cst {dimension_numbers = #tpu.dot_dimension_numbers<[1], [0], [0], [1], [0, 0, 1, 1], [], []>} : vector<16x1152xbf16>, vector<1152x128xbf16>, vector<16x128xf32> -> vector<16x128xf32>
    %c0_4 = arith.constant 0 : index
    %c0_5 = arith.constant 0 : index
    %4 = vector.load %arg3[%c0_4, %c0_5] : memref<1x128xf32, #tpu.memory_space<vmem>>, vector<1x128xf32>
    %5 = vector.broadcast %4 : vector<1x128xf32> to vector<16x128xf32>
    %6 = arith.addf %3, %5 : vector<16x128xf32>
    %cst_6 = arith.constant 0.000000e+00 : f32
    %7 = vector.broadcast %cst_6 : f32 to vector<16x128xf32>
    %8 = arith.maximumf %6, %7 : vector<16x128xf32>
    %c0_7 = arith.constant 0 : index
    %c0_8 = arith.constant 0 : index
    %9 = vector.load %arg19[%c0_7, %c0_8] : memref<16x128xf32, #tpu.memory_space<vmem>>, vector<16x128xf32>
    tpu.vector_store %arg19[%c0_7, %c0_8], %8 {strides = array<i32>} : memref<16x128xf32, #tpu.memory_space<vmem>>, vector<16x128xf32>,
    %c0_9 = arith.constant 0 : index
    %c0_10 = arith.constant 0 : index
    %10 = vector.load %arg19[%c0_9, %c0_10] : memref<16x128xf32, #tpu.memory_space<vmem>>, vector<1x128xf32>
    %c1 = arith.constant 1 : index
    %c0_11 = arith.constant 0 : index
    %11 = vector.load %arg19[%c1, %c0_11] : memref<16x128xf32, #tpu.memory_space<vmem>>, vector<1x128xf32>
    %c2 = arith.constant 2 : index
    %c0_12 = arith.constant 0 : index
    %12 = vector.load %arg19[%c2, %c0_12] : memref<16x128xf32, #tpu.memory_space<vmem>>, vector<1x128xf32>
    %c3 = arith.constant 3 : index
    %c0_13 = arith.constant 0 : index
    %13 = vector.load %arg19[%c3, %c0_13] : memref<16x128xf32, #tpu.memory_space<vmem>>, vector<1x128xf32>
    %c4 = arith.constant 4 : index
    %c0_14 = arith.constant 0 : index
    %14 = vector.load %arg19[%c4, %c0_14] : memref<16x128xf32, #tpu.memory_space<vmem>>, vector<1x128xf32>
    %c5 = arith.constant 5 : index
    %c0_15 = arith.constant 0 : index
    %15 = vector.load %arg19[%c5, %c0_15] : memref<16x128xf32, #tpu.memory_space<vmem>>, vector<1x128xf32>
    %c6 = arith.constant 6 : index
    %c0_16 = arith.constant 0 : index
    %16 = vector.load %arg19[%c6, %c0_16] : memref<16x128xf32, #tpu.memory_space<vmem>>, vector<1x128xf32>
    %c7 = arith.constant 7 : index
    %c0_17 = arith.constant 0 : index
    %17 = vector.load %arg19[%c7, %c0_17] : memref<16x128xf32, #tpu.memory_space<vmem>>, vector<1x128xf32>
    %c8 = arith.constant 8 : index
    %c0_18 = arith.constant 0 : index
    %18 = vector.load %arg19[%c8, %c0_18] : memref<16x128xf32, #tpu.memory_space<vmem>>, vector<1x128xf32>
    %c9 = arith.constant 9 : index
    %c0_19 = arith.constant 0 : index
    %19 = vector.load %arg19[%c9, %c0_19] : memref<16x128xf32, #tpu.memory_space<vmem>>, vector<1x128xf32>
    %c10 = arith.constant 10 : index
    %c0_20 = arith.constant 0 : index
    %20 = vector.load %arg19[%c10, %c0_20] : memref<16x128xf32, #tpu.memory_space<vmem>>, vector<1x128xf32>
    %c11 = arith.constant 11 : index
    %c0_21 = arith.constant 0 : index
    %21 = vector.load %arg19[%c11, %c0_21] : memref<16x128xf32, #tpu.memory_space<vmem>>, vector<1x128xf32>
    %c12 = arith.constant 12 : index
    %c0_22 = arith.constant 0 : index
    %22 = vector.load %arg19[%c12, %c0_22] : memref<16x128xf32, #tpu.memory_space<vmem>>, vector<1x128xf32>
    %c13 = arith.constant 13 : index
    %c0_23 = arith.constant 0 : index
    %23 = vector.load %arg19[%c13, %c0_23] : memref<16x128xf32, #tpu.memory_space<vmem>>, vector<1x128xf32>
    %c14 = arith.constant 14 : index
    %c0_24 = arith.constant 0 : index
    %24 = vector.load %arg19[%c14, %c0_24] : memref<16x128xf32, #tpu.memory_space<vmem>>, vector<1x128xf32>
    %c15 = arith.constant 15 : index
    %c0_25 = arith.constant 0 : index
    %25 = vector.load %arg19[%c15, %c0_25] : memref<16x128xf32, #tpu.memory_space<vmem>>, vector<1x128xf32>
    %26 = tpu.concatenate %10, %11, %12, %13, %14, %15, %16, %17, %18, %19, %20, %21, %22, %23, %24, %25 in 1 : vector<1x128xf32>, vector<1x128xf32>, vector<1x128xf32>, vector<1x128xf32>, vector<1x128xf32>, vector<1x128xf32>, vector<1x128xf32>, vector<1x128xf32>, vector<1x128xf32>, vector<1x128xf32>, vector<1x128xf32>, vector<1x128xf32>, vector<1x128xf32>, vector<1x128xf32>, vector<1x128xf32>, vector<1x128xf32> -> vector<1x2048xf32>
    %27 = arith.truncf %26 : vector<1x2048xf32> to vector<1x2048xbf16>
    %c0_26 = arith.constant 0 : index
    %c0_27 = arith.constant 0 : index
    %28 = vector.load %arg4[%c0_26, %c0_27] : memref<2048x256xbf16, #tpu.memory_space<vmem>>, vector<2048x256xbf16>
    %cst_28 = arith.constant dense<0.000000e+00> : vector<1x256xf32>
    %29 = tpu.matmul %27, %28, %cst_28 {dimension_numbers = #tpu.dot_dimension_numbers<[1], [0], [0], [1], [0, 0, 1, 1], [], []>} : vector<1x2048xbf16>, vector<2048x256xbf16>, vector<1x256xf32> -> vector<1x256xf32>
    %c0_29 = arith.constant 0 : index
    %c0_30 = arith.constant 0 : index
    %30 = vector.load %arg5[%c0_29, %c0_30] : memref<1x256xf32, #tpu.memory_space<vmem>>, vector<1x256xf32>
    %31 = arith.addf %29, %30 : vector<1x256xf32>
    %cst_31 = arith.constant 0.000000e+00 : f32
    %32 = vector.broadcast %cst_31 : f32 to vector<1x256xf32>
    %33 = arith.maximumf %31, %32 : vector<1x256xf32>
    %34 = arith.truncf %33 : vector<1x256xf32> to vector<1x256xbf16>
    %c0_32 = arith.constant 0 : index
    %c0_33 = arith.constant 0 : index
    %35 = vector.load %arg6[%c0_32, %c0_33] : memref<256x384xbf16, #tpu.memory_space<vmem>>, vector<256x384xbf16>
    %cst_34 = arith.constant dense<0.000000e+00> : vector<1x384xf32>
    %36 = tpu.matmul %34, %35, %cst_34 {dimension_numbers = #tpu.dot_dimension_numbers<[1], [0], [0], [1], [0, 0, 1, 1], [], []>} : vector<1x256xbf16>, vector<256x384xbf16>, vector<1x384xf32> -> vector<1x384xf32>
    %c0_35 = arith.constant 0 : index
    %c0_36 = arith.constant 0 : index
    %37 = vector.load %arg7[%c0_35, %c0_36] : memref<1x384xf32, #tpu.memory_space<vmem>>, vector<1x384xf32>
    %38 = arith.addf %36, %37 : vector<1x384xf32>
    %cst_37 = arith.constant 0.000000e+00 : f32
    %39 = vector.broadcast %cst_37 : f32 to vector<1x384xf32>
    %40 = arith.maximumf %38, %39 : vector<1x384xf32>
    %41 = arith.truncf %40 : vector<1x384xf32> to vector<1x384xbf16>
    %c0_38 = arith.constant 0 : index
    %c0_39 = arith.constant 0 : index
    %42 = vector.load %arg8[%c0_38, %c0_39] : memref<384x384xbf16, #tpu.memory_space<vmem>>, vector<384x384xbf16>
    %cst_40 = arith.constant dense<0.000000e+00> : vector<1x384xf32>
    %43 = tpu.matmul %41, %42, %cst_40 {dimension_numbers = #tpu.dot_dimension_numbers<[1], [0], [0], [1], [0, 0, 1, 1], [], []>} : vector<1x384xbf16>, vector<384x384xbf16>, vector<1x384xf32> -> vector<1x384xf32>
    %c0_41 = arith.constant 0 : index
    %c0_42 = arith.constant 0 : index
    %44 = vector.load %arg9[%c0_41, %c0_42] : memref<1x384xf32, #tpu.memory_space<vmem>>, vector<1x384xf32>
    %45 = arith.addf %43, %44 : vector<1x384xf32>
    %cst_43 = arith.constant 0.000000e+00 : f32
    %46 = vector.broadcast %cst_43 : f32 to vector<1x384xf32>
    %47 = arith.maximumf %45, %46 : vector<1x384xf32>
    %48 = arith.truncf %47 : vector<1x384xf32> to vector<1x384xbf16>
    %c0_44 = arith.constant 0 : index
    %c0_45 = arith.constant 0 : index
    %49 = vector.load %arg10[%c0_44, %c0_45] : memref<384x256xbf16, #tpu.memory_space<vmem>>, vector<384x256xbf16>
    %cst_46 = arith.constant dense<0.000000e+00> : vector<1x256xf32>
    %50 = tpu.matmul %48, %49, %cst_46 {dimension_numbers = #tpu.dot_dimension_numbers<[1], [0], [0], [1], [0, 0, 1, 1], [], []>} : vector<1x384xbf16>, vector<384x256xbf16>, vector<1x256xf32> -> vector<1x256xf32>
    %c0_47 = arith.constant 0 : index
    %c0_48 = arith.constant 0 : index
    %51 = vector.load %arg11[%c0_47, %c0_48] : memref<1x256xf32, #tpu.memory_space<vmem>>, vector<1x256xf32>
    %52 = arith.addf %50, %51 : vector<1x256xf32>
    %cst_49 = arith.constant 0.000000e+00 : f32
    %53 = vector.broadcast %cst_49 : f32 to vector<1x256xf32>
    %54 = arith.maximumf %52, %53 : vector<1x256xf32>
    %55 = arith.truncf %54 : vector<1x256xf32> to vector<1x256xbf16>
    %c0_50 = arith.constant 0 : index
    %c0_51 = arith.constant 0 : index
    %56 = vector.load %arg12[%c0_50, %c0_51] : memref<256x256xbf16, #tpu.memory_space<vmem>>, vector<256x256xbf16>
    %cst_52 = arith.constant dense<0.000000e+00> : vector<1x256xf32>
    %57 = tpu.matmul %55, %56, %cst_52 {dimension_numbers = #tpu.dot_dimension_numbers<[1], [0], [0], [1], [0, 0, 1, 1], [], []>} : vector<1x256xbf16>, vector<256x256xbf16>, vector<1x256xf32> -> vector<1x256xf32>
    %c0_53 = arith.constant 0 : index
    %c0_54 = arith.constant 0 : index
    %58 = vector.load %arg13[%c0_53, %c0_54] : memref<1x256xf32, #tpu.memory_space<vmem>>, vector<1x256xf32>
    %59 = arith.addf %57, %58 : vector<1x256xf32>
    %cst_55 = arith.constant 0.000000e+00 : f32
    %60 = vector.broadcast %cst_55 : f32 to vector<1x256xf32>
    %61 = arith.maximumf %59, %60 : vector<1x256xf32>
    %62 = arith.truncf %61 : vector<1x256xf32> to vector<1x256xbf16>
    %c0_56 = arith.constant 0 : index
    %c0_57 = arith.constant 0 : index
    %63 = vector.load %arg14[%c0_56, %c0_57] : memref<256x256xbf16, #tpu.memory_space<vmem>>, vector<256x256xbf16>
    %cst_58 = arith.constant dense<0.000000e+00> : vector<1x256xf32>
    %64 = tpu.matmul %62, %63, %cst_58 {dimension_numbers = #tpu.dot_dimension_numbers<[1], [0], [0], [1], [0, 0, 1, 1], [], []>} : vector<1x256xbf16>, vector<256x256xbf16>, vector<1x256xf32> -> vector<1x256xf32>
    %c0_59 = arith.constant 0 : index
    %c0_60 = arith.constant 0 : index
    %65 = vector.load %arg15[%c0_59, %c0_60] : memref<1x256xf32, #tpu.memory_space<vmem>>, vector<1x256xf32>
    %66 = arith.addf %64, %65 : vector<1x256xf32>
    %cst_61 = arith.constant 0.000000e+00 : f32
    %67 = vector.broadcast %cst_61 : f32 to vector<1x256xf32>
    %68 = arith.maximumf %66, %67 : vector<1x256xf32>
    %69 = arith.truncf %68 : vector<1x256xf32> to vector<1x256xbf16>
    %c0_62 = arith.constant 0 : index
    %c0_63 = arith.constant 0 : index
    %70 = vector.load %arg16[%c0_62, %c0_63] : memref<256x128xbf16, #tpu.memory_space<vmem>>, vector<256x128xbf16>
    %cst_64 = arith.constant dense<0.000000e+00> : vector<1x128xf32>
    %71 = tpu.matmul %69, %70, %cst_64 {dimension_numbers = #tpu.dot_dimension_numbers<[1], [0], [0], [1], [0, 0, 1, 1], [], []>} : vector<1x256xbf16>, vector<256x128xbf16>, vector<1x128xf32> -> vector<1x128xf32>
    %c0_65 = arith.constant 0 : index
    %c0_66 = arith.constant 0 : index
    %72 = vector.load %arg17[%c0_65, %c0_66] : memref<1x128xf32, #tpu.memory_space<vmem>>, vector<1x128xf32>
    %73 = arith.addf %71, %72 : vector<1x128xf32>
    %c0_67 = arith.constant 0 : index
    %c0_68 = arith.constant 0 : index
    %c0_69 = arith.constant 0 : index
    %74 = vector.load %arg18[%c0_67, %c0_68, %c0_69] : memref<1x1x128xf32, #tpu.memory_space<vmem>>, vector<1x1x128xf32>
    %75 = vector.shape_cast %74 : vector<1x1x128xf32> to vector<1x128xf32>
    %76 = vector.shape_cast %73 : vector<1x128xf32> to vector<1x1x128xf32>
    tpu.vector_store %arg18[%c0_67, %c0_68, %c0_69], %76 {strides = array<i32>} : memref<1x1x128xf32, #tpu.memory_space<vmem>>, vector<1x1x128xf32>,
    return
  }
  func.func @transform_0(%arg0: i32) -> (i32, i32, i32) {
    %c0_i32 = arith.constant 0 : i32
    %c0_i32_0 = arith.constant 0 : i32
    %c0_i32_1 = arith.constant 0 : i32
    return %arg0, %c0_i32, %c0_i32_0 : i32, i32, i32
  }
  func.func @transform_1(%arg0: i32) -> (i32, i32) {
    %c0_i32 = arith.constant 0 : i32
    %c0_i32_0 = arith.constant 0 : i32
    %c0_i32_1 = arith.constant 0 : i32
    return %c0_i32, %c0_i32_0 : i32, i32
  }
  func.func @transform_2(%arg0: i32) -> (i32, i32) {
    %c0_i32 = arith.constant 0 : i32
    %c0_i32_0 = arith.constant 0 : i32
    %c0_i32_1 = arith.constant 0 : i32
    return %c0_i32, %c0_i32_0 : i32, i32
  }
  func.func @transform_3(%arg0: i32) -> (i32, i32) {
    %c0_i32 = arith.constant 0 : i32
    %c0_i32_0 = arith.constant 0 : i32
    %c0_i32_1 = arith.constant 0 : i32
    return %c0_i32, %c0_i32_0 : i32, i32
  }
  func.func @transform_4(%arg0: i32) -> (i32, i32) {
    %c0_i32 = arith.constant 0 : i32
    %c0_i32_0 = arith.constant 0 : i32
    %c0_i32_1 = arith.constant 0 : i32
    return %c0_i32, %c0_i32_0 : i32, i32
  }
  func.func @transform_5(%arg0: i32) -> (i32, i32) {
    %c0_i32 = arith.constant 0 : i32
    %c0_i32_0 = arith.constant 0 : i32
    %c0_i32_1 = arith.constant 0 : i32
    return %c0_i32, %c0_i32_0 : i32, i32
  }
  func.func @transform_6(%arg0: i32) -> (i32, i32) {
    %c0_i32 = arith.constant 0 : i32
    %c0_i32_0 = arith.constant 0 : i32
    %c0_i32_1 = arith.constant 0 : i32
    return %c0_i32, %c0_i32_0 : i32, i32
  }
  func.func @transform_7(%arg0: i32) -> (i32, i32) {
    %c0_i32 = arith.constant 0 : i32
    %c0_i32_0 = arith.constant 0 : i32
    %c0_i32_1 = arith.constant 0 : i32
    return %c0_i32, %c0_i32_0 : i32, i32
  }
  func.func @transform_8(%arg0: i32) -> (i32, i32) {
    %c0_i32 = arith.constant 0 : i32
    %c0_i32_0 = arith.constant 0 : i32
    %c0_i32_1 = arith.constant 0 : i32
    return %c0_i32, %c0_i32_0 : i32, i32
  }
  func.func @transform_9(%arg0: i32) -> (i32, i32) {
    %c0_i32 = arith.constant 0 : i32
    %c0_i32_0 = arith.constant 0 : i32
    %c0_i32_1 = arith.constant 0 : i32
    return %c0_i32, %c0_i32_0 : i32, i32
  }
  func.func @transform_10(%arg0: i32) -> (i32, i32) {
    %c0_i32 = arith.constant 0 : i32
    %c0_i32_0 = arith.constant 0 : i32
    %c0_i32_1 = arith.constant 0 : i32
    return %c0_i32, %c0_i32_0 : i32, i32
  }
  func.func @transform_11(%arg0: i32) -> (i32, i32) {
    %c0_i32 = arith.constant 0 : i32
    %c0_i32_0 = arith.constant 0 : i32
    %c0_i32_1 = arith.constant 0 : i32
    return %c0_i32, %c0_i32_0 : i32, i32
  }
  func.func @transform_12(%arg0: i32) -> (i32, i32) {
    %c0_i32 = arith.constant 0 : i32
    %c0_i32_0 = arith.constant 0 : i32
    %c0_i32_1 = arith.constant 0 : i32
    return %c0_i32, %c0_i32_0 : i32, i32
  }
  func.func @transform_13(%arg0: i32) -> (i32, i32) {
    %c0_i32 = arith.constant 0 : i32
    %c0_i32_0 = arith.constant 0 : i32
    %c0_i32_1 = arith.constant 0 : i32
    return %c0_i32, %c0_i32_0 : i32, i32
  }
  func.func @transform_14(%arg0: i32) -> (i32, i32) {
    %c0_i32 = arith.constant 0 : i32
    %c0_i32_0 = arith.constant 0 : i32
    %c0_i32_1 = arith.constant 0 : i32
    return %c0_i32, %c0_i32_0 : i32, i32
  }
  func.func @transform_15(%arg0: i32) -> (i32, i32) {
    %c0_i32 = arith.constant 0 : i32
    %c0_i32_0 = arith.constant 0 : i32
    %c0_i32_1 = arith.constant 0 : i32
    return %c0_i32, %c0_i32_0 : i32, i32
  }
  func.func @transform_16(%arg0: i32) -> (i32, i32) {
    %c0_i32 = arith.constant 0 : i32
    %c0_i32_0 = arith.constant 0 : i32
    %c0_i32_1 = arith.constant 0 : i32
    return %c0_i32, %c0_i32_0 : i32, i32
  }
  func.func @transform_17(%arg0: i32) -> (i32, i32, i32) {
    %c0_i32 = arith.constant 0 : i32
    %c0_i32_0 = arith.constant 0 : i32
    %c0_i32_1 = arith.constant 0 : i32
    return %arg0, %c0_i32, %c0_i32_0 : i32, i32, i32
  }
}

</mosaic_0001>

<llo_original>
// kernel: alexnet_forward.1
$region0: #{alexnet_forward.1}
  #allocation0 [shape = 'u32[]', space=smem, size = 0x4, offset = 0x4, fixed_abs, tag = 'smem constant byte address 0x4 - core index']
  #allocation1 [shape = 'u32[144,128]{1,0:T(1,128)}', space=vmem, size = 0x12000, scoped, tag = 'internal scratch']
  #allocation2 [shape = 'f32[16,128]{1,0:T(8,128)}', space=vmem, size = 0x2000, scoped, tag = 'scratch operand']
  %s0 = inlined_call_operand.vmem [shape: bf16[2,16,1152], index: 0, kind: input, shape index: {}]
  %s1 = inlined_call_operand.vmem [shape: bf16[1152,128], index: 1, kind: input, shape index: {}]
  %s2 = inlined_call_operand.vmem [shape: f32[1,128], index: 2, kind: input, shape index: {}]
  %s3 = inlined_call_operand.vmem [shape: bf16[2048,256], index: 3, kind: input, shape index: {}]
  %s4 = inlined_call_operand.vmem [shape: f32[1,256], index: 4, kind: input, shape index: {}]
  %s5 = inlined_call_operand.vmem [shape: bf16[256,384], index: 5, kind: input, shape index: {}]
  %s6 = inlined_call_operand.vmem [shape: f32[1,384], index: 6, kind: input, shape index: {}]
  %s7 = inlined_call_operand.vmem [shape: bf16[384,384], index: 7, kind: input, shape index: {}]
  %s8 = inlined_call_operand.vmem [shape: f32[1,384], index: 8, kind: input, shape index: {}]
  %s9 = inlined_call_operand.vmem [shape: bf16[384,256], index: 9, kind: input, shape index: {}]
  %s10 = inlined_call_operand.vmem [shape: f32[1,256], index: 10, kind: input, shape index: {}]
  %s11 = inlined_call_operand.vmem [shape: bf16[256,256], index: 11, kind: input, shape index: {}]
  %s12 = inlined_call_operand.vmem [shape: f32[1,256], index: 12, kind: input, shape index: {}]
  %s13 = inlined_call_operand.vmem [shape: bf16[256,256], index: 13, kind: input, shape index: {}]
  %s14 = inlined_call_operand.vmem [shape: f32[1,256], index: 14, kind: input, shape index: {}]
  %s15 = inlined_call_operand.vmem [shape: bf16[256,128], index: 15, kind: input, shape index: {}]
  %s16 = inlined_call_operand.vmem [shape: f32[1,128], index: 16, kind: input, shape index: {}]
  %s17 = inlined_call_operand.hbm [shape: f32[2,1,128], index: 17, kind: output, shape index: {}]
  %s18 = sld [smem:[#allocation0]]
  $region101: #{alexnet_forward.1} parent=0
    _
  %s20 = ssub.s32 1, %s18
  %s21 = scalar_select 0, %s20, %s18
  $region1: #{alexnet_forward.1} parent=0
    #allocation3 [shape = 'u8[1024]{0}', space=vmem, size = 0x400, scoped, tag = 'output window, operand 0']
    #allocation4 [shape = 's32[2]{0}', space=sflag, size = 0x8, scoped, tag = 'scoped memory for alexnet_forward.1']
    %22 = vsyncpa [#allocation4], 0
    %s23 = scalar_lea.sflag [#allocation4], 1
    %24 = vsyncpa %s23, 0
    loop: start=0, step=1, limit=4
    $region2: #{alexnet_forward.1} parent=1 // loop_pre_header
      _
    $region3: #{alexnet_forward.1} parent=1 // loop_header
      %s26 = sphi 0, %s30
      %p27 = scmp.ge.s32.totalorder %s26, 4
      %s36 = sphi 0, %s38
      %s39 = sphi 0, %s36
      %s40 = sphi 0, %s39
      %s56 = sphi 0, %s40
      %s60 = sphi 0, %s60
      %s62 = sphi 0, %s60
      %s63 = sphi 0, %s62
      %s77 = sphi 0, %s63
      %s81 = sphi 0, %s81
      %s83 = sphi 0, %s81
      %s84 = sphi 0, %s83
      %s98 = sphi 0, %s84
      %s102 = sphi 0, %s102
      %s104 = sphi 0, %s102
      %s105 = sphi 0, %s104
      %s119 = sphi 0, %s105
      %s123 = sphi 0, %s123
      %s125 = sphi 0, %s123
      %s126 = sphi 0, %s125
      %s140 = sphi 0, %s126
      %s144 = sphi 0, %s144
      %s146 = sphi 0, %s144
      %s147 = sphi 0, %s146
      %s161 = sphi 0, %s147
      %s165 = sphi 0, %s165
      %s167 = sphi 0, %s165
      %s168 = sphi 0, %s167
      %s182 = sphi 0, %s168
      %s186 = sphi 0, %s186
      %s188 = sphi 0, %s186
      %s189 = sphi 0, %s188
      %s203 = sphi 0, %s189
      %s207 = sphi 0, %s207
      %s209 = sphi 0, %s207
      %s210 = sphi 0, %s209
      %s224 = sphi 0, %s210
      %s228 = sphi 0, %s228
      %s230 = sphi 0, %s228
      %s231 = sphi 0, %s230
      %s245 = sphi 0, %s231
      %s249 = sphi 0, %s249
      %s251 = sphi 0, %s249
      %s252 = sphi 0, %s251
      %s266 = sphi 0, %s252
      %s270 = sphi 0, %s270
      %s272 = sphi 0, %s270
      %s273 = sphi 0, %s272
      %s287 = sphi 0, %s273
      %s291 = sphi 0, %s291
      %s293 = sphi 0, %s291
      %s294 = sphi 0, %s293
      %s308 = sphi 0, %s294
      %s312 = sphi 0, %s312
      %s314 = sphi 0, %s312
      %s315 = sphi 0, %s314
      %s329 = sphi 0, %s315
      %s333 = sphi 0, %s333
      %s335 = sphi 0, %s333
      %s336 = sphi 0, %s335
      %s350 = sphi 0, %s336
      %s354 = sphi 0, %s354
      %s356 = sphi 0, %s354
      %s357 = sphi 0, %s356
      %s371 = sphi 0, %s357
      %s375 = sphi 0, %s375
      %s377 = sphi 0, %s375
      %s378 = sphi 0, %s377
      %s392 = sphi 0, %s378
      %s398 = sphi 0, %s400
      %s401 = sphi 0, %s398
      %s402 = sphi 0, %s401
      %s418 = sphi 0, %s402
    $region4: #{alexnet_forward.1} parent=1 // loop_header_branch
      %29 = sbr.rel (%p27) target = $region8
    $region5: #{alexnet_forward.1} parent=1 // loop_body
      %s31 = ssub.s32 %s26, 1
      %s32 = ssub.s32 %s26, 2
      %s33 = sadd.s32 %s26, 1
      %s34 = ssub.s32 %s26, %s33
      %p35 = scmp.eq.s32.totalorder %s34, 0
      %s37 = sadd.s32 %s36, 1
      %s38 = scalar_select %p35, %s36, %s37
      %p41 = pneg %p35
      %p42 = scmp.eq.s32.totalorder %s26, 1
      %p43 = por %p41, %p42
      %p44 = scmp.ne.s32.totalorder %s36, %s39
      %p45 = scmp.eq.s32.totalorder %s26, 0
      %p46 = por %p44, %p45
      %p47 = scmp.ne.s32.totalorder %s36, %s39
      %p48 = scmp.eq.s32.totalorder %s31, 1
      %p49 = por %p47, %p48
      %p50 = scmp.ne.s32.totalorder %s39, %s40
      %p51 = scmp.eq.s32.totalorder %s31, 0
      %p52 = por %p50, %p51
      %p53 = scmp.ne.s32.totalorder %s39, %s40
      %p54 = scmp.eq.s32.totalorder %s32, 1
      %p55 = por %p53, %p54
      %p57 = scmp.ne.s32.totalorder %s40, %s56
      %p58 = scmp.eq.s32.totalorder %s32, 0
      %p59 = por %p57, %p58
      %s61 = sadd.s32 %s60, 1
      %p64 = scmp.eq.s32.totalorder %s26, 1
      %p65 = scmp.ne.s32.totalorder %s60, %s62
      %p66 = scmp.eq.s32.totalorder %s26, 0
      %p67 = por %p65, %p66
      %p68 = scmp.ne.s32.totalorder %s60, %s62
      %p69 = scmp.eq.s32.totalorder %s31, 1
      %p70 = por %p68, %p69
      %p71 = scmp.ne.s32.totalorder %s62, %s63
      %p72 = scmp.eq.s32.totalorder %s31, 0
      %p73 = por %p71, %p72
      %p74 = scmp.ne.s32.totalorder %s62, %s63
      %p75 = scmp.eq.s32.totalorder %s32, 1
      %p76 = por %p74, %p75
      %p78 = scmp.ne.s32.totalorder %s63, %s77
      %p79 = scmp.eq.s32.totalorder %s32, 0
      %p80 = por %p78, %p79
      %s82 = sadd.s32 %s81, 1
      %p85 = scmp.eq.s32.totalorder %s26, 1
      %p86 = scmp.ne.s32.totalorder %s81, %s83
      %p87 = scmp.eq.s32.totalorder %s26, 0
      %p88 = por %p86, %p87
      %p89 = scmp.ne.s32.totalorder %s81, %s83
      %p90 = scmp.eq.s32.totalorder %s31, 1
      %p91 = por %p89, %p90
      %p92 = scmp.ne.s32.totalorder %s83, %s84
      %p93 = scmp.eq.s32.totalorder %s31, 0
      %p94 = por %p92, %p93
      %p95 = scmp.ne.s32.totalorder %s83, %s84
      %p96 = scmp.eq.s32.totalorder %s32, 1
      %p97 = por %p95, %p96
      %p99 = scmp.ne.s32.totalorder %s84, %s98
      %p100 = scmp.eq.s32.totalorder %s32, 0
      %p101 = por %p99, %p100
      %s103 = sadd.s32 %s102, 1
      %p106 = scmp.eq.s32.totalorder %s26, 1
      %p107 = scmp.ne.s32.totalorder %s102, %s104
      %p108 = scmp.eq.s32.totalorder %s26, 0
      %p109 = por %p107, %p108
      %p110 = scmp.ne.s32.totalorder %s102, %s104
      %p111 = scmp.eq.s32.totalorder %s31, 1
      %p112 = por %p110, %p111
      %p113 = scmp.ne.s32.totalorder %s104, %s105
      %p114 = scmp.eq.s32.totalorder %s31, 0
      %p115 = por %p113, %p114
      %p116 = scmp.ne.s32.totalorder %s104, %s105
      %p117 = scmp.eq.s32.totalorder %s32, 1
      %p118 = por %p116, %p117
      %p120 = scmp.ne.s32.totalorder %s105, %s119
      %p121 = scmp.eq.s32.totalorder %s32, 0
      %p122 = por %p120, %p121
      %s124 = sadd.s32 %s123, 1
      %p127 = scmp.eq.s32.totalorder %s26, 1
      %p128 = scmp.ne.s32.totalorder %s123, %s125
      %p129 = scmp.eq.s32.totalorder %s26, 0
      %p130 = por %p128, %p129
      %p131 = scmp.ne.s32.totalorder %s123, %s125
      %p132 = scmp.eq.s32.totalorder %s31, 1
      %p133 = por %p131, %p132
      %p134 = scmp.ne.s32.totalorder %s125, %s126
      %p135 = scmp.eq.s32.totalorder %s31, 0
      %p136 = por %p134, %p135
      %p137 = scmp.ne.s32.totalorder %s125, %s126
      %p138 = scmp.eq.s32.totalorder %s32, 1
      %p139 = por %p137, %p138
      %p141 = scmp.ne.s32.totalorder %s126, %s140
      %p142 = scmp.eq.s32.totalorder %s32, 0
      %p143 = por %p141, %p142
      %s145 = sadd.s32 %s144, 1
      %p148 = scmp.eq.s32.totalorder %s26, 1
      %p149 = scmp.ne.s32.totalorder %s144, %s146
      %p150 = scmp.eq.s32.totalorder %s26, 0
      %p151 = por %p149, %p150
      %p152 = scmp.ne.s32.totalorder %s144, %s146
      %p153 = scmp.eq.s32.totalorder %s31, 1
      %p154 = por %p152, %p153
      %p155 = scmp.ne.s32.totalorder %s146, %s147
      %p156 = scmp.eq.s32.totalorder %s31, 0
      %p157 = por %p155, %p156
      %p158 = scmp.ne.s32.totalorder %s146, %s147
      %p159 = scmp.eq.s32.totalorder %s32, 1
      %p160 = por %p158, %p159
      %p162 = scmp.ne.s32.totalorder %s147, %s161
      %p163 = scmp.eq.s32.totalorder %s32, 0
      %p164 = por %p162, %p163
      %s166 = sadd.s32 %s165, 1
      %p169 = scmp.eq.s32.totalorder %s26, 1
      %p170 = scmp.ne.s32.totalorder %s165, %s167
      %p171 = scmp.eq.s32.totalorder %s26, 0
      %p172 = por %p170, %p171
      %p173 = scmp.ne.s32.totalorder %s165, %s167
      %p174 = scmp.eq.s32.totalorder %s31, 1
      %p175 = por %p173, %p174
      %p176 = scmp.ne.s32.totalorder %s167, %s168
      %p177 = scmp.eq.s32.totalorder %s31, 0
      %p178 = por %p176, %p177
      %p179 = scmp.ne.s32.totalorder %s167, %s168
      %p180 = scmp.eq.s32.totalorder %s32, 1
      %p181 = por %p179, %p180
      %p183 = scmp.ne.s32.totalorder %s168, %s182
      %p184 = scmp.eq.s32.totalorder %s32, 0
      %p185 = por %p183, %p184
      %s187 = sadd.s32 %s186, 1
      %p190 = scmp.eq.s32.totalorder %s26, 1
      %p191 = scmp.ne.s32.totalorder %s186, %s188
      %p192 = scmp.eq.s32.totalorder %s26, 0
      %p193 = por %p191, %p192
      %p194 = scmp.ne.s32.totalorder %s186, %s188
      %p195 = scmp.eq.s32.totalorder %s31, 1
      %p196 = por %p194, %p195
      %p197 = scmp.ne.s32.totalorder %s188, %s189
      %p198 = scmp.eq.s32.totalorder %s31, 0
      %p199 = por %p197, %p198
      %p200 = scmp.ne.s32.totalorder %s188, %s189
      %p201 = scmp.eq.s32.totalorder %s32, 1
      %p202 = por %p200, %p201
      %p204 = scmp.ne.s32.totalorder %s189, %s203
      %p205 = scmp.eq.s32.totalorder %s32, 0
      %p206 = por %p204, %p205
      %s208 = sadd.s32 %s207, 1
      %p211 = scmp.eq.s32.totalorder %s26, 1
      %p212 = scmp.ne.s32.totalorder %s207, %s209
      %p213 = scmp.eq.s32.totalorder %s26, 0
      %p214 = por %p212, %p213
      %p215 = scmp.ne.s32.totalorder %s207, %s209
      %p216 = scmp.eq.s32.totalorder %s31, 1
      %p217 = por %p215, %p216
      %p218 = scmp.ne.s32.totalorder %s209, %s210
      %p219 = scmp.eq.s32.totalorder %s31, 0
      %p220 = por %p218, %p219
      %p221 = scmp.ne.s32.totalorder %s209, %s210
      %p222 = scmp.eq.s32.totalorder %s32, 1
      %p223 = por %p221, %p222
      %p225 = scmp.ne.s32.totalorder %s210, %s224
      %p226 = scmp.eq.s32.totalorder %s32, 0
      %p227 = por %p225, %p226
      %s229 = sadd.s32 %s228, 1
      %p232 = scmp.eq.s32.totalorder %s26, 1
      %p233 = scmp.ne.s32.totalorder %s228, %s230
      %p234 = scmp.eq.s32.totalorder %s26, 0
      %p235 = por %p233, %p234
      %p236 = scmp.ne.s32.totalorder %s228, %s230
      %p237 = scmp.eq.s32.totalorder %s31, 1
      %p238 = por %p236, %p237
      %p239 = scmp.ne.s32.totalorder %s230, %s231
      %p240 = scmp.eq.s32.totalorder %s31, 0
      %p241 = por %p239, %p240
      %p242 = scmp.ne.s32.totalorder %s230, %s231
      %p243 = scmp.eq.s32.totalorder %s32, 1
      %p244 = por %p242, %p243
      %p246 = scmp.ne.s32.totalorder %s231, %s245
      %p247 = scmp.eq.s32.totalorder %s32, 0
      %p248 = por %p246, %p247
      %s250 = sadd.s32 %s249, 1
      %p253 = scmp.eq.s32.totalorder %s26, 1
      %p254 = scmp.ne.s32.totalorder %s249, %s251
      %p255 = scmp.eq.s32.totalorder %s26, 0
      %p256 = por %p254, %p255
      %p257 = scmp.ne.s32.totalorder %s249, %s251
      %p258 = scmp.eq.s32.totalorder %s31, 1
      %p259 = por %p257, %p258
      %p260 = scmp.ne.s32.totalorder %s251, %s252
      %p261 = scmp.eq.s32.totalorder %s31, 0
      %p262 = por %p260, %p261
      %p263 = scmp.ne.s32.totalorder %s251, %s252
      %p264 = scmp.eq.s32.totalorder %s32, 1
      %p265 = por %p263, %p264
      %p267 = scmp.ne.s32.totalorder %s252, %s266
      %p268 = scmp.eq.s32.totalorder %s32, 0
      %p269 = por %p267, %p268
      %s271 = sadd.s32 %s270, 1
      %p274 = scmp.eq.s32.totalorder %s26, 1
      %p275 = scmp.ne.s32.totalorder %s270, %s272
      %p276 = scmp.eq.s32.totalorder %s26, 0
      %p277 = por %p275, %p276
      %p278 = scmp.ne.s32.totalorder %s270, %s272
      %p279 = scmp.eq.s32.totalorder %s31, 1
      %p280 = por %p278, %p279
      %p281 = scmp.ne.s32.totalorder %s272, %s273
      %p282 = scmp.eq.s32.totalorder %s31, 0
      %p283 = por %p281, %p282
      %p284 = scmp.ne.s32.totalorder %s272, %s273
      %p285 = scmp.eq.s32.totalorder %s32, 1
      %p286 = por %p284, %p285
      %p288 = scmp.ne.s32.totalorder %s273, %s287
      %p289 = scmp.eq.s32.totalorder %s32, 0
      %p290 = por %p288, %p289
      %s292 = sadd.s32 %s291, 1
      %p295 = scmp.eq.s32.totalorder %s26, 1
      %p296 = scmp.ne.s32.totalorder %s291, %s293
      %p297 = scmp.eq.s32.totalorder %s26, 0
      %p298 = por %p296, %p297
      %p299 = scmp.ne.s32.totalorder %s291, %s293
      %p300 = scmp.eq.s32.totalorder %s31, 1
      %p301 = por %p299, %p300
      %p302 = scmp.ne.s32.totalorder %s293, %s294
      %p303 = scmp.eq.s32.totalorder %s31, 0
      %p304 = por %p302, %p303
      %p305 = scmp.ne.s32.totalorder %s293, %s294
      %p306 = scmp.eq.s32.totalorder %s32, 1
      %p307 = por %p305, %p306
      %p309 = scmp.ne.s32.totalorder %s294, %s308
      %p310 = scmp.eq.s32.totalorder %s32, 0
      %p311 = por %p309, %p310
      %s313 = sadd.s32 %s312, 1
      %p316 = scmp.eq.s32.totalorder %s26, 1
      %p317 = scmp.ne.s32.totalorder %s312, %s314
      %p318 = scmp.eq.s32.totalorder %s26, 0
      %p319 = por %p317, %p318
      %p320 = scmp.ne.s32.totalorder %s312, %s314
      %p321 = scmp.eq.s32.totalorder %s31, 1
      %p322 = por %p320, %p321
      %p323 = scmp.ne.s32.totalorder %s314, %s315
      %p324 = scmp.eq.s32.totalorder %s31, 0
      %p325 = por %p323, %p324
      %p326 = scmp.ne.s32.totalorder %s314, %s315
      %p327 = scmp.eq.s32.totalorder %s32, 1
      %p328 = por %p326, %p327
      %p330 = scmp.ne.s32.totalorder %s315, %s329
      %p331 = scmp.eq.s32.totalorder %s32, 0
      %p332 = por %p330, %p331
      %s334 = sadd.s32 %s333, 1
      %p337 = scmp.eq.s32.totalorder %s26, 1
      %p338 = scmp.ne.s32.totalorder %s333, %s335
      %p339 = scmp.eq.s32.totalorder %s26, 0
      %p340 = por %p338, %p339
      %p341 = scmp.ne.s32.totalorder %s333, %s335
      %p342 = scmp.eq.s32.totalorder %s31, 1
      %p343 = por %p341, %p342
      %p344 = scmp.ne.s32.totalorder %s335, %s336
      %p345 = scmp.eq.s32.totalorder %s31, 0
      %p346 = por %p344, %p345
      %p347 = scmp.ne.s32.totalorder %s335, %s336
      %p348 = scmp.eq.s32.totalorder %s32, 1
      %p349 = por %p347, %p348
      %p351 = scmp.ne.s32.totalorder %s336, %s350
      %p352 = scmp.eq.s32.totalorder %s32, 0
      %p353 = por %p351, %p352
      %s355 = sadd.s32 %s354, 1
      %p358 = scmp.eq.s32.totalorder %s26, 1
      %p359 = scmp.ne.s32.totalorder %s354, %s356
      %p360 = scmp.eq.s32.totalorder %s26, 0
      %p361 = por %p359, %p360
      %p362 = scmp.ne.s32.totalorder %s354, %s356
      %p363 = scmp.eq.s32.totalorder %s31, 1
      %p364 = por %p362, %p363
      %p365 = scmp.ne.s32.totalorder %s356, %s357
      %p366 = scmp.eq.s32.totalorder %s31, 0
      %p367 = por %p365, %p366
      %p368 = scmp.ne.s32.totalorder %s356, %s357
      %p369 = scmp.eq.s32.totalorder %s32, 1
      %p370 = por %p368, %p369
      %p372 = scmp.ne.s32.totalorder %s357, %s371
      %p373 = scmp.eq.s32.totalorder %s32, 0
      %p374 = por %p372, %p373
      %s376 = sadd.s32 %s375, 1
      %p379 = scmp.eq.s32.totalorder %s26, 1
      %p380 = scmp.ne.s32.totalorder %s375, %s377
      %p381 = scmp.eq.s32.totalorder %s26, 0
      %p382 = por %p380, %p381
      %p383 = scmp.ne.s32.totalorder %s375, %s377
      %p384 = scmp.eq.s32.totalorder %s31, 1
      %p385 = por %p383, %p384
      %p386 = scmp.ne.s32.totalorder %s377, %s378
      %p387 = scmp.eq.s32.totalorder %s31, 0
      %p388 = por %p386, %p387
      %p389 = scmp.ne.s32.totalorder %s377, %s378
      %p390 = scmp.eq.s32.totalorder %s32, 1
      %p391 = por %p389, %p390
      %p393 = scmp.ne.s32.totalorder %s378, %s392
      %p394 = scmp.eq.s32.totalorder %s32, 0
      %p395 = por %p393, %p394
      %s396 = ssub.s32 %s26, %s33
      %p397 = scmp.eq.s32.totalorder %s396, 0
      %s399 = sadd.s32 %s398, 1
      %s400 = scalar_select %p397, %s398, %s399
      %p403 = pneg %p397
      %p404 = scmp.eq.s32.totalorder %s26, 1
      %p405 = por %p403, %p404
      %p406 = scmp.ne.s32.totalorder %s398, %s401
      %p407 = scmp.eq.s32.totalorder %s26, 0
      %p408 = por %p406, %p407
      %p409 = scmp.ne.s32.totalorder %s398, %s401
      %p410 = scmp.eq.s32.totalorder %s31, 1
      %p411 = por %p409, %p410
      %p412 = scmp.ne.s32.totalorder %s401, %s402
      %p413 = scmp.eq.s32.totalorder %s31, 0
      %p414 = por %p412, %p413
      %p415 = scmp.ne.s32.totalorder %s401, %s402
      %p416 = scmp.eq.s32.totalorder %s32, 1
      %p417 = por %p415, %p416
      %p419 = scmp.ne.s32.totalorder %s402, %s418
      %p420 = scmp.eq.s32.totalorder %s32, 0
      %p421 = por %p419, %p420
      %p422 = scmp.le.s32.totalorder 1, %s26
      %p423 = scmp.lt.s32.totalorder %s26, 3
      %p424 = pnand %p422, %p423
      %p425 = pneg %p424
      // Predicated region
      $region9: #{alexnet_forward.1} parent=5 // pred_check
        _
      $region10: #{alexnet_forward.1} parent=5 // pred_check_branch
        %427 = sbr.rel (%p424) target = $region12
      $region11: #{alexnet_forward.1} parent=5 // pred_region
        %s428 = ssub.s32 %s26, 1
        // Predicated region
        $region13: #{alexnet_forward.1} parent=11 // pred_check
          %p429 = pneg %p73
        $region14: #{alexnet_forward.1} parent=11 // pred_check_branch
          %431 = sbr.rel (%p429) target = $region16
        $region15: #{alexnet_forward.1} parent=11 // pred_region
          _
        $region16: #{alexnet_forward.1} parent=11 // pred_fallthru
          _
        // Predicated region
        $region17: #{alexnet_forward.1} parent=11 // pred_check
          %p432 = pneg %p94
        $region18: #{alexnet_forward.1} parent=11 // pred_check_branch
          %434 = sbr.rel (%p432) target = $region20
        $region19: #{alexnet_forward.1} parent=11 // pred_region
          _
        $region20: #{alexnet_forward.1} parent=11 // pred_fallthru
          _
        // Predicated region
        $region21: #{alexnet_forward.1} parent=11 // pred_check
          %p435 = pneg %p115
        $region22: #{alexnet_forward.1} parent=11 // pred_check_branch
          %437 = sbr.rel (%p435) target = $region24
        $region23: #{alexnet_forward.1} parent=11 // pred_region
          _
        $region24: #{alexnet_forward.1} parent=11 // pred_fallthru
          _
        // Predicated region
        $region25: #{alexnet_forward.1} parent=11 // pred_check
          %p438 = pneg %p136
        $region26: #{alexnet_forward.1} parent=11 // pred_check_branch
          %440 = sbr.rel (%p438) target = $region28
        $region27: #{alexnet_forward.1} parent=11 // pred_region
          _
        $region28: #{alexnet_forward.1} parent=11 // pred_fallthru
          _
        // Predicated region
        $region29: #{alexnet_forward.1} parent=11 // pred_check
          %p441 = pneg %p157
        $region30: #{alexnet_forward.1} parent=11 // pred_check_branch
          %443 = sbr.rel (%p441) target = $region32
        $region31: #{alexnet_forward.1} parent=11 // pred_region
          _
        $region32: #{alexnet_forward.1} parent=11 // pred_fallthru
          _
        // Predicated region
        $region33: #{alexnet_forward.1} parent=11 // pred_check
          %p444 = pneg %p178
        $region34: #{alexnet_forward.1} parent=11 // pred_check_branch
          %446 = sbr.rel (%p444) target = $region36
        $region35: #{alexnet_forward.1} parent=11 // pred_region
          _
        $region36: #{alexnet_forward.1} parent=11 // pred_fallthru
          _
        // Predicated region
        $region37: #{alexnet_forward.1} parent=11 // pred_check
          %p447 = pneg %p199
        $region38: #{alexnet_forward.1} parent=11 // pred_check_branch
          %449 = sbr.rel (%p447) target = $region40
        $region39: #{alexnet_forward.1} parent=11 // pred_region
          _
        $region40: #{alexnet_forward.1} parent=11 // pred_fallthru
          _
        // Predicated region
        $region41: #{alexnet_forward.1} parent=11 // pred_check
          %p450 = pneg %p220
        $region42: #{alexnet_forward.1} parent=11 // pred_check_branch
          %452 = sbr.rel (%p450) target = $region44
        $region43: #{alexnet_forward.1} parent=11 // pred_region
          _
        $region44: #{alexnet_forward.1} parent=11 // pred_fallthru
          _
        // Predicated region
        $region45: #{alexnet_forward.1} parent=11 // pred_check
          %p453 = pneg %p241
        $region46: #{alexnet_forward.1} parent=11 // pred_check_branch
          %455 = sbr.rel (%p453) target = $region48
        $region47: #{alexnet_forward.1} parent=11 // pred_region
          _
        $region48: #{alexnet_forward.1} parent=11 // pred_fallthru
          _
        // Predicated region
        $region49: #{alexnet_forward.1} parent=11 // pred_check
          %p456 = pneg %p262
        $region50: #{alexnet_forward.1} parent=11 // pred_check_branch
          %458 = sbr.rel (%p456) target = $region52
        $region51: #{alexnet_forward.1} parent=11 // pred_region
          _
        $region52: #{alexnet_forward.1} parent=11 // pred_fallthru
          _
        // Predicated region
        $region53: #{alexnet_forward.1} parent=11 // pred_check
          %p459 = pneg %p283
        $region54: #{alexnet_forward.1} parent=11 // pred_check_branch
          %461 = sbr.rel (%p459) target = $region56
        $region55: #{alexnet_forward.1} parent=11 // pred_region
          _
        $region56: #{alexnet_forward.1} parent=11 // pred_fallthru
          _
        // Predicated region
        $region57: #{alexnet_forward.1} parent=11 // pred_check
          %p462 = pneg %p304
        $region58: #{alexnet_forward.1} parent=11 // pred_check_branch
          %464 = sbr.rel (%p462) target = $region60
        $region59: #{alexnet_forward.1} parent=11 // pred_region
          _
        $region60: #{alexnet_forward.1} parent=11 // pred_fallthru
          _
        // Predicated region
        $region61: #{alexnet_forward.1} parent=11 // pred_check
          %p465 = pneg %p325
        $region62: #{alexnet_forward.1} parent=11 // pred_check_branch
          %467 = sbr.rel (%p465) target = $region64
        $region63: #{alexnet_forward.1} parent=11 // pred_region
          _
        $region64: #{alexnet_forward.1} parent=11 // pred_fallthru
          _
        // Predicated region
        $region65: #{alexnet_forward.1} parent=11 // pred_check
          %p468 = pneg %p346
        $region66: #{alexnet_forward.1} parent=11 // pred_check_branch
          %470 = sbr.rel (%p468) target = $region68
        $region67: #{alexnet_forward.1} parent=11 // pred_region
          _
        $region68: #{alexnet_forward.1} parent=11 // pred_fallthru
          _
        // Predicated region
        $region69: #{alexnet_forward.1} parent=11 // pred_check
          %p471 = pneg %p367
        $region70: #{alexnet_forward.1} parent=11 // pred_check_branch
          %473 = sbr.rel (%p471) target = $region72
        $region71: #{alexnet_forward.1} parent=11 // pred_region
          _
        $region72: #{alexnet_forward.1} parent=11 // pred_fallthru
          _
        // Predicated region
        $region73: #{alexnet_forward.1} parent=11 // pred_check
          %p474 = pneg %p388
        $region74: #{alexnet_forward.1} parent=11 // pred_check_branch
          %476 = sbr.rel (%p474) target = $region76
        $region75: #{alexnet_forward.1} parent=11 // pred_region
          _
        $region76: #{alexnet_forward.1} parent=11 // pred_fallthru
          _
      $region12: #{alexnet_forward.1} parent=5 // pred_fallthru
        _
      %p477 = scmp.lt.s32.totalorder %s26, 2
      // Predicated region
      $region77: #{alexnet_forward.1} parent=5 // pred_check
        %p478 = pneg %p477
      $region78: #{alexnet_forward.1} parent=5 // pred_check_branch
        %480 = sbr.rel (%p478) target = $region80
      $region79: #{alexnet_forward.1} parent=5 // pred_region
        // Predicated region
        $region81: #{alexnet_forward.1} parent=79 // pred_check
          %p481 = pneg %p46
        $region82: #{alexnet_forward.1} parent=79 // pred_check_branch
          %483 = sbr.rel (%p481) target = $region84
        $region83: #{alexnet_forward.1} parent=79 // pred_region
          %p484 = scmp.lt.s32.totalorder %s26, 1
          %s485 = scalar_select %p484, %s26, 1
          %s486 = smul.addr %s485, 18
          %s487 = smul.addr %s486, 4
          %s488 = scalar_lea.vmem %s0, %s487
        $region84: #{alexnet_forward.1} parent=79 // pred_fallthru
          _
      $region80: #{alexnet_forward.1} parent=5 // pred_fallthru
        _
      %p489 = scmp.le.s32.totalorder 1, %s26
      %p490 = scmp.lt.s32.totalorder %s26, 3
      %p491 = pnand %p489, %p490
      %p492 = pneg %p491
      // Predicated region
      $region85: #{alexnet_forward.1} parent=5 // pred_check
        _
      $region86: #{alexnet_forward.1} parent=5 // pred_check_branch
        %494 = sbr.rel (%p491) target = $region88
      $region87: #{alexnet_forward.1} parent=5 // pred_region
        %s495 = ssub.s32 %s26, 1
        %p496 = scmp.lt.s32.totalorder %s31, 1
        %s497 = scalar_select %p496, %s31, 1
        %s498 = smul.addr %s497, 18
        %s499 = smul.addr %s498, 4
        %s500 = scalar_lea.vmem %s0, %s499
        %p501 = pneg %p52
        %p502 = pneg %p49
        %p503 = pneg %p73
        %p504 = pneg %p70
        %p505 = pneg %p94
        %p506 = pneg %p91
        %p507 = pneg %p115
        %p508 = pneg %p112
        %p509 = pneg %p136
        %p510 = pneg %p133
        %p511 = pneg %p157
        %p512 = pneg %p154
        %p513 = pneg %p178
        %p514 = pneg %p175
        %p515 = pneg %p199
        %p516 = pneg %p196
        %p517 = pneg %p220
        %p518 = pneg %p217
        %p519 = pneg %p241
        %p520 = pneg %p238
        %p521 = pneg %p262
        %p522 = pneg %p259
        %p523 = pneg %p283
        %p524 = pneg %p280
        %p525 = pneg %p304
        %p526 = pneg %p301
        %p527 = pneg %p325
        %p528 = pneg %p322
        %p529 = pneg %p346
        %p530 = pneg %p343
        %p531 = pneg %p367
        %p532 = pneg %p364
        %p533 = pneg %p388
        %p534 = pneg %p385
        %p535 = pneg %p414
        %p536 = pneg %p411
        %s537 = sand.u32 %s401, 1
        %s538 = scalar_lea.sflag [#allocation4], %s537
        %s539 = sand.u32 %s401, 1
        %s540 = scalar_lea.vmem [#allocation3], %s539
        %p541 = scmp.lt.s32.totalorder %s31, 1
        %s542 = scalar_select %p541, %s31, 1
        %s543 = smul.addr %s542, 18
        %s544 = smul.addr %s543, 4
        %s545 = scalar_lea.vmem %s0, %s544
        %v547 = vld [vmem:[%s545] sm:$0xff]
        %v548 = vld [vmem:[%s545 + $0x8] sm:$0xff]
        %v549 = vld [vmem:[%s545 + $0x10] sm:$0xff]
        %v550 = vld [vmem:[%s545 + $0x18] sm:$0xff]
        %v551 = vld [vmem:[%s545 + $0x20] sm:$0xf]
        %v552 = vld [vmem:[%s545 + $0x24] sm:$0xff]
        %v553 = vld [vmem:[%s545 + $0x2c] sm:$0xff]
        %v554 = vld [vmem:[%s545 + $0x34] sm:$0xff]
        %v555 = vld [vmem:[%s545 + $0x3c] sm:$0xff]
        %v556 = vld [vmem:[%s545 + $0x44] sm:$0xf]
        %v557 = vld [vmem:[%s1] sm:$0xf]
        %v558 = vld [vmem:[%s1 + $0x4] sm:$0xf]
        %v559 = vld [vmem:[%s1 + $0x8] sm:$0xf]
        %v560 = vld [vmem:[%s1 + $0xc] sm:$0xf]
        %v561 = vld [vmem:[%s1 + $0x10] sm:$0xf]
        %v562 = vld [vmem:[%s1 + $0x14] sm:$0xf]
        %v563 = vld [vmem:[%s1 + $0x18] sm:$0xf]
        %v564 = vld [vmem:[%s1 + $0x1c] sm:$0xf]
        %v565 = vld [vmem:[%s1 + $0x20] sm:$0xf]
        %v566 = vld [vmem:[%s1 + $0x24] sm:$0xf]
        %v567 = vld [vmem:[%s1 + $0x28] sm:$0xf]
        %v568 = vld [vmem:[%s1 + $0x2c] sm:$0xf]
        %v569 = vld [vmem:[%s1 + $0x30] sm:$0xf]
        %v570 = vld [vmem:[%s1 + $0x34] sm:$0xf]
        %v571 = vld [vmem:[%s1 + $0x38] sm:$0xf]
        %v572 = vld [vmem:[%s1 + $0x3c] sm:$0xf]
        %v573 = vld [vmem:[%s1 + $0x40] sm:$0xf]
        %v574 = vld [vmem:[%s1 + $0x44] sm:$0xf]
        %v575 = vld [vmem:[%s1 + $0x48] sm:$0xf]
        %v576 = vld [vmem:[%s1 + $0x4c] sm:$0xf]
        %v577 = vld [vmem:[%s1 + $0x50] sm:$0xf]
        %v578 = vld [vmem:[%s1 + $0x54] sm:$0xf]
        %v579 = vld [vmem:[%s1 + $0x58] sm:$0xf]
        %v580 = vld [vmem:[%s1 + $0x5c] sm:$0xf]
        %v581 = vld [vmem:[%s1 + $0x60] sm:$0xf]
        %v582 = vld [vmem:[%s1 + $0x64] sm:$0xf]
        %v583 = vld [vmem:[%s1 + $0x68] sm:$0xf]
        %v584 = vld [vmem:[%s1 + $0x6c] sm:$0xf]
        %v585 = vld [vmem:[%s1 + $0x70] sm:$0xf]
        %v586 = vld [vmem:[%s1 + $0x74] sm:$0xf]
        %v587 = vld [vmem:[%s1 + $0x78] sm:$0xf]
        %v588 = vld [vmem:[%s1 + $0x7c] sm:$0xf]
        %v589 = vld [vmem:[%s1 + $0x80] sm:$0xf]
        %v590 = vld [vmem:[%s1 + $0x84] sm:$0xf]
        %v591 = vld [vmem:[%s1 + $0x88] sm:$0xf]
        %v592 = vld [vmem:[%s1 + $0x8c] sm:$0xf]
        %v593 = vld [vmem:[%s1 + $0x90] sm:$0xf]
        %v594 = vld [vmem:[%s1 + $0x94] sm:$0xf]
        %v595 = vld [vmem:[%s1 + $0x98] sm:$0xf]
        %v596 = vld [vmem:[%s1 + $0x9c] sm:$0xf]
        %v597 = vld [vmem:[%s1 + $0xa0] sm:$0xf]
        %v598 = vld [vmem:[%s1 + $0xa4] sm:$0xf]
        %v599 = vld [vmem:[%s1 + $0xa8] sm:$0xf]
        %v600 = vld [vmem:[%s1 + $0xac] sm:$0xf]
        %v601 = vld [vmem:[%s1 + $0xb0] sm:$0xf]
        %v602 = vld [vmem:[%s1 + $0xb4] sm:$0xf]
        %v603 = vld [vmem:[%s1 + $0xb8] sm:$0xf]
        %v604 = vld [vmem:[%s1 + $0xbc] sm:$0xf]
        %v605 = vld [vmem:[%s1 + $0xc0] sm:$0xf]
        %v606 = vld [vmem:[%s1 + $0xc4] sm:$0xf]
        %v607 = vld [vmem:[%s1 + $0xc8] sm:$0xf]
        %v608 = vld [vmem:[%s1 + $0xcc] sm:$0xf]
        %v609 = vld [vmem:[%s1 + $0xd0] sm:$0xf]
        %v610 = vld [vmem:[%s1 + $0xd4] sm:$0xf]
        %v611 = vld [vmem:[%s1 + $0xd8] sm:$0xf]
        %v612 = vld [vmem:[%s1 + $0xdc] sm:$0xf]
        %v613 = vld [vmem:[%s1 + $0xe0] sm:$0xf]
        %v614 = vld [vmem:[%s1 + $0xe4] sm:$0xf]
        %v615 = vld [vmem:[%s1 + $0xe8] sm:$0xf]
        %v616 = vld [vmem:[%s1 + $0xec] sm:$0xf]
        %v617 = vld [vmem:[%s1 + $0xf0] sm:$0xf]
        %v618 = vld [vmem:[%s1 + $0xf4] sm:$0xf]
        %v619 = vld [vmem:[%s1 + $0xf8] sm:$0xf]
        %v620 = vld [vmem:[%s1 + $0xfc] sm:$0xf]
        %v621 = vld [vmem:[%s1 + $0x100] sm:$0xf]
        %v622 = vld [vmem:[%s1 + $0x104] sm:$0xf]
        %v623 = vld [vmem:[%s1 + $0x108] sm:$0xf]
        %v624 = vld [vmem:[%s1 + $0x10c] sm:$0xf]
        %v625 = vld [vmem:[%s1 + $0x110] sm:$0xf]
        %v626 = vld [vmem:[%s1 + $0x114] sm:$0xf]
        %v627 = vld [vmem:[%s1 + $0x118] sm:$0xf]
        %v628 = vld [vmem:[%s1 + $0x11c] sm:$0xf]
        %v629 = vld [vmem:[%s1 + $0x120] sm:$0xf]
        %v630 = vld [vmem:[%s1 + $0x124] sm:$0xf]
        %v631 = vld [vmem:[%s1 + $0x128] sm:$0xf]
        %v632 = vld [vmem:[%s1 + $0x12c] sm:$0xf]
        %v633 = vld [vmem:[%s1 + $0x130] sm:$0xf]
        %v634 = vld [vmem:[%s1 + $0x134] sm:$0xf]
        %v635 = vld [vmem:[%s1 + $0x138] sm:$0xf]
        %v636 = vld [vmem:[%s1 + $0x13c] sm:$0xf]
        %v637 = vld [vmem:[%s1 + $0x140] sm:$0xf]
        %v638 = vld [vmem:[%s1 + $0x144] sm:$0xf]
        %v639 = vld [vmem:[%s1 + $0x148] sm:$0xf]
        %v640 = vld [vmem:[%s1 + $0x14c] sm:$0xf]
        %v641 = vld [vmem:[%s1 + $0x150] sm:$0xf]
        %v642 = vld [vmem:[%s1 + $0x154] sm:$0xf]
        %v643 = vld [vmem:[%s1 + $0x158] sm:$0xf]
        %v644 = vld [vmem:[%s1 + $0x15c] sm:$0xf]
        %v645 = vld [vmem:[%s1 + $0x160] sm:$0xf]
        %v646 = vld [vmem:[%s1 + $0x164] sm:$0xf]
        %v647 = vld [vmem:[%s1 + $0x168] sm:$0xf]
        %v648 = vld [vmem:[%s1 + $0x16c] sm:$0xf]
        %v649 = vld [vmem:[%s1 + $0x170] sm:$0xf]
        %v650 = vld [vmem:[%s1 + $0x174] sm:$0xf]
        %v651 = vld [vmem:[%s1 + $0x178] sm:$0xf]
        %v652 = vld [vmem:[%s1 + $0x17c] sm:$0xf]
        %v653 = vld [vmem:[%s1 + $0x180] sm:$0xf]
        %v654 = vld [vmem:[%s1 + $0x184] sm:$0xf]
        %v655 = vld [vmem:[%s1 + $0x188] sm:$0xf]
        %v656 = vld [vmem:[%s1 + $0x18c] sm:$0xf]
        %v657 = vld [vmem:[%s1 + $0x190] sm:$0xf]
        %v658 = vld [vmem:[%s1 + $0x194] sm:$0xf]
        %v659 = vld [vmem:[%s1 + $0x198] sm:$0xf]
        %v660 = vld [vmem:[%s1 + $0x19c] sm:$0xf]
        %v661 = vld [vmem:[%s1 + $0x1a0] sm:$0xf]
        %v662 = vld [vmem:[%s1 + $0x1a4] sm:$0xf]
        %v663 = vld [vmem:[%s1 + $0x1a8] sm:$0xf]
        %v664 = vld [vmem:[%s1 + $0x1ac] sm:$0xf]
        %v665 = vld [vmem:[%s1 + $0x1b0] sm:$0xf]
        %v666 = vld [vmem:[%s1 + $0x1b4] sm:$0xf]
        %v667 = vld [vmem:[%s1 + $0x1b8] sm:$0xf]
        %v668 = vld [vmem:[%s1 + $0x1bc] sm:$0xf]
        %v669 = vld [vmem:[%s1 + $0x1c0] sm:$0xf]
        %v670 = vld [vmem:[%s1 + $0x1c4] sm:$0xf]
        %v671 = vld [vmem:[%s1 + $0x1c8] sm:$0xf]
        %v672 = vld [vmem:[%s1 + $0x1cc] sm:$0xf]
        %v673 = vld [vmem:[%s1 + $0x1d0] sm:$0xf]
        %v674 = vld [vmem:[%s1 + $0x1d4] sm:$0xf]
        %v675 = vld [vmem:[%s1 + $0x1d8] sm:$0xf]
        %v676 = vld [vmem:[%s1 + $0x1dc] sm:$0xf]
        %v677 = vld [vmem:[%s1 + $0x1e0] sm:$0xf]
        %v678 = vld [vmem:[%s1 + $0x1e4] sm:$0xf]
        %v679 = vld [vmem:[%s1 + $0x1e8] sm:$0xf]
        %v680 = vld [vmem:[%s1 + $0x1ec] sm:$0xf]
        %v681 = vld [vmem:[%s1 + $0x1f0] sm:$0xf]
        %v682 = vld [vmem:[%s1 + $0x1f4] sm:$0xf]
        %v683 = vld [vmem:[%s1 + $0x1f8] sm:$0xf]
        %v684 = vld [vmem:[%s1 + $0x1fc] sm:$0xf]
        %v685 = vld [vmem:[%s1 + $0x200] sm:$0xf]
        %v686 = vld [vmem:[%s1 + $0x204] sm:$0xf]
        %v687 = vld [vmem:[%s1 + $0x208] sm:$0xf]
        %v688 = vld [vmem:[%s1 + $0x20c] sm:$0xf]
        %v689 = vld [vmem:[%s1 + $0x210] sm:$0xf]
        %v690 = vld [vmem:[%s1 + $0x214] sm:$0xf]
        %v691 = vld [vmem:[%s1 + $0x218] sm:$0xf]
        %v692 = vld [vmem:[%s1 + $0x21c] sm:$0xf]
        %v693 = vld [vmem:[%s1 + $0x220] sm:$0xf]
        %v694 = vld [vmem:[%s1 + $0x224] sm:$0xf]
        %v695 = vld [vmem:[%s1 + $0x228] sm:$0xf]
        %v696 = vld [vmem:[%s1 + $0x22c] sm:$0xf]
        %v697 = vld [vmem:[%s1 + $0x230] sm:$0xf]
        %v698 = vld [vmem:[%s1 + $0x234] sm:$0xf]
        %v699 = vld [vmem:[%s1 + $0x238] sm:$0xf]
        %v700 = vld [vmem:[%s1 + $0x23c] sm:$0xf]
        %v701 = vld [vmem:[%s2] sm:$0x1]
        %v703 = vlaneseq
        %v704 = vshrl.u32 %v703, 7
        %v705 = vsub.s32 0, %v704
        %v706 = vrot.slane %v701, %v705
        %v718 = vunpack.c.l.b16 %v547
        %v719 = vunpack.c.h.b16 %v547
        %v720 = vunpack.c.l.b16 %v548
        %v721 = vunpack.c.h.b16 %v548
        %v722 = vunpack.c.l.b16 %v549
        %v723 = vunpack.c.h.b16 %v549
        %v724 = vunpack.c.l.b16 %v550
        %v725 = vunpack.c.h.b16 %v550
        %v726 = vunpack.c.l.b16 %v551
        %v727 = vunpack.c.l.b16 %v552
        %v728 = vunpack.c.h.b16 %v552
        %v729 = vunpack.c.l.b16 %v553
        %v730 = vunpack.c.h.b16 %v553
        %v731 = vunpack.c.l.b16 %v554
        %v732 = vunpack.c.h.b16 %v554
        %v733 = vunpack.c.l.b16 %v555
        %v734 = vunpack.c.h.b16 %v555
        %v735 = vunpack.c.l.b16 %v556
        %v736 = vpack.c.b16 %v727, %v718
        %v737 = vpack.c.b16 %v728, %v719
        %v738 = vpack.c.b16 %v729, %v720
        %v739 = vpack.c.b16 %v730, %v721
        %v740 = vpack.c.b16 %v731, %v722
        %v741 = vpack.c.b16 %v732, %v723
        %v742 = vpack.c.b16 %v733, %v724
        %v743 = vpack.c.b16 %v734, %v725
        %v744 = vpack.c.b16 %v735, %v726
        %v898 = vunpack.c.l.b16 %v557
        %v899 = vunpack.c.l.b16 %v558
        %v900 = vunpack.c.l.b16 %v559
        %v901 = vunpack.c.l.b16 %v560
        %v902 = vunpack.c.l.b16 %v561
        %v903 = vunpack.c.l.b16 %v562
        %v904 = vunpack.c.l.b16 %v563
        %v905 = vunpack.c.l.b16 %v564
        %v906 = vunpack.c.l.b16 %v565
        %v907 = vunpack.c.l.b16 %v566
        %v908 = vunpack.c.l.b16 %v567
        %v909 = vunpack.c.l.b16 %v568
        %v910 = vunpack.c.l.b16 %v569
        %v911 = vunpack.c.l.b16 %v570
        %v912 = vunpack.c.l.b16 %v571
        %v913 = vunpack.c.l.b16 %v572
        %v914 = vunpack.c.l.b16 %v573
        %v915 = vunpack.c.l.b16 %v574
        %v916 = vunpack.c.l.b16 %v575
        %v917 = vunpack.c.l.b16 %v576
        %v918 = vunpack.c.l.b16 %v577
        %v919 = vunpack.c.l.b16 %v578
        %v920 = vunpack.c.l.b16 %v579
        %v921 = vunpack.c.l.b16 %v580
        %v922 = vunpack.c.l.b16 %v581
        %v923 = vunpack.c.l.b16 %v582
        %v924 = vunpack.c.l.b16 %v583
        %v925 = vunpack.c.l.b16 %v584
        %v926 = vunpack.c.l.b16 %v585
        %v927 = vunpack.c.l.b16 %v586
        %v928 = vunpack.c.l.b16 %v587
        %v929 = vunpack.c.l.b16 %v588
        %v930 = vunpack.c.l.b16 %v589
        %v931 = vunpack.c.l.b16 %v590
        %v932 = vunpack.c.l.b16 %v591
        %v933 = vunpack.c.l.b16 %v592
        %v934 = vunpack.c.l.b16 %v593
        %v935 = vunpack.c.l.b16 %v594
        %v936 = vunpack.c.l.b16 %v595
        %v937 = vunpack.c.l.b16 %v596
        %v938 = vunpack.c.l.b16 %v597
        %v939 = vunpack.c.l.b16 %v598
        %v940 = vunpack.c.l.b16 %v599
        %v941 = vunpack.c.l.b16 %v600
        %v942 = vunpack.c.l.b16 %v601
        %v943 = vunpack.c.l.b16 %v602
        %v944 = vunpack.c.l.b16 %v603
        %v945 = vunpack.c.l.b16 %v604
        %v946 = vunpack.c.l.b16 %v605
        %v947 = vunpack.c.l.b16 %v606
        %v948 = vunpack.c.l.b16 %v607
        %v949 = vunpack.c.l.b16 %v608
        %v950 = vunpack.c.l.b16 %v609
        %v951 = vunpack.c.l.b16 %v610
        %v952 = vunpack.c.l.b16 %v611
        %v953 = vunpack.c.l.b16 %v612
        %v954 = vunpack.c.l.b16 %v613
        %v955 = vunpack.c.l.b16 %v614
        %v956 = vunpack.c.l.b16 %v615
        %v957 = vunpack.c.l.b16 %v616
        %v958 = vunpack.c.l.b16 %v617
        %v959 = vunpack.c.l.b16 %v618
        %v960 = vunpack.c.l.b16 %v619
        %v961 = vunpack.c.l.b16 %v620
        %v962 = vunpack.c.l.b16 %v621
        %v963 = vunpack.c.l.b16 %v622
        %v964 = vunpack.c.l.b16 %v623
        %v965 = vunpack.c.l.b16 %v624
        %v966 = vunpack.c.l.b16 %v625
        %v967 = vunpack.c.l.b16 %v626
        %v968 = vunpack.c.l.b16 %v627
        %v969 = vunpack.c.l.b16 %v628
        %v970 = vunpack.c.l.b16 %v629
        %v971 = vunpack.c.l.b16 %v630
        %v972 = vunpack.c.l.b16 %v631
        %v973 = vunpack.c.l.b16 %v632
        %v974 = vunpack.c.l.b16 %v633
        %v975 = vunpack.c.l.b16 %v634
        %v976 = vunpack.c.l.b16 %v635
        %v977 = vunpack.c.l.b16 %v636
        %v978 = vunpack.c.l.b16 %v637
        %v979 = vunpack.c.l.b16 %v638
        %v980 = vunpack.c.l.b16 %v639
        %v981 = vunpack.c.l.b16 %v640
        %v982 = vunpack.c.l.b16 %v641
        %v983 = vunpack.c.l.b16 %v642
        %v984 = vunpack.c.l.b16 %v643
        %v985 = vunpack.c.l.b16 %v644
        %v986 = vunpack.c.l.b16 %v645
        %v987 = vunpack.c.l.b16 %v646
        %v988 = vunpack.c.l.b16 %v647
        %v989 = vunpack.c.l.b16 %v648
        %v990 = vunpack.c.l.b16 %v649
        %v991 = vunpack.c.l.b16 %v650
        %v992 = vunpack.c.l.b16 %v651
        %v993 = vunpack.c.l.b16 %v652
        %v994 = vunpack.c.l.b16 %v653
        %v995 = vunpack.c.l.b16 %v654
        %v996 = vunpack.c.l.b16 %v655
        %v997 = vunpack.c.l.b16 %v656
        %v998 = vunpack.c.l.b16 %v657
        %v999 = vunpack.c.l.b16 %v658
        %v1000 = vunpack.c.l.b16 %v659
        %v1001 = vunpack.c.l.b16 %v660
        %v1002 = vunpack.c.l.b16 %v661
        %v1003 = vunpack.c.l.b16 %v662
        %v1004 = vunpack.c.l.b16 %v663
        %v1005 = vunpack.c.l.b16 %v664
        %v1006 = vunpack.c.l.b16 %v665
        %v1007 = vunpack.c.l.b16 %v666
        %v1008 = vunpack.c.l.b16 %v667
        %v1009 = vunpack.c.l.b16 %v668
        %v1010 = vunpack.c.l.b16 %v669
        %v1011 = vunpack.c.l.b16 %v670
        %v1012 = vunpack.c.l.b16 %v671
        %v1013 = vunpack.c.l.b16 %v672
        %v1014 = vunpack.c.l.b16 %v673
        %v1015 = vunpack.c.l.b16 %v674
        %v1016 = vunpack.c.l.b16 %v675
        %v1017 = vunpack.c.l.b16 %v676
        %v1018 = vunpack.c.l.b16 %v677
        %v1019 = vunpack.c.l.b16 %v678
        %v1020 = vunpack.c.l.b16 %v679
        %v1021 = vunpack.c.l.b16 %v680
        %v1022 = vunpack.c.l.b16 %v681
        %v1023 = vunpack.c.l.b16 %v682
        %v1024 = vunpack.c.l.b16 %v683
        %v1025 = vunpack.c.l.b16 %v684
        %v1026 = vunpack.c.l.b16 %v685
        %v1027 = vunpack.c.l.b16 %v686
        %v1028 = vunpack.c.l.b16 %v687
        %v1029 = vunpack.c.l.b16 %v688
        %v1030 = vunpack.c.l.b16 %v689
        %v1031 = vunpack.c.l.b16 %v690
        %v1032 = vunpack.c.l.b16 %v691
        %v1033 = vunpack.c.l.b16 %v692
        %v1034 = vunpack.c.l.b16 %v693
        %v1035 = vunpack.c.l.b16 %v694
        %v1036 = vunpack.c.l.b16 %v695
        %v1037 = vunpack.c.l.b16 %v696
        %v1038 = vunpack.c.l.b16 %v697
        %v1039 = vunpack.c.l.b16 %v698
        %v1040 = vunpack.c.l.b16 %v699
        %v1041 = vunpack.c.l.b16 %v700
        %v1042 = vpack.c.b16 %v899, %v898
        %v1043 = vpack.c.b16 %v901, %v900
        %v1044 = vpack.c.b16 %v903, %v902
        %v1045 = vpack.c.b16 %v905, %v904
        %v1046 = vpack.c.b16 %v907, %v906
        %v1047 = vpack.c.b16 %v909, %v908
        %v1048 = vpack.c.b16 %v911, %v910
        %v1049 = vpack.c.b16 %v913, %v912
        %v1050 = vpack.c.b16 %v915, %v914
        %v1051 = vpack.c.b16 %v917, %v916
        %v1052 = vpack.c.b16 %v919, %v918
        %v1053 = vpack.c.b16 %v921, %v920
        %v1054 = vpack.c.b16 %v923, %v922
        %v1055 = vpack.c.b16 %v925, %v924
        %v1056 = vpack.c.b16 %v927, %v926
        %v1057 = vpack.c.b16 %v929, %v928
        %v1058 = vpack.c.b16 %v931, %v930
        %v1059 = vpack.c.b16 %v933, %v932
        %v1060 = vpack.c.b16 %v935, %v934
        %v1061 = vpack.c.b16 %v937, %v936
        %v1062 = vpack.c.b16 %v939, %v938
        %v1063 = vpack.c.b16 %v941, %v940
        %v1064 = vpack.c.b16 %v943, %v942
        %v1065 = vpack.c.b16 %v945, %v944
        %v1066 = vpack.c.b16 %v947, %v946
        %v1067 = vpack.c.b16 %v949, %v948
        %v1068 = vpack.c.b16 %v951, %v950
        %v1069 = vpack.c.b16 %v953, %v952
        %v1070 = vpack.c.b16 %v955, %v954
        %v1071 = vpack.c.b16 %v957, %v956
        %v1072 = vpack.c.b16 %v959, %v958
        %v1073 = vpack.c.b16 %v961, %v960
        %v1074 = vpack.c.b16 %v963, %v962
        %v1075 = vpack.c.b16 %v965, %v964
        %v1076 = vpack.c.b16 %v967, %v966
        %v1077 = vpack.c.b16 %v969, %v968
        %v1078 = vpack.c.b16 %v971, %v970
        %v1079 = vpack.c.b16 %v973, %v972
        %v1080 = vpack.c.b16 %v975, %v974
        %v1081 = vpack.c.b16 %v977, %v976
        %v1082 = vpack.c.b16 %v979, %v978
        %v1083 = vpack.c.b16 %v981, %v980
        %v1084 = vpack.c.b16 %v983, %v982
        %v1085 = vpack.c.b16 %v985, %v984
        %v1086 = vpack.c.b16 %v987, %v986
        %v1087 = vpack.c.b16 %v989, %v988
        %v1088 = vpack.c.b16 %v991, %v990
        %v1089 = vpack.c.b16 %v993, %v992
        %v1090 = vpack.c.b16 %v995, %v994
        %v1091 = vpack.c.b16 %v997, %v996
        %v1092 = vpack.c.b16 %v999, %v998
        %v1093 = vpack.c.b16 %v1001, %v1000
        %v1094 = vpack.c.b16 %v1003, %v1002
        %v1095 = vpack.c.b16 %v1005, %v1004
        %v1096 = vpack.c.b16 %v1007, %v1006
        %v1097 = vpack.c.b16 %v1009, %v1008
        %v1098 = vpack.c.b16 %v1011, %v1010
        %v1099 = vpack.c.b16 %v1013, %v1012
        %v1100 = vpack.c.b16 %v1015, %v1014
        %v1101 = vpack.c.b16 %v1017, %v1016
        %v1102 = vpack.c.b16 %v1019, %v1018
        %v1103 = vpack.c.b16 %v1021, %v1020
        %v1104 = vpack.c.b16 %v1023, %v1022
        %v1105 = vpack.c.b16 %v1025, %v1024
        %v1106 = vpack.c.b16 %v1027, %v1026
        %v1107 = vpack.c.b16 %v1029, %v1028
        %v1108 = vpack.c.b16 %v1031, %v1030
        %v1109 = vpack.c.b16 %v1033, %v1032
        %v1110 = vpack.c.b16 %v1035, %v1034
        %v1111 = vpack.c.b16 %v1037, %v1036
        %v1112 = vpack.c.b16 %v1039, %v1038
        %v1113 = vpack.c.b16 %v1041, %v1040
        %1186 = vmatprep.subr.bf16.mxu0 0
        %1187 = vmatpush1.bf16.msra.mxu0 %v1049
        %1188 = vmatprep.subr.bf16.mxu0 0
        %1189 = vmatpush1.bf16.msra.mxu0 %v1048
        %1190 = vmatprep.subr.bf16.mxu0 0
        %1191 = vmatpush1.bf16.msra.mxu0 %v1047
        %1192 = vmatprep.subr.bf16.mxu0 0
        %1193 = vmatpush1.bf16.msra.mxu0 %v1046
        %1194 = vmatprep.subr.bf16.mxu0 0
        %1195 = vmatpush1.bf16.msra.mxu0 %v1045
        %1196 = vmatprep.subr.bf16.mxu0 0
        %1197 = vmatpush1.bf16.msra.mxu0 %v1044
        %1198 = vmatprep.subr.bf16.mxu0 0
        %1199 = vmatpush1.bf16.msra.mxu0 %v1043
        %1200 = vmatprep.subr.bf16.mxu0 0
        %1201 = vmatpush1.bf16.msra.mxu0 %v1042
        %1202 = vmatprep.subr.bf16.mxu0 0
        %1203 = vmatpush2.bf16.msra.mxu0 %v1057
        %1204 = vmatprep.subr.bf16.mxu0 0
        %1205 = vmatpush2.bf16.msra.mxu0 %v1056
        %1206 = vmatprep.subr.bf16.mxu0 0
        %1207 = vmatpush2.bf16.msra.mxu0 %v1055
        %1208 = vmatprep.subr.bf16.mxu0 0
        %1209 = vmatpush2.bf16.msra.mxu0 %v1054
        %1210 = vmatprep.subr.bf16.mxu0 0
        %1211 = vmatpush2.bf16.msra.mxu0 %v1053
        %1212 = vmatprep.subr.bf16.mxu0 0
        %1213 = vmatpush2.bf16.msra.mxu0 %v1052
        %1214 = vmatprep.subr.bf16.mxu0 0
        %1215 = vmatpush2.bf16.msra.mxu0 %v1051
        %1216 = vmatprep.subr.bf16.mxu0 0
        %1217 = vmatpush2.bf16.msra.mxu0 %v1050
        %1218 = vmatprep.mubr.bf16.mxu0 %v737
        %1219 = vmatmul.mubr.bf16.gmra.mxu0 %v736
        %v1220 = vpop.f32.mrf.mxu0
        %v1221 = vadd.f32 %v706, %v1220
        %v1222 = vpop.f32.mrf.mxu0
        %v1223 = vpop.f32.mrf.mxu0
        %v1224 = vadd.f32 %v706, %v1223
        %v1225 = vpop.f32.mrf.mxu0
        %1226 = vdwg.mxu0
        %1227 = vmatprep.subr.bf16.mxu0 0
        %1228 = vmatpush1.bf16.msra.mxu0 %v1065
        %1229 = vmatprep.subr.bf16.mxu0 0
        %1230 = vmatpush1.bf16.msra.mxu0 %v1064
        %1231 = vmatprep.subr.bf16.mxu0 0
        %1232 = vmatpush1.bf16.msra.mxu0 %v1063
        %1233 = vmatprep.subr.bf16.mxu0 0
        %1234 = vmatpush1.bf16.msra.mxu0 %v1062
        %1235 = vmatprep.subr.bf16.mxu0 0
        %1236 = vmatpush1.bf16.msra.mxu0 %v1061
        %1237 = vmatprep.subr.bf16.mxu0 0
        %1238 = vmatpush1.bf16.msra.mxu0 %v1060
        %1239 = vmatprep.subr.bf16.mxu0 0
        %1240 = vmatpush1.bf16.msra.mxu0 %v1059
        %1241 = vmatprep.subr.bf16.mxu0 0
        %1242 = vmatpush1.bf16.msra.mxu0 %v1058
        %1243 = vmatprep.subr.bf16.mxu0 0
        %1244 = vmatpush2.bf16.msra.mxu0 %v1073
        %1245 = vmatprep.subr.bf16.mxu0 0
        %1246 = vmatpush2.bf16.msra.mxu0 %v1072
        %1247 = vmatprep.subr.bf16.mxu0 0
        %1248 = vmatpush2.bf16.msra.mxu0 %v1071
        %1249 = vmatprep.subr.bf16.mxu0 0
        %1250 = vmatpush2.bf16.msra.mxu0 %v1070
        %1251 = vmatprep.subr.bf16.mxu0 0
        %1252 = vmatpush2.bf16.msra.mxu0 %v1069
        %1253 = vmatprep.subr.bf16.mxu0 0
        %1254 = vmatpush2.bf16.msra.mxu0 %v1068
        %1255 = vmatprep.subr.bf16.mxu0 0
        %1256 = vmatpush2.bf16.msra.mxu0 %v1067
        %1257 = vmatprep.subr.bf16.mxu0 0
        %1258 = vmatpush2.bf16.msra.mxu0 %v1066
        %1259 = vmatprep.mubr.bf16.mxu0 %v739
        %1260 = vmatmul.mubr.bf16.gmra.mxu0 %v738
        %v1261 = vpop.f32.mrf.mxu0
        %v1262 = vadd.f32 %v1221, %v1261
        %v1263 = vpop.f32.mrf.mxu0
        %v1264 = vpop.f32.mrf.mxu0
        %v1265 = vadd.f32 %v1224, %v1264
        %v1266 = vpop.f32.mrf.mxu0
        %1267 = vdwg.mxu0
        %1268 = vmatprep.subr.bf16.mxu0 0
        %1269 = vmatpush1.bf16.msra.mxu0 %v1081
        %1270 = vmatprep.subr.bf16.mxu0 0
        %1271 = vmatpush1.bf16.msra.mxu0 %v1080
        %1272 = vmatprep.subr.bf16.mxu0 0
        %1273 = vmatpush1.bf16.msra.mxu0 %v1079
        %1274 = vmatprep.subr.bf16.mxu0 0
        %1275 = vmatpush1.bf16.msra.mxu0 %v1078
        %1276 = vmatprep.subr.bf16.mxu0 0
        %1277 = vmatpush1.bf16.msra.mxu0 %v1077
        %1278 = vmatprep.subr.bf16.mxu0 0
        %1279 = vmatpush1.bf16.msra.mxu0 %v1076
        %1280 = vmatprep.subr.bf16.mxu0 0
        %1281 = vmatpush1.bf16.msra.mxu0 %v1075
        %1282 = vmatprep.subr.bf16.mxu0 0
        %1283 = vmatpush1.bf16.msra.mxu0 %v1074
        %1284 = vmatprep.subr.bf16.mxu0 0
        %1285 = vmatpush2.bf16.msra.mxu0 %v1089
        %1286 = vmatprep.subr.bf16.mxu0 0
        %1287 = vmatpush2.bf16.msra.mxu0 %v1088
        %1288 = vmatprep.subr.bf16.mxu0 0
        %1289 = vmatpush2.bf16.msra.mxu0 %v1087
        %1290 = vmatprep.subr.bf16.mxu0 0
        %1291 = vmatpush2.bf16.msra.mxu0 %v1086
        %1292 = vmatprep.subr.bf16.mxu0 0
        %1293 = vmatpush2.bf16.msra.mxu0 %v1085
        %1294 = vmatprep.subr.bf16.mxu0 0
        %1295 = vmatpush2.bf16.msra.mxu0 %v1084
        %1296 = vmatprep.subr.bf16.mxu0 0
        %1297 = vmatpush2.bf16.msra.mxu0 %v1083
        %1298 = vmatprep.subr.bf16.mxu0 0
        %1299 = vmatpush2.bf16.msra.mxu0 %v1082
        %1300 = vmatprep.mubr.bf16.mxu0 %v741
        %1301 = vmatmul.mubr.bf16.gmra.mxu0 %v740
        %v1302 = vpop.f32.mrf.mxu0
        %v1303 = vadd.f32 %v1262, %v1302
        %v1304 = vpop.f32.mrf.mxu0
        %v1305 = vpop.f32.mrf.mxu0
        %v1306 = vadd.f32 %v1265, %v1305
        %v1307 = vpop.f32.mrf.mxu0
        %1308 = vdwg.mxu0
        %1309 = vmatprep.subr.bf16.mxu0 0
        %1310 = vmatpush1.bf16.msra.mxu0 %v1097
        %1311 = vmatprep.subr.bf16.mxu0 0
        %1312 = vmatpush1.bf16.msra.mxu0 %v1096
        %1313 = vmatprep.subr.bf16.mxu0 0
        %1314 = vmatpush1.bf16.msra.mxu0 %v1095
        %1315 = vmatprep.subr.bf16.mxu0 0
        %1316 = vmatpush1.bf16.msra.mxu0 %v1094
        %1317 = vmatprep.subr.bf16.mxu0 0
        %1318 = vmatpush1.bf16.msra.mxu0 %v1093
        %1319 = vmatprep.subr.bf16.mxu0 0
        %1320 = vmatpush1.bf16.msra.mxu0 %v1092
        %1321 = vmatprep.subr.bf16.mxu0 0
        %1322 = vmatpush1.bf16.msra.mxu0 %v1091
        %1323 = vmatprep.subr.bf16.mxu0 0
        %1324 = vmatpush1.bf16.msra.mxu0 %v1090
        %1325 = vmatprep.subr.bf16.mxu0 0
        %1326 = vmatpush2.bf16.msra.mxu0 %v1105
        %1327 = vmatprep.subr.bf16.mxu0 0
        %1328 = vmatpush2.bf16.msra.mxu0 %v1104
        %1329 = vmatprep.subr.bf16.mxu0 0
        %1330 = vmatpush2.bf16.msra.mxu0 %v1103
        %1331 = vmatprep.subr.bf16.mxu0 0
        %1332 = vmatpush2.bf16.msra.mxu0 %v1102
        %1333 = vmatprep.subr.bf16.mxu0 0
        %1334 = vmatpush2.bf16.msra.mxu0 %v1101
        %1335 = vmatprep.subr.bf16.mxu0 0
        %1336 = vmatpush2.bf16.msra.mxu0 %v1100
        %1337 = vmatprep.subr.bf16.mxu0 0
        %1338 = vmatpush2.bf16.msra.mxu0 %v1099
        %1339 = vmatprep.subr.bf16.mxu0 0
        %1340 = vmatpush2.bf16.msra.mxu0 %v1098
        %1341 = vmatprep.mubr.bf16.mxu0 %v743
        %1342 = vmatmul.mubr.bf16.gmra.mxu0 %v742
        %v1343 = vpop.f32.mrf.mxu0
        %v1344 = vadd.f32 %v1303, %v1343
        %v1345 = vpop.f32.mrf.mxu0
        %v1346 = vpop.f32.mrf.mxu0
        %v1347 = vadd.f32 %v1306, %v1346
        %v1348 = vpop.f32.mrf.mxu0
        %1349 = vdwg.mxu0
        %1350 = vmatprep.subr.bf16.mxu0 0
        %1351 = vmatpush1.bf16.msra.mxu0 %v1113
        %1352 = vmatprep.subr.bf16.mxu0 0
        %1353 = vmatpush1.bf16.msra.mxu0 %v1112
        %1354 = vmatprep.subr.bf16.mxu0 0
        %1355 = vmatpush1.bf16.msra.mxu0 %v1111
        %1356 = vmatprep.subr.bf16.mxu0 0
        %1357 = vmatpush1.bf16.msra.mxu0 %v1110
        %1358 = vmatprep.subr.bf16.mxu0 0
        %1359 = vmatpush1.bf16.msra.mxu0 %v1109
        %1360 = vmatprep.subr.bf16.mxu0 0
        %1361 = vmatpush1.bf16.msra.mxu0 %v1108
        %1362 = vmatprep.subr.bf16.mxu0 0
        %1363 = vmatpush1.bf16.msra.mxu0 %v1107
        %1364 = vmatprep.subr.bf16.mxu0 0
        %1365 = vmatpush1.bf16.msra.mxu0 %v1106
        %1366 = vmatprep.subr.bf16.mxu0 0
        %1367 = vmatpush2.bf16.msra.mxu0 0
        %1368 = vmatprep.subr.bf16.mxu0 0
        %1369 = vmatpush2.bf16.msra.mxu0 0
        %1370 = vmatprep.subr.bf16.mxu0 0
        %1371 = vmatpush2.bf16.msra.mxu0 0
        %1372 = vmatprep.subr.bf16.mxu0 0
        %1373 = vmatpush2.bf16.msra.mxu0 0
        %1374 = vmatprep.subr.bf16.mxu0 0
        %1375 = vmatpush2.bf16.msra.mxu0 0
        %1376 = vmatprep.subr.bf16.mxu0 0
        %1377 = vmatpush2.bf16.msra.mxu0 0
        %1378 = vmatprep.subr.bf16.mxu0 0
        %1379 = vmatpush2.bf16.msra.mxu0 0
        %1380 = vmatprep.subr.bf16.mxu0 0
        %1381 = vmatpush2.bf16.msra.mxu0 0
        %1382 = vmatprep.mubr.bf16.mxu0 0
        %1383 = vmatmul.mubr.bf16.gmra.mxu0 %v744
        %v1384 = vpop.f32.mrf.mxu0
        %v1385 = vadd.f32 %v1344, %v1384
        %v1386 = vpop.f32.mrf.mxu0
        %v1387 = vpop.f32.mrf.mxu0
        %v1388 = vadd.f32 %v1347, %v1387
        %v1389 = vpop.f32.mrf.mxu0
        %1390 = vdwg.mxu0
        %v1391 = vmax.f32 %v1385, 0.0
        %v1392 = vmax.f32 %v1388, 0.0
        %1393 = vst [vmem:[#allocation2] sm:$0xff] %v1391
        %1394 = vst [vmem:[#allocation2 + $0x8] sm:$0xff] %v1392
        %v1395 = vld [vmem:[#allocation2] sm:$0x1]
        %v1396 = vld [vmem:[#allocation2 + $0x1] sm:$0x1]
        %v1397 = vld [vmem:[#allocation2 + $0x2] sm:$0x1]
        %v1398 = vld [vmem:[#allocation2 + $0x3] sm:$0x1]
        %v1399 = vld [vmem:[#allocation2 + $0x4] sm:$0x1]
        %v1400 = vld [vmem:[#allocation2 + $0x5] sm:$0x1]
        %v1401 = vld [vmem:[#allocation2 + $0x6] sm:$0x1]
        %v1402 = vld [vmem:[#allocation2 + $0x7] sm:$0x1]
        %v1403 = vld [vmem:[#allocation2 + $0x8] sm:$0x1]
        %v1404 = vld [vmem:[#allocation2 + $0x9] sm:$0x1]
        %v1405 = vld [vmem:[#allocation2 + $0xa] sm:$0x1]
        %v1406 = vld [vmem:[#allocation2 + $0xb] sm:$0x1]
        %v1407 = vld [vmem:[#allocation2 + $0xc] sm:$0x1]
        %v1408 = vld [vmem:[#allocation2 + $0xd] sm:$0x1]
        %v1409 = vld [vmem:[#allocation2 + $0xe] sm:$0x1]
        %v1410 = vld [vmem:[#allocation2 + $0xf] sm:$0x1]
        %v1411 = vpack.c.bf16 %v1395, %v1395
        %v1412 = vpack.c.bf16 %v1396, %v1396
        %v1413 = vpack.c.bf16 %v1397, %v1397
        %v1414 = vpack.c.bf16 %v1398, %v1398
        %v1415 = vpack.c.bf16 %v1399, %v1399
        %v1416 = vpack.c.bf16 %v1400, %v1400
        %v1417 = vpack.c.bf16 %v1401, %v1401
        %v1418 = vpack.c.bf16 %v1402, %v1402
        %v1419 = vpack.c.bf16 %v1403, %v1403
        %v1420 = vpack.c.bf16 %v1404, %v1404
        %v1421 = vpack.c.bf16 %v1405, %v1405
        %v1422 = vpack.c.bf16 %v1406, %v1406
        %v1423 = vpack.c.bf16 %v1407, %v1407
        %v1424 = vpack.c.bf16 %v1408, %v1408
        %v1425 = vpack.c.bf16 %v1409, %v1409
        %v1426 = vpack.c.bf16 %v1410, %v1410
        %v1427 = vld [vmem:[%s3] sm:$0xff]
        %v1428 = vld [vmem:[%s3 + $0x8] sm:$0xff]
        %v1429 = vld [vmem:[%s3 + $0x10] sm:$0xff]
        %v1430 = vld [vmem:[%s3 + $0x18] sm:$0xff]
        %v1431 = vld [vmem:[%s3 + $0x20] sm:$0xff]
        %v1432 = vld [vmem:[%s3 + $0x28] sm:$0xff]
        %v1433 = vld [vmem:[%s3 + $0x30] sm:$0xff]
        %v1434 = vld [vmem:[%s3 + $0x38] sm:$0xff]
        %v1435 = vld [vmem:[%s3 + $0x40] sm:$0xff]
        %v1436 = vld [vmem:[%s3 + $0x48] sm:$0xff]
        %v1437 = vld [vmem:[%s3 + $0x50] sm:$0xff]
        %v1438 = vld [vmem:[%s3 + $0x58] sm:$0xff]
        %v1439 = vld [vmem:[%s3 + $0x60] sm:$0xff]
        %v1440 = vld [vmem:[%s3 + $0x68] sm:$0xff]
        %v1441 = vld [vmem:[%s3 + $0x70] sm:$0xff]
        %v1442 = vld [vmem:[%s3 + $0x78] sm:$0xff]
        %v1443 = vld [vmem:[%s3 + $0x80] sm:$0xff]
        %v1444 = vld [vmem:[%s3 + $0x88] sm:$0xff]
        %v1445 = vld [vmem:[%s3 + $0x90] sm:$0xff]
        %v1446 = vld [vmem:[%s3 + $0x98] sm:$0xff]
        %v1447 = vld [vmem:[%s3 + $0xa0] sm:$0xff]
        %v1448 = vld [vmem:[%s3 + $0xa8] sm:$0xff]
        %v1449 = vld [vmem:[%s3 + $0xb0] sm:$0xff]
        %v1450 = vld [vmem:[%s3 + $0xb8] sm:$0xff]
        %v1451 = vld [vmem:[%s3 + $0xc0] sm:$0xff]
        %v1452 = vld [vmem:[%s3 + $0xc8] sm:$0xff]
        %v1453 = vld [vmem:[%s3 + $0xd0] sm:$0xff]
        %v1454 = vld [vmem:[%s3 + $0xd8] sm:$0xff]
        %v1455 = vld [vmem:[%s3 + $0xe0] sm:$0xff]
        %v1456 = vld [vmem:[%s3 + $0xe8] sm:$0xff]
        %v1457 = vld [vmem:[%s3 + $0xf0] sm:$0xff]
        %v1458 = vld [vmem:[%s3 + $0xf8] sm:$0xff]
        %v1459 = vld [vmem:[%s3 + $0x100] sm:$0xff]
        %v1460 = vld [vmem:[%s3 + $0x108] sm:$0xff]
        %v1461 = vld [vmem:[%s3 + $0x110] sm:$0xff]
        %v1462 = vld [vmem:[%s3 + $0x118] sm:$0xff]
        %v1463 = vld [vmem:[%s3 + $0x120] sm:$0xff]
        %v1464 = vld [vmem:[%s3 + $0x128] sm:$0xff]
        %v1465 = vld [vmem:[%s3 + $0x130] sm:$0xff]
        %v1466 = vld [vmem:[%s3 + $0x138] sm:$0xff]
        %v1467 = vld [vmem:[%s3 + $0x140] sm:$0xff]
        %v1468 = vld [vmem:[%s3 + $0x148] sm:$0xff]
        %v1469 = vld [vmem:[%s3 + $0x150] sm:$0xff]
        %v1470 = vld [vmem:[%s3 + $0x158] sm:$0xff]
        %v1471 = vld [vmem:[%s3 + $0x160] sm:$0xff]
        %v1472 = vld [vmem:[%s3 + $0x168] sm:$0xff]
        %v1473 = vld [vmem:[%s3 + $0x170] sm:$0xff]
        %v1474 = vld [vmem:[%s3 + $0x178] sm:$0xff]
        %v1475 = vld [vmem:[%s3 + $0x180] sm:$0xff]
        %v1476 = vld [vmem:[%s3 + $0x188] sm:$0xff]
        %v1477 = vld [vmem:[%s3 + $0x190] sm:$0xff]
        %v1478 = vld [vmem:[%s3 + $0x198] sm:$0xff]
        %v1479 = vld [vmem:[%s3 + $0x1a0] sm:$0xff]
        %v1480 = vld [vmem:[%s3 + $0x1a8] sm:$0xff]
        %v1481 = vld [vmem:[%s3 + $0x1b0] sm:$0xff]
        %v1482 = vld [vmem:[%s3 + $0x1b8] sm:$0xff]
        %v1483 = vld [vmem:[%s3 + $0x1c0] sm:$0xff]
        %v1484 = vld [vmem:[%s3 + $0x1c8] sm:$0xff]
        %v1485 = vld [vmem:[%s3 + $0x1d0] sm:$0xff]
        %v1486 = vld [vmem:[%s3 + $0x1d8] sm:$0xff]
        %v1487 = vld [vmem:[%s3 + $0x1e0] sm:$0xff]
        %v1488 = vld [vmem:[%s3 + $0x1e8] sm:$0xff]
        %v1489 = vld [vmem:[%s3 + $0x1f0] sm:$0xff]
        %v1490 = vld [vmem:[%s3 + $0x1f8] sm:$0xff]
        %v1491 = vld [vmem:[%s3 + $0x200] sm:$0xff]
        %v1492 = vld [vmem:[%s3 + $0x208] sm:$0xff]
        %v1493 = vld [vmem:[%s3 + $0x210] sm:$0xff]
        %v1494 = vld [vmem:[%s3 + $0x218] sm:$0xff]
        %v1495 = vld [vmem:[%s3 + $0x220] sm:$0xff]
        %v1496 = vld [vmem:[%s3 + $0x228] sm:$0xff]
        %v1497 = vld [vmem:[%s3 + $0x230] sm:$0xff]
        %v1498 = vld [vmem:[%s3 + $0x238] sm:$0xff]
        %v1499 = vld [vmem:[%s3 + $0x240] sm:$0xff]
        %v1500 = vld [vmem:[%s3 + $0x248] sm:$0xff]
        %v1501 = vld [vmem:[%s3 + $0x250] sm:$0xff]
        %v1502 = vld [vmem:[%s3 + $0x258] sm:$0xff]
        %v1503 = vld [vmem:[%s3 + $0x260] sm:$0xff]
        %v1504 = vld [vmem:[%s3 + $0x268] sm:$0xff]
        %v1505 = vld [vmem:[%s3 + $0x270] sm:$0xff]
        %v1506 = vld [vmem:[%s3 + $0x278] sm:$0xff]
        %v1507 = vld [vmem:[%s3 + $0x280] sm:$0xff]
        %v1508 = vld [vmem:[%s3 + $0x288] sm:$0xff]
        %v1509 = vld [vmem:[%s3 + $0x290] sm:$0xff]
        %v1510 = vld [vmem:[%s3 + $0x298] sm:$0xff]
        %v1511 = vld [vmem:[%s3 + $0x2a0] sm:$0xff]
        %v1512 = vld [vmem:[%s3 + $0x2a8] sm:$0xff]
        %v1513 = vld [vmem:[%s3 + $0x2b0] sm:$0xff]
        %v1514 = vld [vmem:[%s3 + $0x2b8] sm:$0xff]
        %v1515 = vld [vmem:[%s3 + $0x2c0] sm:$0xff]
        %v1516 = vld [vmem:[%s3 + $0x2c8] sm:$0xff]
        %v1517 = vld [vmem:[%s3 + $0x2d0] sm:$0xff]
        %v1518 = vld [vmem:[%s3 + $0x2d8] sm:$0xff]
        %v1519 = vld [vmem:[%s3 + $0x2e0] sm:$0xff]
        %v1520 = vld [vmem:[%s3 + $0x2e8] sm:$0xff]
        %v1521 = vld [vmem:[%s3 + $0x2f0] sm:$0xff]
        %v1522 = vld [vmem:[%s3 + $0x2f8] sm:$0xff]
        %v1523 = vld [vmem:[%s3 + $0x300] sm:$0xff]
        %v1524 = vld [vmem:[%s3 + $0x308] sm:$0xff]
        %v1525 = vld [vmem:[%s3 + $0x310] sm:$0xff]
        %v1526 = vld [vmem:[%s3 + $0x318] sm:$0xff]
        %v1527 = vld [vmem:[%s3 + $0x320] sm:$0xff]
        %v1528 = vld [vmem:[%s3 + $0x328] sm:$0xff]
        %v1529 = vld [vmem:[%s3 + $0x330] sm:$0xff]
        %v1530 = vld [vmem:[%s3 + $0x338] sm:$0xff]
        %v1531 = vld [vmem:[%s3 + $0x340] sm:$0xff]
        %v1532 = vld [vmem:[%s3 + $0x348] sm:$0xff]
        %v1533 = vld [vmem:[%s3 + $0x350] sm:$0xff]
        %v1534 = vld [vmem:[%s3 + $0x358] sm:$0xff]
        %v1535 = vld [vmem:[%s3 + $0x360] sm:$0xff]
        %v1536 = vld [vmem:[%s3 + $0x368] sm:$0xff]
        %v1537 = vld [vmem:[%s3 + $0x370] sm:$0xff]
        %v1538 = vld [vmem:[%s3 + $0x378] sm:$0xff]
        %v1539 = vld [vmem:[%s3 + $0x380] sm:$0xff]
        %v1540 = vld [vmem:[%s3 + $0x388] sm:$0xff]
        %v1541 = vld [vmem:[%s3 + $0x390] sm:$0xff]
        %v1542 = vld [vmem:[%s3 + $0x398] sm:$0xff]
        %v1543 = vld [vmem:[%s3 + $0x3a0] sm:$0xff]
        %v1544 = vld [vmem:[%s3 + $0x3a8] sm:$0xff]
        %v1545 = vld [vmem:[%s3 + $0x3b0] sm:$0xff]
        %v1546 = vld [vmem:[%s3 + $0x3b8] sm:$0xff]
        %v1547 = vld [vmem:[%s3 + $0x3c0] sm:$0xff]
        %v1548 = vld [vmem:[%s3 + $0x3c8] sm:$0xff]
        %v1549 = vld [vmem:[%s3 + $0x3d0] sm:$0xff]
        %v1550 = vld [vmem:[%s3 + $0x3d8] sm:$0xff]
        %v1551 = vld [vmem:[%s3 + $0x3e0] sm:$0xff]
        %v1552 = vld [vmem:[%s3 + $0x3e8] sm:$0xff]
        %v1553 = vld [vmem:[%s3 + $0x3f0] sm:$0xff]
        %v1554 = vld [vmem:[%s3 + $0x3f8] sm:$0xff]
        %v1555 = vld [vmem:[%s3 + $0x400] sm:$0xff]
        %v1556 = vld [vmem:[%s3 + $0x408] sm:$0xff]
        %v1557 = vld [vmem:[%s3 + $0x410] sm:$0xff]
        %v1558 = vld [vmem:[%s3 + $0x418] sm:$0xff]
        %v1559 = vld [vmem:[%s3 + $0x420] sm:$0xff]
        %v1560 = vld [vmem:[%s3 + $0x428] sm:$0xff]
        %v1561 = vld [vmem:[%s3 + $0x430] sm:$0xff]
        %v1562 = vld [vmem:[%s3 + $0x438] sm:$0xff]
        %v1563 = vld [vmem:[%s3 + $0x440] sm:$0xff]
        %v1564 = vld [vmem:[%s3 + $0x448] sm:$0xff]
        %v1565 = vld [vmem:[%s3 + $0x450] sm:$0xff]
        %v1566 = vld [vmem:[%s3 + $0x458] sm:$0xff]
        %v1567 = vld [vmem:[%s3 + $0x460] sm:$0xff]
        %v1568 = vld [vmem:[%s3 + $0x468] sm:$0xff]
        %v1569 = vld [vmem:[%s3 + $0x470] sm:$0xff]
        %v1570 = vld [vmem:[%s3 + $0x478] sm:$0xff]
        %v1571 = vld [vmem:[%s3 + $0x480] sm:$0xff]
        %v1572 = vld [vmem:[%s3 + $0x488] sm:$0xff]
        %v1573 = vld [vmem:[%s3 + $0x490] sm:$0xff]
        %v1574 = vld [vmem:[%s3 + $0x498] sm:$0xff]
        %v1575 = vld [vmem:[%s3 + $0x4a0] sm:$0xff]
        %v1576 = vld [vmem:[%s3 + $0x4a8] sm:$0xff]
        %v1577 = vld [vmem:[%s3 + $0x4b0] sm:$0xff]
        %v1578 = vld [vmem:[%s3 + $0x4b8] sm:$0xff]
        %v1579 = vld [vmem:[%s3 + $0x4c0] sm:$0xff]
        %v1580 = vld [vmem:[%s3 + $0x4c8] sm:$0xff]
        %v1581 = vld [vmem:[%s3 + $0x4d0] sm:$0xff]
        %v1582 = vld [vmem:[%s3 + $0x4d8] sm:$0xff]
        %v1583 = vld [vmem:[%s3 + $0x4e0] sm:$0xff]
        %v1584 = vld [vmem:[%s3 + $0x4e8] sm:$0xff]
        %v1585 = vld [vmem:[%s3 + $0x4f0] sm:$0xff]
        %v1586 = vld [vmem:[%s3 + $0x4f8] sm:$0xff]
        %v1587 = vld [vmem:[%s3 + $0x500] sm:$0xff]
        %v1588 = vld [vmem:[%s3 + $0x508] sm:$0xff]
        %v1589 = vld [vmem:[%s3 + $0x510] sm:$0xff]
        %v1590 = vld [vmem:[%s3 + $0x518] sm:$0xff]
        %v1591 = vld [vmem:[%s3 + $0x520] sm:$0xff]
        %v1592 = vld [vmem:[%s3 + $0x528] sm:$0xff]
        %v1593 = vld [vmem:[%s3 + $0x530] sm:$0xff]
        %v1594 = vld [vmem:[%s3 + $0x538] sm:$0xff]
        %v1595 = vld [vmem:[%s3 + $0x540] sm:$0xff]
        %v1596 = vld [vmem:[%s3 + $0x548] sm:$0xff]
        %v1597 = vld [vmem:[%s3 + $0x550] sm:$0xff]
        %v1598 = vld [vmem:[%s3 + $0x558] sm:$0xff]
        %v1599 = vld [vmem:[%s3 + $0x560] sm:$0xff]
        %v1600 = vld [vmem:[%s3 + $0x568] sm:$0xff]
        %v1601 = vld [vmem:[%s3 + $0x570] sm:$0xff]
        %v1602 = vld [vmem:[%s3 + $0x578] sm:$0xff]
        %v1603 = vld [vmem:[%s3 + $0x580] sm:$0xff]
        %v1604 = vld [vmem:[%s3 + $0x588] sm:$0xff]
        %v1605 = vld [vmem:[%s3 + $0x590] sm:$0xff]
        %v1606 = vld [vmem:[%s3 + $0x598] sm:$0xff]
        %v1607 = vld [vmem:[%s3 + $0x5a0] sm:$0xff]
        %v1608 = vld [vmem:[%s3 + $0x5a8] sm:$0xff]
        %v1609 = vld [vmem:[%s3 + $0x5b0] sm:$0xff]
        %v1610 = vld [vmem:[%s3 + $0x5b8] sm:$0xff]
        %v1611 = vld [vmem:[%s3 + $0x5c0] sm:$0xff]
        %v1612 = vld [vmem:[%s3 + $0x5c8] sm:$0xff]
        %v1613 = vld [vmem:[%s3 + $0x5d0] sm:$0xff]
        %v1614 = vld [vmem:[%s3 + $0x5d8] sm:$0xff]
        %v1615 = vld [vmem:[%s3 + $0x5e0] sm:$0xff]
        %v1616 = vld [vmem:[%s3 + $0x5e8] sm:$0xff]
        %v1617 = vld [vmem:[%s3 + $0x5f0] sm:$0xff]
        %v1618 = vld [vmem:[%s3 + $0x5f8] sm:$0xff]
        %v1619 = vld [vmem:[%s3 + $0x600] sm:$0xff]
        %v1620 = vld [vmem:[%s3 + $0x608] sm:$0xff]
        %v1621 = vld [vmem:[%s3 + $0x610] sm:$0xff]
        %v1622 = vld [vmem:[%s3 + $0x618] sm:$0xff]
        %v1623 = vld [vmem:[%s3 + $0x620] sm:$0xff]
        %v1624 = vld [vmem:[%s3 + $0x628] sm:$0xff]
        %v1625 = vld [vmem:[%s3 + $0x630] sm:$0xff]
        %v1626 = vld [vmem:[%s3 + $0x638] sm:$0xff]
        %v1627 = vld [vmem:[%s3 + $0x640] sm:$0xff]
        %v1628 = vld [vmem:[%s3 + $0x648] sm:$0xff]
        %v1629 = vld [vmem:[%s3 + $0x650] sm:$0xff]
        %v1630 = vld [vmem:[%s3 + $0x658] sm:$0xff]
        %v1631 = vld [vmem:[%s3 + $0x660] sm:$0xff]
        %v1632 = vld [vmem:[%s3 + $0x668] sm:$0xff]
        %v1633 = vld [vmem:[%s3 + $0x670] sm:$0xff]
        %v1634 = vld [vmem:[%s3 + $0x678] sm:$0xff]
        %v1635 = vld [vmem:[%s3 + $0x680] sm:$0xff]
        %v1636 = vld [vmem:[%s3 + $0x688] sm:$0xff]
        %v1637 = vld [vmem:[%s3 + $0x690] sm:$0xff]
        %v1638 = vld [vmem:[%s3 + $0x698] sm:$0xff]
        %v1639 = vld [vmem:[%s3 + $0x6a0] sm:$0xff]
        %v1640 = vld [vmem:[%s3 + $0x6a8] sm:$0xff]
        %v1641 = vld [vmem:[%s3 + $0x6b0] sm:$0xff]
        %v1642 = vld [vmem:[%s3 + $0x6b8] sm:$0xff]
        %v1643 = vld [vmem:[%s3 + $0x6c0] sm:$0xff]
        %v1644 = vld [vmem:[%s3 + $0x6c8] sm:$0xff]
        %v1645 = vld [vmem:[%s3 + $0x6d0] sm:$0xff]
        %v1646 = vld [vmem:[%s3 + $0x6d8] sm:$0xff]
        %v1647 = vld [vmem:[%s3 + $0x6e0] sm:$0xff]
        %v1648 = vld [vmem:[%s3 + $0x6e8] sm:$0xff]
        %v1649 = vld [vmem:[%s3 + $0x6f0] sm:$0xff]
        %v1650 = vld [vmem:[%s3 + $0x6f8] sm:$0xff]
        %v1651 = vld [vmem:[%s3 + $0x700] sm:$0xff]
        %v1652 = vld [vmem:[%s3 + $0x708] sm:$0xff]
        %v1653 = vld [vmem:[%s3 + $0x710] sm:$0xff]
        %v1654 = vld [vmem:[%s3 + $0x718] sm:$0xff]
        %v1655 = vld [vmem:[%s3 + $0x720] sm:$0xff]
        %v1656 = vld [vmem:[%s3 + $0x728] sm:$0xff]
        %v1657 = vld [vmem:[%s3 + $0x730] sm:$0xff]
        %v1658 = vld [vmem:[%s3 + $0x738] sm:$0xff]
        %v1659 = vld [vmem:[%s3 + $0x740] sm:$0xff]
        %v1660 = vld [vmem:[%s3 + $0x748] sm:$0xff]
        %v1661 = vld [vmem:[%s3 + $0x750] sm:$0xff]
        %v1662 = vld [vmem:[%s3 + $0x758] sm:$0xff]
        %v1663 = vld [vmem:[%s3 + $0x760] sm:$0xff]
        %v1664 = vld [vmem:[%s3 + $0x768] sm:$0xff]
        %v1665 = vld [vmem:[%s3 + $0x770] sm:$0xff]
        %v1666 = vld [vmem:[%s3 + $0x778] sm:$0xff]
        %v1667 = vld [vmem:[%s3 + $0x780] sm:$0xff]
        %v1668 = vld [vmem:[%s3 + $0x788] sm:$0xff]
        %v1669 = vld [vmem:[%s3 + $0x790] sm:$0xff]
        %v1670 = vld [vmem:[%s3 + $0x798] sm:$0xff]
        %v1671 = vld [vmem:[%s3 + $0x7a0] sm:$0xff]
        %v1672 = vld [vmem:[%s3 + $0x7a8] sm:$0xff]
        %v1673 = vld [vmem:[%s3 + $0x7b0] sm:$0xff]
        %v1674 = vld [vmem:[%s3 + $0x7b8] sm:$0xff]
        %v1675 = vld [vmem:[%s3 + $0x7c0] sm:$0xff]
        %v1676 = vld [vmem:[%s3 + $0x7c8] sm:$0xff]
        %v1677 = vld [vmem:[%s3 + $0x7d0] sm:$0xff]
        %v1678 = vld [vmem:[%s3 + $0x7d8] sm:$0xff]
        %v1679 = vld [vmem:[%s3 + $0x7e0] sm:$0xff]
        %v1680 = vld [vmem:[%s3 + $0x7e8] sm:$0xff]
        %v1681 = vld [vmem:[%s3 + $0x7f0] sm:$0xff]
        %v1682 = vld [vmem:[%s3 + $0x7f8] sm:$0xff]
        %v1683 = vld [vmem:[%s4] sm:$0x3]
        %v1940 = vunpack.c.l.b16 %v1427
        %v1941 = vunpack.c.h.b16 %v1427
        %v1942 = vunpack.c.l.b16 %v1428
        %v1943 = vunpack.c.h.b16 %v1428
        %v1944 = vunpack.c.l.b16 %v1429
        %v1945 = vunpack.c.h.b16 %v1429
        %v1946 = vunpack.c.l.b16 %v1430
        %v1947 = vunpack.c.h.b16 %v1430
        %v1948 = vunpack.c.l.b16 %v1431
        %v1949 = vunpack.c.h.b16 %v1431
        %v1950 = vunpack.c.l.b16 %v1432
        %v1951 = vunpack.c.h.b16 %v1432
        %v1952 = vunpack.c.l.b16 %v1433
        %v1953 = vunpack.c.h.b16 %v1433
        %v1954 = vunpack.c.l.b16 %v1434
        %v1955 = vunpack.c.h.b16 %v1434
        %v1956 = vunpack.c.l.b16 %v1435
        %v1957 = vunpack.c.h.b16 %v1435
        %v1958 = vunpack.c.l.b16 %v1436
        %v1959 = vunpack.c.h.b16 %v1436
        %v1960 = vunpack.c.l.b16 %v1437
        %v1961 = vunpack.c.h.b16 %v1437
        %v1962 = vunpack.c.l.b16 %v1438
        %v1963 = vunpack.c.h.b16 %v1438
        %v1964 = vunpack.c.l.b16 %v1439
        %v1965 = vunpack.c.h.b16 %v1439
        %v1966 = vunpack.c.l.b16 %v1440
        %v1967 = vunpack.c.h.b16 %v1440
        %v1968 = vunpack.c.l.b16 %v1441
        %v1969 = vunpack.c.h.b16 %v1441
        %v1970 = vunpack.c.l.b16 %v1442
        %v1971 = vunpack.c.h.b16 %v1442
        %v1972 = vunpack.c.l.b16 %v1443
        %v1973 = vunpack.c.h.b16 %v1443
        %v1974 = vunpack.c.l.b16 %v1444
        %v1975 = vunpack.c.h.b16 %v1444
        %v1976 = vunpack.c.l.b16 %v1445
        %v1977 = vunpack.c.h.b16 %v1445
        %v1978 = vunpack.c.l.b16 %v1446
        %v1979 = vunpack.c.h.b16 %v1446
        %v1980 = vunpack.c.l.b16 %v1447
        %v1981 = vunpack.c.h.b16 %v1447
        %v1982 = vunpack.c.l.b16 %v1448
        %v1983 = vunpack.c.h.b16 %v1448
        %v1984 = vunpack.c.l.b16 %v1449
        %v1985 = vunpack.c.h.b16 %v1449
        %v1986 = vunpack.c.l.b16 %v1450
        %v1987 = vunpack.c.h.b16 %v1450
        %v1988 = vunpack.c.l.b16 %v1451
        %v1989 = vunpack.c.h.b16 %v1451
        %v1990 = vunpack.c.l.b16 %v1452
        %v1991 = vunpack.c.h.b16 %v1452
        %v1992 = vunpack.c.l.b16 %v1453
        %v1993 = vunpack.c.h.b16 %v1453
        %v1994 = vunpack.c.l.b16 %v1454
        %v1995 = vunpack.c.h.b16 %v1454
        %v1996 = vunpack.c.l.b16 %v1455
        %v1997 = vunpack.c.h.b16 %v1455
        %v1998 = vunpack.c.l.b16 %v1456
        %v1999 = vunpack.c.h.b16 %v1456
        %v2000 = vunpack.c.l.b16 %v1457
        %v2001 = vunpack.c.h.b16 %v1457
        %v2002 = vunpack.c.l.b16 %v1458
        %v2003 = vunpack.c.h.b16 %v1458
        %v2004 = vunpack.c.l.b16 %v1459
        %v2005 = vunpack.c.h.b16 %v1459
        %v2006 = vunpack.c.l.b16 %v1460
        %v2007 = vunpack.c.h.b16 %v1460
        %v2008 = vunpack.c.l.b16 %v1461
        %v2009 = vunpack.c.h.b16 %v1461
        %v2010 = vunpack.c.l.b16 %v1462
        %v2011 = vunpack.c.h.b16 %v1462
        %v2012 = vunpack.c.l.b16 %v1463
        %v2013 = vunpack.c.h.b16 %v1463
        %v2014 = vunpack.c.l.b16 %v1464
        %v2015 = vunpack.c.h.b16 %v1464
        %v2016 = vunpack.c.l.b16 %v1465
        %v2017 = vunpack.c.h.b16 %v1465
        %v2018 = vunpack.c.l.b16 %v1466
        %v2019 = vunpack.c.h.b16 %v1466
        %v2020 = vunpack.c.l.b16 %v1467
        %v2021 = vunpack.c.h.b16 %v1467
        %v2022 = vunpack.c.l.b16 %v1468
        %v2023 = vunpack.c.h.b16 %v1468
        %v2024 = vunpack.c.l.b16 %v1469
        %v2025 = vunpack.c.h.b16 %v1469
        %v2026 = vunpack.c.l.b16 %v1470
        %v2027 = vunpack.c.h.b16 %v1470
        %v2028 = vunpack.c.l.b16 %v1471
        %v2029 = vunpack.c.h.b16 %v1471
        %v2030 = vunpack.c.l.b16 %v1472
        %v2031 = vunpack.c.h.b16 %v1472
        %v2032 = vunpack.c.l.b16 %v1473
        %v2033 = vunpack.c.h.b16 %v1473
        %v2034 = vunpack.c.l.b16 %v1474
        %v2035 = vunpack.c.h.b16 %v1474
        %v2036 = vunpack.c.l.b16 %v1475
        %v2037 = vunpack.c.h.b16 %v1475
        %v2038 = vunpack.c.l.b16 %v1476
        %v2039 = vunpack.c.h.b16 %v1476
        %v2040 = vunpack.c.l.b16 %v1477
        %v2041 = vunpack.c.h.b16 %v1477
        %v2042 = vunpack.c.l.b16 %v1478
        %v2043 = vunpack.c.h.b16 %v1478
        %v2044 = vunpack.c.l.b16 %v1479
        %v2045 = vunpack.c.h.b16 %v1479
        %v2046 = vunpack.c.l.b16 %v1480
        %v2047 = vunpack.c.h.b16 %v1480
        %v2048 = vunpack.c.l.b16 %v1481
        %v2049 = vunpack.c.h.b16 %v1481
        %v2050 = vunpack.c.l.b16 %v1482
        %v2051 = vunpack.c.h.b16 %v1482
        %v2052 = vunpack.c.l.b16 %v1483
        %v2053 = vunpack.c.h.b16 %v1483
        %v2054 = vunpack.c.l.b16 %v1484
        %v2055 = vunpack.c.h.b16 %v1484
        %v2056 = vunpack.c.l.b16 %v1485
        %v2057 = vunpack.c.h.b16 %v1485
        %v2058 = vunpack.c.l.b16 %v1486
        %v2059 = vunpack.c.h.b16 %v1486
        %v2060 = vunpack.c.l.b16 %v1487
        %v2061 = vunpack.c.h.b16 %v1487
        %v2062 = vunpack.c.l.b16 %v1488
        %v2063 = vunpack.c.h.b16 %v1488
        %v2064 = vunpack.c.l.b16 %v1489
        %v2065 = vunpack.c.h.b16 %v1489
        %v2066 = vunpack.c.l.b16 %v1490
        %v2067 = vunpack.c.h.b16 %v1490
        %v2068 = vunpack.c.l.b16 %v1491
        %v2069 = vunpack.c.h.b16 %v1491
        %v2070 = vunpack.c.l.b16 %v1492
        %v2071 = vunpack.c.h.b16 %v1492
        %v2072 = vunpack.c.l.b16 %v1493
        %v2073 = vunpack.c.h.b16 %v1493
        %v2074 = vunpack.c.l.b16 %v1494
        %v2075 = vunpack.c.h.b16 %v1494
        %v2076 = vunpack.c.l.b16 %v1495
        %v2077 = vunpack.c.h.b16 %v1495
        %v2078 = vunpack.c.l.b16 %v1496
        %v2079 = vunpack.c.h.b16 %v1496
        %v2080 = vunpack.c.l.b16 %v1497
        %v2081 = vunpack.c.h.b16 %v1497
        %v2082 = vunpack.c.l.b16 %v1498
        %v2083 = vunpack.c.h.b16 %v1498
        %v2084 = vunpack.c.l.b16 %v1499
        %v2085 = vunpack.c.h.b16 %v1499
        %v2086 = vunpack.c.l.b16 %v1500
        %v2087 = vunpack.c.h.b16 %v1500
        %v2088 = vunpack.c.l.b16 %v1501
        %v2089 = vunpack.c.h.b16 %v1501
        %v2090 = vunpack.c.l.b16 %v1502
        %v2091 = vunpack.c.h.b16 %v1502
        %v2092 = vunpack.c.l.b16 %v1503
        %v2093 = vunpack.c.h.b16 %v1503
        %v2094 = vunpack.c.l.b16 %v1504
        %v2095 = vunpack.c.h.b16 %v1504
        %v2096 = vunpack.c.l.b16 %v1505
        %v2097 = vunpack.c.h.b16 %v1505
        %v2098 = vunpack.c.l.b16 %v1506
        %v2099 = vunpack.c.h.b16 %v1506
        %v2100 = vunpack.c.l.b16 %v1507
        %v2101 = vunpack.c.h.b16 %v1507
        %v2102 = vunpack.c.l.b16 %v1508
        %v2103 = vunpack.c.h.b16 %v1508
        %v2104 = vunpack.c.l.b16 %v1509
        %v2105 = vunpack.c.h.b16 %v1509
        %v2106 = vunpack.c.l.b16 %v1510
        %v2107 = vunpack.c.h.b16 %v1510
        %v2108 = vunpack.c.l.b16 %v1511
        %v2109 = vunpack.c.h.b16 %v1511
        %v2110 = vunpack.c.l.b16 %v1512
        %v2111 = vunpack.c.h.b16 %v1512
        %v2112 = vunpack.c.l.b16 %v1513
        %v2113 = vunpack.c.h.b16 %v1513
        %v2114 = vunpack.c.l.b16 %v1514
        %v2115 = vunpack.c.h.b16 %v1514
        %v2116 = vunpack.c.l.b16 %v1515
        %v2117 = vunpack.c.h.b16 %v1515
        %v2118 = vunpack.c.l.b16 %v1516
        %v2119 = vunpack.c.h.b16 %v1516
        %v2120 = vunpack.c.l.b16 %v1517
        %v2121 = vunpack.c.h.b16 %v1517
        %v2122 = vunpack.c.l.b16 %v1518
        %v2123 = vunpack.c.h.b16 %v1518
        %v2124 = vunpack.c.l.b16 %v1519
        %v2125 = vunpack.c.h.b16 %v1519
        %v2126 = vunpack.c.l.b16 %v1520
        %v2127 = vunpack.c.h.b16 %v1520
        %v2128 = vunpack.c.l.b16 %v1521
        %v2129 = vunpack.c.h.b16 %v1521
        %v2130 = vunpack.c.l.b16 %v1522
        %v2131 = vunpack.c.h.b16 %v1522
        %v2132 = vunpack.c.l.b16 %v1523
        %v2133 = vunpack.c.h.b16 %v1523
        %v2134 = vunpack.c.l.b16 %v1524
        %v2135 = vunpack.c.h.b16 %v1524
        %v2136 = vunpack.c.l.b16 %v1525
        %v2137 = vunpack.c.h.b16 %v1525
        %v2138 = vunpack.c.l.b16 %v1526
        %v2139 = vunpack.c.h.b16 %v1526
        %v2140 = vunpack.c.l.b16 %v1527
        %v2141 = vunpack.c.h.b16 %v1527
        %v2142 = vunpack.c.l.b16 %v1528
        %v2143 = vunpack.c.h.b16 %v1528
        %v2144 = vunpack.c.l.b16 %v1529
        %v2145 = vunpack.c.h.b16 %v1529
        %v2146 = vunpack.c.l.b16 %v1530
        %v2147 = vunpack.c.h.b16 %v1530
        %v2148 = vunpack.c.l.b16 %v1531
        %v2149 = vunpack.c.h.b16 %v1531
        %v2150 = vunpack.c.l.b16 %v1532
        %v2151 = vunpack.c.h.b16 %v1532
        %v2152 = vunpack.c.l.b16 %v1533
        %v2153 = vunpack.c.h.b16 %v1533
        %v2154 = vunpack.c.l.b16 %v1534
        %v2155 = vunpack.c.h.b16 %v1534
        %v2156 = vunpack.c.l.b16 %v1535
        %v2157 = vunpack.c.h.b16 %v1535
        %v2158 = vunpack.c.l.b16 %v1536
        %v2159 = vunpack.c.h.b16 %v1536
        %v2160 = vunpack.c.l.b16 %v1537
        %v2161 = vunpack.c.h.b16 %v1537
        %v2162 = vunpack.c.l.b16 %v1538
        %v2163 = vunpack.c.h.b16 %v1538
        %v2164 = vunpack.c.l.b16 %v1539
        %v2165 = vunpack.c.h.b16 %v1539
        %v2166 = vunpack.c.l.b16 %v1540
        %v2167 = vunpack.c.h.b16 %v1540
        %v2168 = vunpack.c.l.b16 %v1541
        %v2169 = vunpack.c.h.b16 %v1541
        %v2170 = vunpack.c.l.b16 %v1542
        %v2171 = vunpack.c.h.b16 %v1542
        %v2172 = vunpack.c.l.b16 %v1543
        %v2173 = vunpack.c.h.b16 %v1543
        %v2174 = vunpack.c.l.b16 %v1544
        %v2175 = vunpack.c.h.b16 %v1544
        %v2176 = vunpack.c.l.b16 %v1545
        %v2177 = vunpack.c.h.b16 %v1545
        %v2178 = vunpack.c.l.b16 %v1546
        %v2179 = vunpack.c.h.b16 %v1546
        %v2180 = vunpack.c.l.b16 %v1547
        %v2181 = vunpack.c.h.b16 %v1547
        %v2182 = vunpack.c.l.b16 %v1548
        %v2183 = vunpack.c.h.b16 %v1548
        %v2184 = vunpack.c.l.b16 %v1549
        %v2185 = vunpack.c.h.b16 %v1549
        %v2186 = vunpack.c.l.b16 %v1550
        %v2187 = vunpack.c.h.b16 %v1550
        %v2188 = vunpack.c.l.b16 %v1551
        %v2189 = vunpack.c.h.b16 %v1551
        %v2190 = vunpack.c.l.b16 %v1552
        %v2191 = vunpack.c.h.b16 %v1552
        %v2192 = vunpack.c.l.b16 %v1553
        %v2193 = vunpack.c.h.b16 %v1553
        %v2194 = vunpack.c.l.b16 %v1554
        %v2195 = vunpack.c.h.b16 %v1554
        %v2196 = vunpack.c.l.b16 %v1555
        %v2197 = vunpack.c.h.b16 %v1555
        %v2198 = vunpack.c.l.b16 %v1556
        %v2199 = vunpack.c.h.b16 %v1556
        %v2200 = vunpack.c.l.b16 %v1557
        %v2201 = vunpack.c.h.b16 %v1557
        %v2202 = vunpack.c.l.b16 %v1558
        %v2203 = vunpack.c.h.b16 %v1558
        %v2204 = vunpack.c.l.b16 %v1559
        %v2205 = vunpack.c.h.b16 %v1559
        %v2206 = vunpack.c.l.b16 %v1560
        %v2207 = vunpack.c.h.b16 %v1560
        %v2208 = vunpack.c.l.b16 %v1561
        %v2209 = vunpack.c.h.b16 %v1561
        %v2210 = vunpack.c.l.b16 %v1562
        %v2211 = vunpack.c.h.b16 %v1562
        %v2212 = vunpack.c.l.b16 %v1563
        %v2213 = vunpack.c.h.b16 %v1563
        %v2214 = vunpack.c.l.b16 %v1564
        %v2215 = vunpack.c.h.b16 %v1564
        %v2216 = vunpack.c.l.b16 %v1565
        %v2217 = vunpack.c.h.b16 %v1565
        %v2218 = vunpack.c.l.b16 %v1566
        %v2219 = vunpack.c.h.b16 %v1566
        %v2220 = vunpack.c.l.b16 %v1567
        %v2221 = vunpack.c.h.b16 %v1567
        %v2222 = vunpack.c.l.b16 %v1568
        %v2223 = vunpack.c.h.b16 %v1568
        %v2224 = vunpack.c.l.b16 %v1569
        %v2225 = vunpack.c.h.b16 %v1569
        %v2226 = vunpack.c.l.b16 %v1570
        %v2227 = vunpack.c.h.b16 %v1570
        %v2228 = vunpack.c.l.b16 %v1571
        %v2229 = vunpack.c.h.b16 %v1571
        %v2230 = vunpack.c.l.b16 %v1572
        %v2231 = vunpack.c.h.b16 %v1572
        %v2232 = vunpack.c.l.b16 %v1573
        %v2233 = vunpack.c.h.b16 %v1573
        %v2234 = vunpack.c.l.b16 %v1574
        %v2235 = vunpack.c.h.b16 %v1574
        %v2236 = vunpack.c.l.b16 %v1575
        %v2237 = vunpack.c.h.b16 %v1575
        %v2238 = vunpack.c.l.b16 %v1576
        %v2239 = vunpack.c.h.b16 %v1576
        %v2240 = vunpack.c.l.b16 %v1577
        %v2241 = vunpack.c.h.b16 %v1577
        %v2242 = vunpack.c.l.b16 %v1578
        %v2243 = vunpack.c.h.b16 %v1578
        %v2244 = vunpack.c.l.b16 %v1579
        %v2245 = vunpack.c.h.b16 %v1579
        %v2246 = vunpack.c.l.b16 %v1580
        %v2247 = vunpack.c.h.b16 %v1580
        %v2248 = vunpack.c.l.b16 %v1581
        %v2249 = vunpack.c.h.b16 %v1581
        %v2250 = vunpack.c.l.b16 %v1582
        %v2251 = vunpack.c.h.b16 %v1582
        %v2252 = vunpack.c.l.b16 %v1583
        %v2253 = vunpack.c.h.b16 %v1583
        %v2254 = vunpack.c.l.b16 %v1584
        %v2255 = vunpack.c.h.b16 %v1584
        %v2256 = vunpack.c.l.b16 %v1585
        %v2257 = vunpack.c.h.b16 %v1585
        %v2258 = vunpack.c.l.b16 %v1586
        %v2259 = vunpack.c.h.b16 %v1586
        %v2260 = vunpack.c.l.b16 %v1587
        %v2261 = vunpack.c.h.b16 %v1587
        %v2262 = vunpack.c.l.b16 %v1588
        %v2263 = vunpack.c.h.b16 %v1588
        %v2264 = vunpack.c.l.b16 %v1589
        %v2265 = vunpack.c.h.b16 %v1589
        %v2266 = vunpack.c.l.b16 %v1590
        %v2267 = vunpack.c.h.b16 %v1590
        %v2268 = vunpack.c.l.b16 %v1591
        %v2269 = vunpack.c.h.b16 %v1591
        %v2270 = vunpack.c.l.b16 %v1592
        %v2271 = vunpack.c.h.b16 %v1592
        %v2272 = vunpack.c.l.b16 %v1593
        %v2273 = vunpack.c.h.b16 %v1593
        %v2274 = vunpack.c.l.b16 %v1594
        %v2275 = vunpack.c.h.b16 %v1594
        %v2276 = vunpack.c.l.b16 %v1595
        %v2277 = vunpack.c.h.b16 %v1595
        %v2278 = vunpack.c.l.b16 %v1596
        %v2279 = vunpack.c.h.b16 %v1596
        %v2280 = vunpack.c.l.b16 %v1597
        %v2281 = vunpack.c.h.b16 %v1597
        %v2282 = vunpack.c.l.b16 %v1598
        %v2283 = vunpack.c.h.b16 %v1598
        %v2284 = vunpack.c.l.b16 %v1599
        %v2285 = vunpack.c.h.b16 %v1599
        %v2286 = vunpack.c.l.b16 %v1600
        %v2287 = vunpack.c.h.b16 %v1600
        %v2288 = vunpack.c.l.b16 %v1601
        %v2289 = vunpack.c.h.b16 %v1601
        %v2290 = vunpack.c.l.b16 %v1602
        %v2291 = vunpack.c.h.b16 %v1602
        %v2292 = vunpack.c.l.b16 %v1603
        %v2293 = vunpack.c.h.b16 %v1603
        %v2294 = vunpack.c.l.b16 %v1604
        %v2295 = vunpack.c.h.b16 %v1604
        %v2296 = vunpack.c.l.b16 %v1605
        %v2297 = vunpack.c.h.b16 %v1605
        %v2298 = vunpack.c.l.b16 %v1606
        %v2299 = vunpack.c.h.b16 %v1606
        %v2300 = vunpack.c.l.b16 %v1607
        %v2301 = vunpack.c.h.b16 %v1607
        %v2302 = vunpack.c.l.b16 %v1608
        %v2303 = vunpack.c.h.b16 %v1608
        %v2304 = vunpack.c.l.b16 %v1609
        %v2305 = vunpack.c.h.b16 %v1609
        %v2306 = vunpack.c.l.b16 %v1610
        %v2307 = vunpack.c.h.b16 %v1610
        %v2308 = vunpack.c.l.b16 %v1611
        %v2309 = vunpack.c.h.b16 %v1611
        %v2310 = vunpack.c.l.b16 %v1612
        %v2311 = vunpack.c.h.b16 %v1612
        %v2312 = vunpack.c.l.b16 %v1613
        %v2313 = vunpack.c.h.b16 %v1613
        %v2314 = vunpack.c.l.b16 %v1614
        %v2315 = vunpack.c.h.b16 %v1614
        %v2316 = vunpack.c.l.b16 %v1615
        %v2317 = vunpack.c.h.b16 %v1615
        %v2318 = vunpack.c.l.b16 %v1616
        %v2319 = vunpack.c.h.b16 %v1616
        %v2320 = vunpack.c.l.b16 %v1617
        %v2321 = vunpack.c.h.b16 %v1617
        %v2322 = vunpack.c.l.b16 %v1618
        %v2323 = vunpack.c.h.b16 %v1618
        %v2324 = vunpack.c.l.b16 %v1619
        %v2325 = vunpack.c.h.b16 %v1619
        %v2326 = vunpack.c.l.b16 %v1620
        %v2327 = vunpack.c.h.b16 %v1620
        %v2328 = vunpack.c.l.b16 %v1621
        %v2329 = vunpack.c.h.b16 %v1621
        %v2330 = vunpack.c.l.b16 %v1622
        %v2331 = vunpack.c.h.b16 %v1622
        %v2332 = vunpack.c.l.b16 %v1623
        %v2333 = vunpack.c.h.b16 %v1623
        %v2334 = vunpack.c.l.b16 %v1624
        %v2335 = vunpack.c.h.b16 %v1624
        %v2336 = vunpack.c.l.b16 %v1625
        %v2337 = vunpack.c.h.b16 %v1625
        %v2338 = vunpack.c.l.b16 %v1626
        %v2339 = vunpack.c.h.b16 %v1626
        %v2340 = vunpack.c.l.b16 %v1627
        %v2341 = vunpack.c.h.b16 %v1627
        %v2342 = vunpack.c.l.b16 %v1628
        %v2343 = vunpack.c.h.b16 %v1628
        %v2344 = vunpack.c.l.b16 %v1629
        %v2345 = vunpack.c.h.b16 %v1629
        %v2346 = vunpack.c.l.b16 %v1630
        %v2347 = vunpack.c.h.b16 %v1630
        %v2348 = vunpack.c.l.b16 %v1631
        %v2349 = vunpack.c.h.b16 %v1631
        %v2350 = vunpack.c.l.b16 %v1632
        %v2351 = vunpack.c.h.b16 %v1632
        %v2352 = vunpack.c.l.b16 %v1633
        %v2353 = vunpack.c.h.b16 %v1633
        %v2354 = vunpack.c.l.b16 %v1634
        %v2355 = vunpack.c.h.b16 %v1634
        %v2356 = vunpack.c.l.b16 %v1635
        %v2357 = vunpack.c.h.b16 %v1635
        %v2358 = vunpack.c.l.b16 %v1636
        %v2359 = vunpack.c.h.b16 %v1636
        %v2360 = vunpack.c.l.b16 %v1637
        %v2361 = vunpack.c.h.b16 %v1637
        %v2362 = vunpack.c.l.b16 %v1638
        %v2363 = vunpack.c.h.b16 %v1638
        %v2364 = vunpack.c.l.b16 %v1639
        %v2365 = vunpack.c.h.b16 %v1639
        %v2366 = vunpack.c.l.b16 %v1640
        %v2367 = vunpack.c.h.b16 %v1640
        %v2368 = vunpack.c.l.b16 %v1641
        %v2369 = vunpack.c.h.b16 %v1641
        %v2370 = vunpack.c.l.b16 %v1642
        %v2371 = vunpack.c.h.b16 %v1642
        %v2372 = vunpack.c.l.b16 %v1643
        %v2373 = vunpack.c.h.b16 %v1643
        %v2374 = vunpack.c.l.b16 %v1644
        %v2375 = vunpack.c.h.b16 %v1644
        %v2376 = vunpack.c.l.b16 %v1645
        %v2377 = vunpack.c.h.b16 %v1645
        %v2378 = vunpack.c.l.b16 %v1646
        %v2379 = vunpack.c.h.b16 %v1646
        %v2380 = vunpack.c.l.b16 %v1647
        %v2381 = vunpack.c.h.b16 %v1647
        %v2382 = vunpack.c.l.b16 %v1648
        %v2383 = vunpack.c.h.b16 %v1648
        %v2384 = vunpack.c.l.b16 %v1649
        %v2385 = vunpack.c.h.b16 %v1649
        %v2386 = vunpack.c.l.b16 %v1650
        %v2387 = vunpack.c.h.b16 %v1650
        %v2388 = vunpack.c.l.b16 %v1651
        %v2389 = vunpack.c.h.b16 %v1651
        %v2390 = vunpack.c.l.b16 %v1652
        %v2391 = vunpack.c.h.b16 %v1652
        %v2392 = vunpack.c.l.b16 %v1653
        %v2393 = vunpack.c.h.b16 %v1653
        %v2394 = vunpack.c.l.b16 %v1654
        %v2395 = vunpack.c.h.b16 %v1654
        %v2396 = vunpack.c.l.b16 %v1655
        %v2397 = vunpack.c.h.b16 %v1655
        %v2398 = vunpack.c.l.b16 %v1656
        %v2399 = vunpack.c.h.b16 %v1656
        %v2400 = vunpack.c.l.b16 %v1657
        %v2401 = vunpack.c.h.b16 %v1657
        %v2402 = vunpack.c.l.b16 %v1658
        %v2403 = vunpack.c.h.b16 %v1658
        %v2404 = vunpack.c.l.b16 %v1659
        %v2405 = vunpack.c.h.b16 %v1659
        %v2406 = vunpack.c.l.b16 %v1660
        %v2407 = vunpack.c.h.b16 %v1660
        %v2408 = vunpack.c.l.b16 %v1661
        %v2409 = vunpack.c.h.b16 %v1661
        %v2410 = vunpack.c.l.b16 %v1662
        %v2411 = vunpack.c.h.b16 %v1662
        %v2412 = vunpack.c.l.b16 %v1663
        %v2413 = vunpack.c.h.b16 %v1663
        %v2414 = vunpack.c.l.b16 %v1664
        %v2415 = vunpack.c.h.b16 %v1664
        %v2416 = vunpack.c.l.b16 %v1665
        %v2417 = vunpack.c.h.b16 %v1665
        %v2418 = vunpack.c.l.b16 %v1666
        %v2419 = vunpack.c.h.b16 %v1666
        %v2420 = vunpack.c.l.b16 %v1667
        %v2421 = vunpack.c.h.b16 %v1667
        %v2422 = vunpack.c.l.b16 %v1668
        %v2423 = vunpack.c.h.b16 %v1668
        %v2424 = vunpack.c.l.b16 %v1669
        %v2425 = vunpack.c.h.b16 %v1669
        %v2426 = vunpack.c.l.b16 %v1670
        %v2427 = vunpack.c.h.b16 %v1670
        %v2428 = vunpack.c.l.b16 %v1671
        %v2429 = vunpack.c.h.b16 %v1671
        %v2430 = vunpack.c.l.b16 %v1672
        %v2431 = vunpack.c.h.b16 %v1672
        %v2432 = vunpack.c.l.b16 %v1673
        %v2433 = vunpack.c.h.b16 %v1673
        %v2434 = vunpack.c.l.b16 %v1674
        %v2435 = vunpack.c.h.b16 %v1674
        %v2436 = vunpack.c.l.b16 %v1675
        %v2437 = vunpack.c.h.b16 %v1675
        %v2438 = vunpack.c.l.b16 %v1676
        %v2439 = vunpack.c.h.b16 %v1676
        %v2440 = vunpack.c.l.b16 %v1677
        %v2441 = vunpack.c.h.b16 %v1677
        %v2442 = vunpack.c.l.b16 %v1678
        %v2443 = vunpack.c.h.b16 %v1678
        %v2444 = vunpack.c.l.b16 %v1679
        %v2445 = vunpack.c.h.b16 %v1679
        %v2446 = vunpack.c.l.b16 %v1680
        %v2447 = vunpack.c.h.b16 %v1680
        %v2448 = vunpack.c.l.b16 %v1681
        %v2449 = vunpack.c.h.b16 %v1681
        %v2450 = vunpack.c.l.b16 %v1682
        %v2451 = vunpack.c.h.b16 %v1682
        %v2452 = vpack.c.b16 %v1942, %v1940
        %v2453 = vpack.c.b16 %v1943, %v1941
        %v2454 = vpack.c.b16 %v1946, %v1944
        %v2455 = vpack.c.b16 %v1947, %v1945
        %v2456 = vpack.c.b16 %v1950, %v1948
        %v2457 = vpack.c.b16 %v1951, %v1949
        %v2458 = vpack.c.b16 %v1954, %v1952
        %v2459 = vpack.c.b16 %v1955, %v1953
        %v2460 = vpack.c.b16 %v1958, %v1956
        %v2461 = vpack.c.b16 %v1959, %v1957
        %v2462 = vpack.c.b16 %v1962, %v1960
        %v2463 = vpack.c.b16 %v1963, %v1961
        %v2464 = vpack.c.b16 %v1966, %v1964
        %v2465 = vpack.c.b16 %v1967, %v1965
        %v2466 = vpack.c.b16 %v1970, %v1968
        %v2467 = vpack.c.b16 %v1971, %v1969
        %v2468 = vpack.c.b16 %v1974, %v1972
        %v2469 = vpack.c.b16 %v1975, %v1973
        %v2470 = vpack.c.b16 %v1978, %v1976
        %v2471 = vpack.c.b16 %v1979, %v1977
        %v2472 = vpack.c.b16 %v1982, %v1980
        %v2473 = vpack.c.b16 %v1983, %v1981
        %v2474 = vpack.c.b16 %v1986, %v1984
        %v2475 = vpack.c.b16 %v1987, %v1985
        %v2476 = vpack.c.b16 %v1990, %v1988
        %v2477 = vpack.c.b16 %v1991, %v1989
        %v2478 = vpack.c.b16 %v1994, %v1992
        %v2479 = vpack.c.b16 %v1995, %v1993
        %v2480 = vpack.c.b16 %v1998, %v1996
        %v2481 = vpack.c.b16 %v1999, %v1997
        %v2482 = vpack.c.b16 %v2002, %v2000
        %v2483 = vpack.c.b16 %v2003, %v2001
        %v2484 = vpack.c.b16 %v2006, %v2004
        %v2485 = vpack.c.b16 %v2007, %v2005
        %v2486 = vpack.c.b16 %v2010, %v2008
        %v2487 = vpack.c.b16 %v2011, %v2009
        %v2488 = vpack.c.b16 %v2014, %v2012
        %v2489 = vpack.c.b16 %v2015, %v2013
        %v2490 = vpack.c.b16 %v2018, %v2016
        %v2491 = vpack.c.b16 %v2019, %v2017
        %v2492 = vpack.c.b16 %v2022, %v2020
        %v2493 = vpack.c.b16 %v2023, %v2021
        %v2494 = vpack.c.b16 %v2026, %v2024
        %v2495 = vpack.c.b16 %v2027, %v2025
        %v2496 = vpack.c.b16 %v2030, %v2028
        %v2497 = vpack.c.b16 %v2031, %v2029
        %v2498 = vpack.c.b16 %v2034, %v2032
        %v2499 = vpack.c.b16 %v2035, %v2033
        %v2500 = vpack.c.b16 %v2038, %v2036
        %v2501 = vpack.c.b16 %v2039, %v2037
        %v2502 = vpack.c.b16 %v2042, %v2040
        %v2503 = vpack.c.b16 %v2043, %v2041
        %v2504 = vpack.c.b16 %v2046, %v2044
        %v2505 = vpack.c.b16 %v2047, %v2045
        %v2506 = vpack.c.b16 %v2050, %v2048
        %v2507 = vpack.c.b16 %v2051, %v2049
        %v2508 = vpack.c.b16 %v2054, %v2052
        %v2509 = vpack.c.b16 %v2055, %v2053
        %v2510 = vpack.c.b16 %v2058, %v2056
        %v2511 = vpack.c.b16 %v2059, %v2057
        %v2512 = vpack.c.b16 %v2062, %v2060
        %v2513 = vpack.c.b16 %v2063, %v2061
        %v2514 = vpack.c.b16 %v2066, %v2064
        %v2515 = vpack.c.b16 %v2067, %v2065
        %v2516 = vpack.c.b16 %v2070, %v2068
        %v2517 = vpack.c.b16 %v2071, %v2069
        %v2518 = vpack.c.b16 %v2074, %v2072
        %v2519 = vpack.c.b16 %v2075, %v2073
        %v2520 = vpack.c.b16 %v2078, %v2076
        %v2521 = vpack.c.b16 %v2079, %v2077
        %v2522 = vpack.c.b16 %v2082, %v2080
        %v2523 = vpack.c.b16 %v2083, %v2081
        %v2524 = vpack.c.b16 %v2086, %v2084
        %v2525 = vpack.c.b16 %v2087, %v2085
        %v2526 = vpack.c.b16 %v2090, %v2088
        %v2527 = vpack.c.b16 %v2091, %v2089
        %v2528 = vpack.c.b16 %v2094, %v2092
        %v2529 = vpack.c.b16 %v2095, %v2093
        %v2530 = vpack.c.b16 %v2098, %v2096
        %v2531 = vpack.c.b16 %v2099, %v2097
        %v2532 = vpack.c.b16 %v2102, %v2100
        %v2533 = vpack.c.b16 %v2103, %v2101
        %v2534 = vpack.c.b16 %v2106, %v2104
        %v2535 = vpack.c.b16 %v2107, %v2105
        %v2536 = vpack.c.b16 %v2110, %v2108
        %v2537 = vpack.c.b16 %v2111, %v2109
        %v2538 = vpack.c.b16 %v2114, %v2112
        %v2539 = vpack.c.b16 %v2115, %v2113
        %v2540 = vpack.c.b16 %v2118, %v2116
        %v2541 = vpack.c.b16 %v2119, %v2117
        %v2542 = vpack.c.b16 %v2122, %v2120
        %v2543 = vpack.c.b16 %v2123, %v2121
        %v2544 = vpack.c.b16 %v2126, %v2124
        %v2545 = vpack.c.b16 %v2127, %v2125
        %v2546 = vpack.c.b16 %v2130, %v2128
        %v2547 = vpack.c.b16 %v2131, %v2129
        %v2548 = vpack.c.b16 %v2134, %v2132
        %v2549 = vpack.c.b16 %v2135, %v2133
        %v2550 = vpack.c.b16 %v2138, %v2136
        %v2551 = vpack.c.b16 %v2139, %v2137
        %v2552 = vpack.c.b16 %v2142, %v2140
        %v2553 = vpack.c.b16 %v2143, %v2141
        %v2554 = vpack.c.b16 %v2146, %v2144
        %v2555 = vpack.c.b16 %v2147, %v2145
        %v2556 = vpack.c.b16 %v2150, %v2148
        %v2557 = vpack.c.b16 %v2151, %v2149
        %v2558 = vpack.c.b16 %v2154, %v2152
        %v2559 = vpack.c.b16 %v2155, %v2153
        %v2560 = vpack.c.b16 %v2158, %v2156
        %v2561 = vpack.c.b16 %v2159, %v2157
        %v2562 = vpack.c.b16 %v2162, %v2160
        %v2563 = vpack.c.b16 %v2163, %v2161
        %v2564 = vpack.c.b16 %v2166, %v2164
        %v2565 = vpack.c.b16 %v2167, %v2165
        %v2566 = vpack.c.b16 %v2170, %v2168
        %v2567 = vpack.c.b16 %v2171, %v2169
        %v2568 = vpack.c.b16 %v2174, %v2172
        %v2569 = vpack.c.b16 %v2175, %v2173
        %v2570 = vpack.c.b16 %v2178, %v2176
        %v2571 = vpack.c.b16 %v2179, %v2177
        %v2572 = vpack.c.b16 %v2182, %v2180
        %v2573 = vpack.c.b16 %v2183, %v2181
        %v2574 = vpack.c.b16 %v2186, %v2184
        %v2575 = vpack.c.b16 %v2187, %v2185
        %v2576 = vpack.c.b16 %v2190, %v2188
        %v2577 = vpack.c.b16 %v2191, %v2189
        %v2578 = vpack.c.b16 %v2194, %v2192
        %v2579 = vpack.c.b16 %v2195, %v2193
        %v2580 = vpack.c.b16 %v2198, %v2196
        %v2581 = vpack.c.b16 %v2199, %v2197
        %v2582 = vpack.c.b16 %v2202, %v2200
        %v2583 = vpack.c.b16 %v2203, %v2201
        %v2584 = vpack.c.b16 %v2206, %v2204
        %v2585 = vpack.c.b16 %v2207, %v2205
        %v2586 = vpack.c.b16 %v2210, %v2208
        %v2587 = vpack.c.b16 %v2211, %v2209
        %v2588 = vpack.c.b16 %v2214, %v2212
        %v2589 = vpack.c.b16 %v2215, %v2213
        %v2590 = vpack.c.b16 %v2218, %v2216
        %v2591 = vpack.c.b16 %v2219, %v2217
        %v2592 = vpack.c.b16 %v2222, %v2220
        %v2593 = vpack.c.b16 %v2223, %v2221
        %v2594 = vpack.c.b16 %v2226, %v2224
        %v2595 = vpack.c.b16 %v2227, %v2225
        %v2596 = vpack.c.b16 %v2230, %v2228
        %v2597 = vpack.c.b16 %v2231, %v2229
        %v2598 = vpack.c.b16 %v2234, %v2232
        %v2599 = vpack.c.b16 %v2235, %v2233
        %v2600 = vpack.c.b16 %v2238, %v2236
        %v2601 = vpack.c.b16 %v2239, %v2237
        %v2602 = vpack.c.b16 %v2242, %v2240
        %v2603 = vpack.c.b16 %v2243, %v2241
        %v2604 = vpack.c.b16 %v2246, %v2244
        %v2605 = vpack.c.b16 %v2247, %v2245
        %v2606 = vpack.c.b16 %v2250, %v2248
        %v2607 = vpack.c.b16 %v2251, %v2249
        %v2608 = vpack.c.b16 %v2254, %v2252
        %v2609 = vpack.c.b16 %v2255, %v2253
        %v2610 = vpack.c.b16 %v2258, %v2256
        %v2611 = vpack.c.b16 %v2259, %v2257
        %v2612 = vpack.c.b16 %v2262, %v2260
        %v2613 = vpack.c.b16 %v2263, %v2261
        %v2614 = vpack.c.b16 %v2266, %v2264
        %v2615 = vpack.c.b16 %v2267, %v2265
        %v2616 = vpack.c.b16 %v2270, %v2268
        %v2617 = vpack.c.b16 %v2271, %v2269
        %v2618 = vpack.c.b16 %v2274, %v2272
        %v2619 = vpack.c.b16 %v2275, %v2273
        %v2620 = vpack.c.b16 %v2278, %v2276
        %v2621 = vpack.c.b16 %v2279, %v2277
        %v2622 = vpack.c.b16 %v2282, %v2280
        %v2623 = vpack.c.b16 %v2283, %v2281
        %v2624 = vpack.c.b16 %v2286, %v2284
        %v2625 = vpack.c.b16 %v2287, %v2285
        %v2626 = vpack.c.b16 %v2290, %v2288
        %v2627 = vpack.c.b16 %v2291, %v2289
        %v2628 = vpack.c.b16 %v2294, %v2292
        %v2629 = vpack.c.b16 %v2295, %v2293
        %v2630 = vpack.c.b16 %v2298, %v2296
        %v2631 = vpack.c.b16 %v2299, %v2297
        %v2632 = vpack.c.b16 %v2302, %v2300
        %v2633 = vpack.c.b16 %v2303, %v2301
        %v2634 = vpack.c.b16 %v2306, %v2304
        %v2635 = vpack.c.b16 %v2307, %v2305
        %v2636 = vpack.c.b16 %v2310, %v2308
        %v2637 = vpack.c.b16 %v2311, %v2309
        %v2638 = vpack.c.b16 %v2314, %v2312
        %v2639 = vpack.c.b16 %v2315, %v2313
        %v2640 = vpack.c.b16 %v2318, %v2316
        %v2641 = vpack.c.b16 %v2319, %v2317
        %v2642 = vpack.c.b16 %v2322, %v2320
        %v2643 = vpack.c.b16 %v2323, %v2321
        %v2644 = vpack.c.b16 %v2326, %v2324
        %v2645 = vpack.c.b16 %v2327, %v2325
        %v2646 = vpack.c.b16 %v2330, %v2328
        %v2647 = vpack.c.b16 %v2331, %v2329
        %v2648 = vpack.c.b16 %v2334, %v2332
        %v2649 = vpack.c.b16 %v2335, %v2333
        %v2650 = vpack.c.b16 %v2338, %v2336
        %v2651 = vpack.c.b16 %v2339, %v2337
        %v2652 = vpack.c.b16 %v2342, %v2340
        %v2653 = vpack.c.b16 %v2343, %v2341
        %v2654 = vpack.c.b16 %v2346, %v2344
        %v2655 = vpack.c.b16 %v2347, %v2345
        %v2656 = vpack.c.b16 %v2350, %v2348
        %v2657 = vpack.c.b16 %v2351, %v2349
        %v2658 = vpack.c.b16 %v2354, %v2352
        %v2659 = vpack.c.b16 %v2355, %v2353
        %v2660 = vpack.c.b16 %v2358, %v2356
        %v2661 = vpack.c.b16 %v2359, %v2357
        %v2662 = vpack.c.b16 %v2362, %v2360
        %v2663 = vpack.c.b16 %v2363, %v2361
        %v2664 = vpack.c.b16 %v2366, %v2364
        %v2665 = vpack.c.b16 %v2367, %v2365
        %v2666 = vpack.c.b16 %v2370, %v2368
        %v2667 = vpack.c.b16 %v2371, %v2369
        %v2668 = vpack.c.b16 %v2374, %v2372
        %v2669 = vpack.c.b16 %v2375, %v2373
        %v2670 = vpack.c.b16 %v2378, %v2376
        %v2671 = vpack.c.b16 %v2379, %v2377
        %v2672 = vpack.c.b16 %v2382, %v2380
        %v2673 = vpack.c.b16 %v2383, %v2381
        %v2674 = vpack.c.b16 %v2386, %v2384
        %v2675 = vpack.c.b16 %v2387, %v2385
        %v2676 = vpack.c.b16 %v2390, %v2388
        %v2677 = vpack.c.b16 %v2391, %v2389
        %v2678 = vpack.c.b16 %v2394, %v2392
        %v2679 = vpack.c.b16 %v2395, %v2393
        %v2680 = vpack.c.b16 %v2398, %v2396
        %v2681 = vpack.c.b16 %v2399, %v2397
        %v2682 = vpack.c.b16 %v2402, %v2400
        %v2683 = vpack.c.b16 %v2403, %v2401
        %v2684 = vpack.c.b16 %v2406, %v2404
        %v2685 = vpack.c.b16 %v2407, %v2405
        %v2686 = vpack.c.b16 %v2410, %v2408
        %v2687 = vpack.c.b16 %v2411, %v2409
        %v2688 = vpack.c.b16 %v2414, %v2412
        %v2689 = vpack.c.b16 %v2415, %v2413
        %v2690 = vpack.c.b16 %v2418, %v2416
        %v2691 = vpack.c.b16 %v2419, %v2417
        %v2692 = vpack.c.b16 %v2422, %v2420
        %v2693 = vpack.c.b16 %v2423, %v2421
        %v2694 = vpack.c.b16 %v2426, %v2424
        %v2695 = vpack.c.b16 %v2427, %v2425
        %v2696 = vpack.c.b16 %v2430, %v2428
        %v2697 = vpack.c.b16 %v2431, %v2429
        %v2698 = vpack.c.b16 %v2434, %v2432
        %v2699 = vpack.c.b16 %v2435, %v2433
        %v2700 = vpack.c.b16 %v2438, %v2436
        %v2701 = vpack.c.b16 %v2439, %v2437
        %v2702 = vpack.c.b16 %v2442, %v2440
        %v2703 = vpack.c.b16 %v2443, %v2441
        %v2704 = vpack.c.b16 %v2446, %v2444
        %v2705 = vpack.c.b16 %v2447, %v2445
        %v2706 = vpack.c.b16 %v2450, %v2448
        %v2707 = vpack.c.b16 %v2451, %v2449
        %v2965 = vlaneseq
        %v2966 = vshrl.u32 %v2965, 7
        %v2967 = vsub.s32 0, %v2966
        %v2968 = vrot.slane %v1683, %v2967
        %v2969 = vlaneseq
        %v2970 = vshrl.u32 %v2969, 7
        %v2971 = vsub.s32 1, %v2970
        %v2972 = vrot.slane %v1683, %v2971
        %2975 = vmatprep.subr.bf16.mxu0 %v2467
        %2976 = vmatpush1.bf16.msra.mxu0 %v2466
        %2977 = vmatprep.subr.bf16.mxu0 %v2465
        %2978 = vmatpush1.bf16.msra.mxu0 %v2464
        %2979 = vmatprep.subr.bf16.mxu0 %v2463
        %2980 = vmatpush1.bf16.msra.mxu0 %v2462
        %2981 = vmatprep.subr.bf16.mxu0 %v2461
        %2982 = vmatpush1.bf16.msra.mxu0 %v2460
        %2983 = vmatprep.subr.bf16.mxu0 %v2459
        %2984 = vmatpush1.bf16.msra.mxu0 %v2458
        %2985 = vmatprep.subr.bf16.mxu0 %v2457
        %2986 = vmatpush1.bf16.msra.mxu0 %v2456
        %2987 = vmatprep.subr.bf16.mxu0 %v2455
        %2988 = vmatpush1.bf16.msra.mxu0 %v2454
        %2989 = vmatprep.subr.bf16.mxu0 %v2453
        %2990 = vmatpush1.bf16.msra.mxu0 %v2452
        %2991 = vmatprep.subr.bf16.mxu0 %v2483
        %2992 = vmatpush2.bf16.msra.mxu0 %v2482
        %2993 = vmatprep.subr.bf16.mxu0 %v2481
        %2994 = vmatpush2.bf16.msra.mxu0 %v2480
        %2995 = vmatprep.subr.bf16.mxu0 %v2479
        %2996 = vmatpush2.bf16.msra.mxu0 %v2478
        %2997 = vmatprep.subr.bf16.mxu0 %v2477
        %2998 = vmatpush2.bf16.msra.mxu0 %v2476
        %2999 = vmatprep.subr.bf16.mxu0 %v2475
        %3000 = vmatpush2.bf16.msra.mxu0 %v2474
        %3001 = vmatprep.subr.bf16.mxu0 %v2473
        %3002 = vmatpush2.bf16.msra.mxu0 %v2472
        %3003 = vmatprep.subr.bf16.mxu0 %v2471
        %3004 = vmatpush2.bf16.msra.mxu0 %v2470
        %3005 = vmatprep.subr.bf16.mxu0 %v2469
        %3006 = vmatpush2.bf16.msra.mxu0 %v2468
        %3007 = vmatprep.mubr.bf16.mxu0 %v1412
        %3008 = vmatmul.mubr.bf16.gmra.mxu0 %v1411
        %v3009 = vpop.f32.mrf.mxu0
        %v3010 = vadd.f32 %v2968, %v3009
        %v3011 = vpop.f32.mrf.mxu0
        %v3012 = vadd.f32 %v2972, %v3011
        %v3013 = vpop.f32.mrf.mxu0
        %v3014 = vpop.f32.mrf.mxu0
        %3015 = vdwg.mxu0
        %3016 = vmatprep.subr.bf16.mxu0 %v2499
        %3017 = vmatpush1.bf16.msra.mxu0 %v2498
        %3018 = vmatprep.subr.bf16.mxu0 %v2497
        %3019 = vmatpush1.bf16.msra.mxu0 %v2496
        %3020 = vmatprep.subr.bf16.mxu0 %v2495
        %3021 = vmatpush1.bf16.msra.mxu0 %v2494
        %3022 = vmatprep.subr.bf16.mxu0 %v2493
        %3023 = vmatpush1.bf16.msra.mxu0 %v2492
        %3024 = vmatprep.subr.bf16.mxu0 %v2491
        %3025 = vmatpush1.bf16.msra.mxu0 %v2490
        %3026 = vmatprep.subr.bf16.mxu0 %v2489
        %3027 = vmatpush1.bf16.msra.mxu0 %v2488
        %3028 = vmatprep.subr.bf16.mxu0 %v2487
        %3029 = vmatpush1.bf16.msra.mxu0 %v2486
        %3030 = vmatprep.subr.bf16.mxu0 %v2485
        %3031 = vmatpush1.bf16.msra.mxu0 %v2484
        %3032 = vmatprep.subr.bf16.mxu0 %v2515
        %3033 = vmatpush2.bf16.msra.mxu0 %v2514
        %3034 = vmatprep.subr.bf16.mxu0 %v2513
        %3035 = vmatpush2.bf16.msra.mxu0 %v2512
        %3036 = vmatprep.subr.bf16.mxu0 %v2511
        %3037 = vmatpush2.bf16.msra.mxu0 %v2510
        %3038 = vmatprep.subr.bf16.mxu0 %v2509
        %3039 = vmatpush2.bf16.msra.mxu0 %v2508
        %3040 = vmatprep.subr.bf16.mxu0 %v2507
        %3041 = vmatpush2.bf16.msra.mxu0 %v2506
        %3042 = vmatprep.subr.bf16.mxu0 %v2505
        %3043 = vmatpush2.bf16.msra.mxu0 %v2504
        %3044 = vmatprep.subr.bf16.mxu0 %v2503
        %3045 = vmatpush2.bf16.msra.mxu0 %v2502
        %3046 = vmatprep.subr.bf16.mxu0 %v2501
        %3047 = vmatpush2.bf16.msra.mxu0 %v2500
        %3048 = vmatprep.mubr.bf16.mxu0 %v1414
        %3049 = vmatmul.mubr.bf16.gmra.mxu0 %v1413
        %v3050 = vpop.f32.mrf.mxu0
        %v3051 = vadd.f32 %v3010, %v3050
        %v3052 = vpop.f32.mrf.mxu0
        %v3053 = vadd.f32 %v3012, %v3052
        %v3054 = vpop.f32.mrf.mxu0
        %v3055 = vpop.f32.mrf.mxu0
        %3056 = vdwg.mxu0
        %3057 = vmatprep.subr.bf16.mxu0 %v2531
        %3058 = vmatpush1.bf16.msra.mxu0 %v2530
        %3059 = vmatprep.subr.bf16.mxu0 %v2529
        %3060 = vmatpush1.bf16.msra.mxu0 %v2528
        %3061 = vmatprep.subr.bf16.mxu0 %v2527
        %3062 = vmatpush1.bf16.msra.mxu0 %v2526
        %3063 = vmatprep.subr.bf16.mxu0 %v2525
        %3064 = vmatpush1.bf16.msra.mxu0 %v2524
        %3065 = vmatprep.subr.bf16.mxu0 %v2523
        %3066 = vmatpush1.bf16.msra.mxu0 %v2522
        %3067 = vmatprep.subr.bf16.mxu0 %v2521
        %3068 = vmatpush1.bf16.msra.mxu0 %v2520
        %3069 = vmatprep.subr.bf16.mxu0 %v2519
        %3070 = vmatpush1.bf16.msra.mxu0 %v2518
        %3071 = vmatprep.subr.bf16.mxu0 %v2517
        %3072 = vmatpush1.bf16.msra.mxu0 %v2516
        %3073 = vmatprep.subr.bf16.mxu0 %v2547
        %3074 = vmatpush2.bf16.msra.mxu0 %v2546
        %3075 = vmatprep.subr.bf16.mxu0 %v2545
        %3076 = vmatpush2.bf16.msra.mxu0 %v2544
        %3077 = vmatprep.subr.bf16.mxu0 %v2543
        %3078 = vmatpush2.bf16.msra.mxu0 %v2542
        %3079 = vmatprep.subr.bf16.mxu0 %v2541
        %3080 = vmatpush2.bf16.msra.mxu0 %v2540
        %3081 = vmatprep.subr.bf16.mxu0 %v2539
        %3082 = vmatpush2.bf16.msra.mxu0 %v2538
        %3083 = vmatprep.subr.bf16.mxu0 %v2537
        %3084 = vmatpush2.bf16.msra.mxu0 %v2536
        %3085 = vmatprep.subr.bf16.mxu0 %v2535
        %3086 = vmatpush2.bf16.msra.mxu0 %v2534
        %3087 = vmatprep.subr.bf16.mxu0 %v2533
        %3088 = vmatpush2.bf16.msra.mxu0 %v2532
        %3089 = vmatprep.mubr.bf16.mxu0 %v1416
        %3090 = vmatmul.mubr.bf16.gmra.mxu0 %v1415
        %v3091 = vpop.f32.mrf.mxu0
        %v3092 = vadd.f32 %v3051, %v3091
        %v3093 = vpop.f32.mrf.mxu0
        %v3094 = vadd.f32 %v3053, %v3093
        %v3095 = vpop.f32.mrf.mxu0
        %v3096 = vpop.f32.mrf.mxu0
        %3097 = vdwg.mxu0
        %3098 = vmatprep.subr.bf16.mxu0 %v2563
        %3099 = vmatpush1.bf16.msra.mxu0 %v2562
        %3100 = vmatprep.subr.bf16.mxu0 %v2561
        %3101 = vmatpush1.bf16.msra.mxu0 %v2560
        %3102 = vmatprep.subr.bf16.mxu0 %v2559
        %3103 = vmatpush1.bf16.msra.mxu0 %v2558
        %3104 = vmatprep.subr.bf16.mxu0 %v2557
        %3105 = vmatpush1.bf16.msra.mxu0 %v2556
        %3106 = vmatprep.subr.bf16.mxu0 %v2555
        %3107 = vmatpush1.bf16.msra.mxu0 %v2554
        %3108 = vmatprep.subr.bf16.mxu0 %v2553
        %3109 = vmatpush1.bf16.msra.mxu0 %v2552
        %3110 = vmatprep.subr.bf16.mxu0 %v2551
        %3111 = vmatpush1.bf16.msra.mxu0 %v2550
        %3112 = vmatprep.subr.bf16.mxu0 %v2549
        %3113 = vmatpush1.bf16.msra.mxu0 %v2548
        %3114 = vmatprep.subr.bf16.mxu0 %v2579
        %3115 = vmatpush2.bf16.msra.mxu0 %v2578
        %3116 = vmatprep.subr.bf16.mxu0 %v2577
        %3117 = vmatpush2.bf16.msra.mxu0 %v2576
        %3118 = vmatprep.subr.bf16.mxu0 %v2575
        %3119 = vmatpush2.bf16.msra.mxu0 %v2574
        %3120 = vmatprep.subr.bf16.mxu0 %v2573
        %3121 = vmatpush2.bf16.msra.mxu0 %v2572
        %3122 = vmatprep.subr.bf16.mxu0 %v2571
        %3123 = vmatpush2.bf16.msra.mxu0 %v2570
        %3124 = vmatprep.subr.bf16.mxu0 %v2569
        %3125 = vmatpush2.bf16.msra.mxu0 %v2568
        %3126 = vmatprep.subr.bf16.mxu0 %v2567
        %3127 = vmatpush2.bf16.msra.mxu0 %v2566
        %3128 = vmatprep.subr.bf16.mxu0 %v2565
        %3129 = vmatpush2.bf16.msra.mxu0 %v2564
        %3130 = vmatprep.mubr.bf16.mxu0 %v1418
        %3131 = vmatmul.mubr.bf16.gmra.mxu0 %v1417
        %v3132 = vpop.f32.mrf.mxu0
        %v3133 = vadd.f32 %v3092, %v3132
        %v3134 = vpop.f32.mrf.mxu0
        %v3135 = vadd.f32 %v3094, %v3134
        %v3136 = vpop.f32.mrf.mxu0
        %v3137 = vpop.f32.mrf.mxu0
        %3138 = vdwg.mxu0
        %3139 = vmatprep.subr.bf16.mxu0 %v2595
        %3140 = vmatpush1.bf16.msra.mxu0 %v2594
        %3141 = vmatprep.subr.bf16.mxu0 %v2593
        %3142 = vmatpush1.bf16.msra.mxu0 %v2592
        %3143 = vmatprep.subr.bf16.mxu0 %v2591
        %3144 = vmatpush1.bf16.msra.mxu0 %v2590
        %3145 = vmatprep.subr.bf16.mxu0 %v2589
        %3146 = vmatpush1.bf16.msra.mxu0 %v2588
        %3147 = vmatprep.subr.bf16.mxu0 %v2587
        %3148 = vmatpush1.bf16.msra.mxu0 %v2586
        %3149 = vmatprep.subr.bf16.mxu0 %v2585
        %3150 = vmatpush1.bf16.msra.mxu0 %v2584
        %3151 = vmatprep.subr.bf16.mxu0 %v2583
        %3152 = vmatpush1.bf16.msra.mxu0 %v2582
        %3153 = vmatprep.subr.bf16.mxu0 %v2581
        %3154 = vmatpush1.bf16.msra.mxu0 %v2580
        %3155 = vmatprep.subr.bf16.mxu0 %v2611
        %3156 = vmatpush2.bf16.msra.mxu0 %v2610
        %3157 = vmatprep.subr.bf16.mxu0 %v2609
        %3158 = vmatpush2.bf16.msra.mxu0 %v2608
        %3159 = vmatprep.subr.bf16.mxu0 %v2607
        %3160 = vmatpush2.bf16.msra.mxu0 %v2606
        %3161 = vmatprep.subr.bf16.mxu0 %v2605
        %3162 = vmatpush2.bf16.msra.mxu0 %v2604
        %3163 = vmatprep.subr.bf16.mxu0 %v2603
        %3164 = vmatpush2.bf16.msra.mxu0 %v2602
        %3165 = vmatprep.subr.bf16.mxu0 %v2601
        %3166 = vmatpush2.bf16.msra.mxu0 %v2600
        %3167 = vmatprep.subr.bf16.mxu0 %v2599
        %3168 = vmatpush2.bf16.msra.mxu0 %v2598
        %3169 = vmatprep.subr.bf16.mxu0 %v2597
        %3170 = vmatpush2.bf16.msra.mxu0 %v2596
        %3171 = vmatprep.mubr.bf16.mxu0 %v1420
        %3172 = vmatmul.mubr.bf16.gmra.mxu0 %v1419
        %v3173 = vpop.f32.mrf.mxu0
        %v3174 = vadd.f32 %v3133, %v3173
        %v3175 = vpop.f32.mrf.mxu0
        %v3176 = vadd.f32 %v3135, %v3175
        %v3177 = vpop.f32.mrf.mxu0
        %v3178 = vpop.f32.mrf.mxu0
        %3179 = vdwg.mxu0
        %3180 = vmatprep.subr.bf16.mxu0 %v2627
        %3181 = vmatpush1.bf16.msra.mxu0 %v2626
        %3182 = vmatprep.subr.bf16.mxu0 %v2625
        %3183 = vmatpush1.bf16.msra.mxu0 %v2624
        %3184 = vmatprep.subr.bf16.mxu0 %v2623
        %3185 = vmatpush1.bf16.msra.mxu0 %v2622
        %3186 = vmatprep.subr.bf16.mxu0 %v2621
        %3187 = vmatpush1.bf16.msra.mxu0 %v2620
        %3188 = vmatprep.subr.bf16.mxu0 %v2619
        %3189 = vmatpush1.bf16.msra.mxu0 %v2618
        %3190 = vmatprep.subr.bf16.mxu0 %v2617
        %3191 = vmatpush1.bf16.msra.mxu0 %v2616
        %3192 = vmatprep.subr.bf16.mxu0 %v2615
        %3193 = vmatpush1.bf16.msra.mxu0 %v2614
        %3194 = vmatprep.subr.bf16.mxu0 %v2613
        %3195 = vmatpush1.bf16.msra.mxu0 %v2612
        %3196 = vmatprep.subr.bf16.mxu0 %v2643
        %3197 = vmatpush2.bf16.msra.mxu0 %v2642
        %3198 = vmatprep.subr.bf16.mxu0 %v2641
        %3199 = vmatpush2.bf16.msra.mxu0 %v2640
        %3200 = vmatprep.subr.bf16.mxu0 %v2639
        %3201 = vmatpush2.bf16.msra.mxu0 %v2638
        %3202 = vmatprep.subr.bf16.mxu0 %v2637
        %3203 = vmatpush2.bf16.msra.mxu0 %v2636
        %3204 = vmatprep.subr.bf16.mxu0 %v2635
        %3205 = vmatpush2.bf16.msra.mxu0 %v2634
        %3206 = vmatprep.subr.bf16.mxu0 %v2633
        %3207 = vmatpush2.bf16.msra.mxu0 %v2632
        %3208 = vmatprep.subr.bf16.mxu0 %v2631
        %3209 = vmatpush2.bf16.msra.mxu0 %v2630
        %3210 = vmatprep.subr.bf16.mxu0 %v2629
        %3211 = vmatpush2.bf16.msra.mxu0 %v2628
        %3212 = vmatprep.mubr.bf16.mxu0 %v1422
        %3213 = vmatmul.mubr.bf16.gmra.mxu0 %v1421
        %v3214 = vpop.f32.mrf.mxu0
        %v3215 = vadd.f32 %v3174, %v3214
        %v3216 = vpop.f32.mrf.mxu0
        %v3217 = vadd.f32 %v3176, %v3216
        %v3218 = vpop.f32.mrf.mxu0
        %v3219 = vpop.f32.mrf.mxu0
        %3220 = vdwg.mxu0
        %3221 = vmatprep.subr.bf16.mxu0 %v2659
        %3222 = vmatpush1.bf16.msra.mxu0 %v2658
        %3223 = vmatprep.subr.bf16.mxu0 %v2657
        %3224 = vmatpush1.bf16.msra.mxu0 %v2656
        %3225 = vmatprep.subr.bf16.mxu0 %v2655
        %3226 = vmatpush1.bf16.msra.mxu0 %v2654
        %3227 = vmatprep.subr.bf16.mxu0 %v2653
        %3228 = vmatpush1.bf16.msra.mxu0 %v2652
        %3229 = vmatprep.subr.bf16.mxu0 %v2651
        %3230 = vmatpush1.bf16.msra.mxu0 %v2650
        %3231 = vmatprep.subr.bf16.mxu0 %v2649
        %3232 = vmatpush1.bf16.msra.mxu0 %v2648
        %3233 = vmatprep.subr.bf16.mxu0 %v2647
        %3234 = vmatpush1.bf16.msra.mxu0 %v2646
        %3235 = vmatprep.subr.bf16.mxu0 %v2645
        %3236 = vmatpush1.bf16.msra.mxu0 %v2644
        %3237 = vmatprep.subr.bf16.mxu0 %v2675
        %3238 = vmatpush2.bf16.msra.mxu0 %v2674
        %3239 = vmatprep.subr.bf16.mxu0 %v2673
        %3240 = vmatpush2.bf16.msra.mxu0 %v2672
        %3241 = vmatprep.subr.bf16.mxu0 %v2671
        %3242 = vmatpush2.bf16.msra.mxu0 %v2670
        %3243 = vmatprep.subr.bf16.mxu0 %v2669
        %3244 = vmatpush2.bf16.msra.mxu0 %v2668
        %3245 = vmatprep.subr.bf16.mxu0 %v2667
        %3246 = vmatpush2.bf16.msra.mxu0 %v2666
        %3247 = vmatprep.subr.bf16.mxu0 %v2665
        %3248 = vmatpush2.bf16.msra.mxu0 %v2664
        %3249 = vmatprep.subr.bf16.mxu0 %v2663
        %3250 = vmatpush2.bf16.msra.mxu0 %v2662
        %3251 = vmatprep.subr.bf16.mxu0 %v2661
        %3252 = vmatpush2.bf16.msra.mxu0 %v2660
        %3253 = vmatprep.mubr.bf16.mxu0 %v1424
        %3254 = vmatmul.mubr.bf16.gmra.mxu0 %v1423
        %v3255 = vpop.f32.mrf.mxu0
        %v3256 = vadd.f32 %v3215, %v3255
        %v3257 = vpop.f32.mrf.mxu0
        %v3258 = vadd.f32 %v3217, %v3257
        %v3259 = vpop.f32.mrf.mxu0
        %v3260 = vpop.f32.mrf.mxu0
        %3261 = vdwg.mxu0
        %3262 = vmatprep.subr.bf16.mxu0 %v2691
        %3263 = vmatpush1.bf16.msra.mxu0 %v2690
        %3264 = vmatprep.subr.bf16.mxu0 %v2689
        %3265 = vmatpush1.bf16.msra.mxu0 %v2688
        %3266 = vmatprep.subr.bf16.mxu0 %v2687
        %3267 = vmatpush1.bf16.msra.mxu0 %v2686
        %3268 = vmatprep.subr.bf16.mxu0 %v2685
        %3269 = vmatpush1.bf16.msra.mxu0 %v2684
        %3270 = vmatprep.subr.bf16.mxu0 %v2683
        %3271 = vmatpush1.bf16.msra.mxu0 %v2682
        %3272 = vmatprep.subr.bf16.mxu0 %v2681
        %3273 = vmatpush1.bf16.msra.mxu0 %v2680
        %3274 = vmatprep.subr.bf16.mxu0 %v2679
        %3275 = vmatpush1.bf16.msra.mxu0 %v2678
        %3276 = vmatprep.subr.bf16.mxu0 %v2677
        %3277 = vmatpush1.bf16.msra.mxu0 %v2676
        %3278 = vmatprep.subr.bf16.mxu0 %v2707
        %3279 = vmatpush2.bf16.msra.mxu0 %v2706
        %3280 = vmatprep.subr.bf16.mxu0 %v2705
        %3281 = vmatpush2.bf16.msra.mxu0 %v2704
        %3282 = vmatprep.subr.bf16.mxu0 %v2703
        %3283 = vmatpush2.bf16.msra.mxu0 %v2702
        %3284 = vmatprep.subr.bf16.mxu0 %v2701
        %3285 = vmatpush2.bf16.msra.mxu0 %v2700
        %3286 = vmatprep.subr.bf16.mxu0 %v2699
        %3287 = vmatpush2.bf16.msra.mxu0 %v2698
        %3288 = vmatprep.subr.bf16.mxu0 %v2697
        %3289 = vmatpush2.bf16.msra.mxu0 %v2696
        %3290 = vmatprep.subr.bf16.mxu0 %v2695
        %3291 = vmatpush2.bf16.msra.mxu0 %v2694
        %3292 = vmatprep.subr.bf16.mxu0 %v2693
        %3293 = vmatpush2.bf16.msra.mxu0 %v2692
        %3294 = vmatprep.mubr.bf16.mxu0 %v1426
        %3295 = vmatmul.mubr.bf16.gmra.mxu0 %v1425
        %v3296 = vpop.f32.mrf.mxu0
        %v3297 = vadd.f32 %v3256, %v3296
        %v3298 = vpop.f32.mrf.mxu0
        %v3299 = vadd.f32 %v3258, %v3298
        %v3300 = vpop.f32.mrf.mxu0
        %v3301 = vpop.f32.mrf.mxu0
        %3302 = vdwg.mxu0
        %v3303 = vmax.f32 %v3297, 0.0
        %v3304 = vmax.f32 %v3299, 0.0
        %v3305 = vpack.c.bf16 %v3303, %v3303
        %v3306 = vpack.c.bf16 %v3304, %v3304
        %v3307 = vld [vmem:[%s5] sm:$0xff]
        %v3308 = vld [vmem:[%s5 + $0x8] sm:$0xf]
        %v3309 = vld [vmem:[%s5 + $0xc] sm:$0xff]
        %v3310 = vld [vmem:[%s5 + $0x14] sm:$0xf]
        %v3311 = vld [vmem:[%s5 + $0x18] sm:$0xff]
        %v3312 = vld [vmem:[%s5 + $0x20] sm:$0xf]
        %v3313 = vld [vmem:[%s5 + $0x24] sm:$0xff]
        %v3314 = vld [vmem:[%s5 + $0x2c] sm:$0xf]
        %v3315 = vld [vmem:[%s5 + $0x30] sm:$0xff]
        %v3316 = vld [vmem:[%s5 + $0x38] sm:$0xf]
        %v3317 = vld [vmem:[%s5 + $0x3c] sm:$0xff]
        %v3318 = vld [vmem:[%s5 + $0x44] sm:$0xf]
        %v3319 = vld [vmem:[%s5 + $0x48] sm:$0xff]
        %v3320 = vld [vmem:[%s5 + $0x50] sm:$0xf]
        %v3321 = vld [vmem:[%s5 + $0x54] sm:$0xff]
        %v3322 = vld [vmem:[%s5 + $0x5c] sm:$0xf]
        %v3323 = vld [vmem:[%s5 + $0x60] sm:$0xff]
        %v3324 = vld [vmem:[%s5 + $0x68] sm:$0xf]
        %v3325 = vld [vmem:[%s5 + $0x6c] sm:$0xff]
        %v3326 = vld [vmem:[%s5 + $0x74] sm:$0xf]
        %v3327 = vld [vmem:[%s5 + $0x78] sm:$0xff]
        %v3328 = vld [vmem:[%s5 + $0x80] sm:$0xf]
        %v3329 = vld [vmem:[%s5 + $0x84] sm:$0xff]
        %v3330 = vld [vmem:[%s5 + $0x8c] sm:$0xf]
        %v3331 = vld [vmem:[%s5 + $0x90] sm:$0xff]
        %v3332 = vld [vmem:[%s5 + $0x98] sm:$0xf]
        %v3333 = vld [vmem:[%s5 + $0x9c] sm:$0xff]
        %v3334 = vld [vmem:[%s5 + $0xa4] sm:$0xf]
        %v3335 = vld [vmem:[%s5 + $0xa8] sm:$0xff]
        %v3336 = vld [vmem:[%s5 + $0xb0] sm:$0xf]
        %v3337 = vld [vmem:[%s5 + $0xb4] sm:$0xff]
        %v3338 = vld [vmem:[%s5 + $0xbc] sm:$0xf]
        %v3339 = vld [vmem:[%s5 + $0xc0] sm:$0xff]
        %v3340 = vld [vmem:[%s5 + $0xc8] sm:$0xf]
        %v3341 = vld [vmem:[%s5 + $0xcc] sm:$0xff]
        %v3342 = vld [vmem:[%s5 + $0xd4] sm:$0xf]
        %v3343 = vld [vmem:[%s5 + $0xd8] sm:$0xff]
        %v3344 = vld [vmem:[%s5 + $0xe0] sm:$0xf]
        %v3345 = vld [vmem:[%s5 + $0xe4] sm:$0xff]
        %v3346 = vld [vmem:[%s5 + $0xec] sm:$0xf]
        %v3347 = vld [vmem:[%s5 + $0xf0] sm:$0xff]
        %v3348 = vld [vmem:[%s5 + $0xf8] sm:$0xf]
        %v3349 = vld [vmem:[%s5 + $0xfc] sm:$0xff]
        %v3350 = vld [vmem:[%s5 + $0x104] sm:$0xf]
        %v3351 = vld [vmem:[%s5 + $0x108] sm:$0xff]
        %v3352 = vld [vmem:[%s5 + $0x110] sm:$0xf]
        %v3353 = vld [vmem:[%s5 + $0x114] sm:$0xff]
        %v3354 = vld [vmem:[%s5 + $0x11c] sm:$0xf]
        %v3355 = vld [vmem:[%s5 + $0x120] sm:$0xff]
        %v3356 = vld [vmem:[%s5 + $0x128] sm:$0xf]
        %v3357 = vld [vmem:[%s5 + $0x12c] sm:$0xff]
        %v3358 = vld [vmem:[%s5 + $0x134] sm:$0xf]
        %v3359 = vld [vmem:[%s5 + $0x138] sm:$0xff]
        %v3360 = vld [vmem:[%s5 + $0x140] sm:$0xf]
        %v3361 = vld [vmem:[%s5 + $0x144] sm:$0xff]
        %v3362 = vld [vmem:[%s5 + $0x14c] sm:$0xf]
        %v3363 = vld [vmem:[%s5 + $0x150] sm:$0xff]
        %v3364 = vld [vmem:[%s5 + $0x158] sm:$0xf]
        %v3365 = vld [vmem:[%s5 + $0x15c] sm:$0xff]
        %v3366 = vld [vmem:[%s5 + $0x164] sm:$0xf]
        %v3367 = vld [vmem:[%s5 + $0x168] sm:$0xff]
        %v3368 = vld [vmem:[%s5 + $0x170] sm:$0xf]
        %v3369 = vld [vmem:[%s5 + $0x174] sm:$0xff]
        %v3370 = vld [vmem:[%s5 + $0x17c] sm:$0xf]
        %v3371 = vld [vmem:[%s6] sm:$0x7]
        %v3436 = vunpack.c.l.b16 %v3307
        %v3437 = vunpack.c.h.b16 %v3307
        %v3438 = vunpack.c.l.b16 %v3308
        %v3439 = vunpack.c.l.b16 %v3309
        %v3440 = vunpack.c.h.b16 %v3309
        %v3441 = vunpack.c.l.b16 %v3310
        %v3442 = vunpack.c.l.b16 %v3311
        %v3443 = vunpack.c.h.b16 %v3311
        %v3444 = vunpack.c.l.b16 %v3312
        %v3445 = vunpack.c.l.b16 %v3313
        %v3446 = vunpack.c.h.b16 %v3313
        %v3447 = vunpack.c.l.b16 %v3314
        %v3448 = vunpack.c.l.b16 %v3315
        %v3449 = vunpack.c.h.b16 %v3315
        %v3450 = vunpack.c.l.b16 %v3316
        %v3451 = vunpack.c.l.b16 %v3317
        %v3452 = vunpack.c.h.b16 %v3317
        %v3453 = vunpack.c.l.b16 %v3318
        %v3454 = vunpack.c.l.b16 %v3319
        %v3455 = vunpack.c.h.b16 %v3319
        %v3456 = vunpack.c.l.b16 %v3320
        %v3457 = vunpack.c.l.b16 %v3321
        %v3458 = vunpack.c.h.b16 %v3321
        %v3459 = vunpack.c.l.b16 %v3322
        %v3460 = vunpack.c.l.b16 %v3323
        %v3461 = vunpack.c.h.b16 %v3323
        %v3462 = vunpack.c.l.b16 %v3324
        %v3463 = vunpack.c.l.b16 %v3325
        %v3464 = vunpack.c.h.b16 %v3325
        %v3465 = vunpack.c.l.b16 %v3326
        %v3466 = vunpack.c.l.b16 %v3327
        %v3467 = vunpack.c.h.b16 %v3327
        %v3468 = vunpack.c.l.b16 %v3328
        %v3469 = vunpack.c.l.b16 %v3329
        %v3470 = vunpack.c.h.b16 %v3329
        %v3471 = vunpack.c.l.b16 %v3330
        %v3472 = vunpack.c.l.b16 %v3331
        %v3473 = vunpack.c.h.b16 %v3331
        %v3474 = vunpack.c.l.b16 %v3332
        %v3475 = vunpack.c.l.b16 %v3333
        %v3476 = vunpack.c.h.b16 %v3333
        %v3477 = vunpack.c.l.b16 %v3334
        %v3478 = vunpack.c.l.b16 %v3335
        %v3479 = vunpack.c.h.b16 %v3335
        %v3480 = vunpack.c.l.b16 %v3336
        %v3481 = vunpack.c.l.b16 %v3337
        %v3482 = vunpack.c.h.b16 %v3337
        %v3483 = vunpack.c.l.b16 %v3338
        %v3484 = vunpack.c.l.b16 %v3339
        %v3485 = vunpack.c.h.b16 %v3339
        %v3486 = vunpack.c.l.b16 %v3340
        %v3487 = vunpack.c.l.b16 %v3341
        %v3488 = vunpack.c.h.b16 %v3341
        %v3489 = vunpack.c.l.b16 %v3342
        %v3490 = vunpack.c.l.b16 %v3343
        %v3491 = vunpack.c.h.b16 %v3343
        %v3492 = vunpack.c.l.b16 %v3344
        %v3493 = vunpack.c.l.b16 %v3345
        %v3494 = vunpack.c.h.b16 %v3345
        %v3495 = vunpack.c.l.b16 %v3346
        %v3496 = vunpack.c.l.b16 %v3347
        %v3497 = vunpack.c.h.b16 %v3347
        %v3498 = vunpack.c.l.b16 %v3348
        %v3499 = vunpack.c.l.b16 %v3349
        %v3500 = vunpack.c.h.b16 %v3349
        %v3501 = vunpack.c.l.b16 %v3350
        %v3502 = vunpack.c.l.b16 %v3351
        %v3503 = vunpack.c.h.b16 %v3351
        %v3504 = vunpack.c.l.b16 %v3352
        %v3505 = vunpack.c.l.b16 %v3353
        %v3506 = vunpack.c.h.b16 %v3353
        %v3507 = vunpack.c.l.b16 %v3354
        %v3508 = vunpack.c.l.b16 %v3355
        %v3509 = vunpack.c.h.b16 %v3355
        %v3510 = vunpack.c.l.b16 %v3356
        %v3511 = vunpack.c.l.b16 %v3357
        %v3512 = vunpack.c.h.b16 %v3357
        %v3513 = vunpack.c.l.b16 %v3358
        %v3514 = vunpack.c.l.b16 %v3359
        %v3515 = vunpack.c.h.b16 %v3359
        %v3516 = vunpack.c.l.b16 %v3360
        %v3517 = vunpack.c.l.b16 %v3361
        %v3518 = vunpack.c.h.b16 %v3361
        %v3519 = vunpack.c.l.b16 %v3362
        %v3520 = vunpack.c.l.b16 %v3363
        %v3521 = vunpack.c.h.b16 %v3363
        %v3522 = vunpack.c.l.b16 %v3364
        %v3523 = vunpack.c.l.b16 %v3365
        %v3524 = vunpack.c.h.b16 %v3365
        %v3525 = vunpack.c.l.b16 %v3366
        %v3526 = vunpack.c.l.b16 %v3367
        %v3527 = vunpack.c.h.b16 %v3367
        %v3528 = vunpack.c.l.b16 %v3368
        %v3529 = vunpack.c.l.b16 %v3369
        %v3530 = vunpack.c.h.b16 %v3369
        %v3531 = vunpack.c.l.b16 %v3370
        %v3532 = vpack.c.b16 %v3439, %v3436
        %v3533 = vpack.c.b16 %v3440, %v3437
        %v3534 = vpack.c.b16 %v3441, %v3438
        %v3535 = vpack.c.b16 %v3445, %v3442
        %v3536 = vpack.c.b16 %v3446, %v3443
        %v3537 = vpack.c.b16 %v3447, %v3444
        %v3538 = vpack.c.b16 %v3451, %v3448
        %v3539 = vpack.c.b16 %v3452, %v3449
        %v3540 = vpack.c.b16 %v3453, %v3450
        %v3541 = vpack.c.b16 %v3457, %v3454
        %v3542 = vpack.c.b16 %v3458, %v3455
        %v3543 = vpack.c.b16 %v3459, %v3456
        %v3544 = vpack.c.b16 %v3463, %v3460
        %v3545 = vpack.c.b16 %v3464, %v3461
        %v3546 = vpack.c.b16 %v3465, %v3462
        %v3547 = vpack.c.b16 %v3469, %v3466
        %v3548 = vpack.c.b16 %v3470, %v3467
        %v3549 = vpack.c.b16 %v3471, %v3468
        %v3550 = vpack.c.b16 %v3475, %v3472
        %v3551 = vpack.c.b16 %v3476, %v3473
        %v3552 = vpack.c.b16 %v3477, %v3474
        %v3553 = vpack.c.b16 %v3481, %v3478
        %v3554 = vpack.c.b16 %v3482, %v3479
        %v3555 = vpack.c.b16 %v3483, %v3480
        %v3556 = vpack.c.b16 %v3487, %v3484
        %v3557 = vpack.c.b16 %v3488, %v3485
        %v3558 = vpack.c.b16 %v3489, %v3486
        %v3559 = vpack.c.b16 %v3493, %v3490
        %v3560 = vpack.c.b16 %v3494, %v3491
        %v3561 = vpack.c.b16 %v3495, %v3492
        %v3562 = vpack.c.b16 %v3499, %v3496
        %v3563 = vpack.c.b16 %v3500, %v3497
        %v3564 = vpack.c.b16 %v3501, %v3498
        %v3565 = vpack.c.b16 %v3505, %v3502
        %v3566 = vpack.c.b16 %v3506, %v3503
        %v3567 = vpack.c.b16 %v3507, %v3504
        %v3568 = vpack.c.b16 %v3511, %v3508
        %v3569 = vpack.c.b16 %v3512, %v3509
        %v3570 = vpack.c.b16 %v3513, %v3510
        %v3571 = vpack.c.b16 %v3517, %v3514
        %v3572 = vpack.c.b16 %v3518, %v3515
        %v3573 = vpack.c.b16 %v3519, %v3516
        %v3574 = vpack.c.b16 %v3523, %v3520
        %v3575 = vpack.c.b16 %v3524, %v3521
        %v3576 = vpack.c.b16 %v3525, %v3522
        %v3577 = vpack.c.b16 %v3529, %v3526
        %v3578 = vpack.c.b16 %v3530, %v3527
        %v3579 = vpack.c.b16 %v3531, %v3528
        %v3629 = vlaneseq
        %v3630 = vshrl.u32 %v3629, 7
        %v3631 = vsub.s32 0, %v3630
        %v3632 = vrot.slane %v3371, %v3631
        %v3633 = vlaneseq
        %v3634 = vshrl.u32 %v3633, 7
        %v3635 = vsub.s32 1, %v3634
        %v3636 = vrot.slane %v3371, %v3635
        %v3637 = vlaneseq
        %v3638 = vshrl.u32 %v3637, 7
        %v3639 = vsub.s32 2, %v3638
        %v3640 = vrot.slane %v3371, %v3639
        %3644 = vmatprep.subr.bf16.mxu0 %v3554
        %3645 = vmatpush1.bf16.msra.mxu0 %v3553
        %3646 = vmatprep.subr.bf16.mxu0 %v3551
        %3647 = vmatpush1.bf16.msra.mxu0 %v3550
        %3648 = vmatprep.subr.bf16.mxu0 %v3548
        %3649 = vmatpush1.bf16.msra.mxu0 %v3547
        %3650 = vmatprep.subr.bf16.mxu0 %v3545
        %3651 = vmatpush1.bf16.msra.mxu0 %v3544
        %3652 = vmatprep.subr.bf16.mxu0 %v3542
        %3653 = vmatpush1.bf16.msra.mxu0 %v3541
        %3654 = vmatprep.subr.bf16.mxu0 %v3539
        %3655 = vmatpush1.bf16.msra.mxu0 %v3538
        %3656 = vmatprep.subr.bf16.mxu0 %v3536
        %3657 = vmatpush1.bf16.msra.mxu0 %v3535
        %3658 = vmatprep.subr.bf16.mxu0 %v3533
        %3659 = vmatpush1.bf16.msra.mxu0 %v3532
        %3660 = vmatprep.subr.bf16.mxu0 %v3578
        %3661 = vmatpush2.bf16.msra.mxu0 %v3577
        %3662 = vmatprep.subr.bf16.mxu0 %v3575
        %3663 = vmatpush2.bf16.msra.mxu0 %v3574
        %3664 = vmatprep.subr.bf16.mxu0 %v3572
        %3665 = vmatpush2.bf16.msra.mxu0 %v3571
        %3666 = vmatprep.subr.bf16.mxu0 %v3569
        %3667 = vmatpush2.bf16.msra.mxu0 %v3568
        %3668 = vmatprep.subr.bf16.mxu0 %v3566
        %3669 = vmatpush2.bf16.msra.mxu0 %v3565
        %3670 = vmatprep.subr.bf16.mxu0 %v3563
        %3671 = vmatpush2.bf16.msra.mxu0 %v3562
        %3672 = vmatprep.subr.bf16.mxu0 %v3560
        %3673 = vmatpush2.bf16.msra.mxu0 %v3559
        %3674 = vmatprep.subr.bf16.mxu0 %v3557
        %3675 = vmatpush2.bf16.msra.mxu0 %v3556
        %3676 = vmatprep.mubr.bf16.mxu0 %v3306
        %3677 = vmatmul.mubr.bf16.gmra.mxu0 %v3305
        %v3678 = vpop.f32.mrf.mxu0
        %v3679 = vadd.f32 %v3632, %v3678
        %v3680 = vpop.f32.mrf.mxu0
        %v3681 = vadd.f32 %v3636, %v3680
        %v3682 = vpop.f32.mrf.mxu0
        %v3683 = vpop.f32.mrf.mxu0
        %3684 = vdwg.mxu0
        %3685 = vmatprep.subr.bf16.mxu0 0
        %3686 = vmatpush1.bf16.msra.mxu0 %v3555
        %3687 = vmatprep.subr.bf16.mxu0 0
        %3688 = vmatpush1.bf16.msra.mxu0 %v3552
        %3689 = vmatprep.subr.bf16.mxu0 0
        %3690 = vmatpush1.bf16.msra.mxu0 %v3549
        %3691 = vmatprep.subr.bf16.mxu0 0
        %3692 = vmatpush1.bf16.msra.mxu0 %v3546
        %3693 = vmatprep.subr.bf16.mxu0 0
        %3694 = vmatpush1.bf16.msra.mxu0 %v3543
        %3695 = vmatprep.subr.bf16.mxu0 0
        %3696 = vmatpush1.bf16.msra.mxu0 %v3540
        %3697 = vmatprep.subr.bf16.mxu0 0
        %3698 = vmatpush1.bf16.msra.mxu0 %v3537
        %3699 = vmatprep.subr.bf16.mxu0 0
        %3700 = vmatpush1.bf16.msra.mxu0 %v3534
        %3701 = vmatprep.subr.bf16.mxu0 0
        %3702 = vmatpush2.bf16.msra.mxu0 %v3579
        %3703 = vmatprep.subr.bf16.mxu0 0
        %3704 = vmatpush2.bf16.msra.mxu0 %v3576
        %3705 = vmatprep.subr.bf16.mxu0 0
        %3706 = vmatpush2.bf16.msra.mxu0 %v3573
        %3707 = vmatprep.subr.bf16.mxu0 0
        %3708 = vmatpush2.bf16.msra.mxu0 %v3570
        %3709 = vmatprep.subr.bf16.mxu0 0
        %3710 = vmatpush2.bf16.msra.mxu0 %v3567
        %3711 = vmatprep.subr.bf16.mxu0 0
        %3712 = vmatpush2.bf16.msra.mxu0 %v3564
        %3713 = vmatprep.subr.bf16.mxu0 0
        %3714 = vmatpush2.bf16.msra.mxu0 %v3561
        %3715 = vmatprep.subr.bf16.mxu0 0
        %3716 = vmatpush2.bf16.msra.mxu0 %v3558
        %3717 = vmatprep.mubr.bf16.mxu0 %v3306
        %3718 = vmatmul.mubr.bf16.gmra.mxu0 %v3305
        %v3719 = vpop.f32.mrf.mxu0
        %v3720 = vadd.f32 %v3640, %v3719
        %v3721 = vpop.f32.mrf.mxu0
        %v3722 = vpop.f32.mrf.mxu0
        %v3723 = vpop.f32.mrf.mxu0
        %3724 = vdwg.mxu0
        %v3725 = vmax.f32 %v3679, 0.0
        %v3726 = vmax.f32 %v3681, 0.0
        %v3727 = vmax.f32 %v3720, 0.0
        %v3728 = vpack.c.bf16 %v3725, %v3725
        %v3729 = vpack.c.bf16 %v3726, %v3726
        %v3730 = vpack.c.bf16 %v3727, %v3727
        %v3731 = vld [vmem:[%s7] sm:$0xff]
        %v3732 = vld [vmem:[%s7 + $0x8] sm:$0xf]
        %v3733 = vld [vmem:[%s7 + $0xc] sm:$0xff]
        %v3734 = vld [vmem:[%s7 + $0x14] sm:$0xf]
        %v3735 = vld [vmem:[%s7 + $0x18] sm:$0xff]
        %v3736 = vld [vmem:[%s7 + $0x20] sm:$0xf]
        %v3737 = vld [vmem:[%s7 + $0x24] sm:$0xff]
        %v3738 = vld [vmem:[%s7 + $0x2c] sm:$0xf]
        %v3739 = vld [vmem:[%s7 + $0x30] sm:$0xff]
        %v3740 = vld [vmem:[%s7 + $0x38] sm:$0xf]
        %v3741 = vld [vmem:[%s7 + $0x3c] sm:$0xff]
        %v3742 = vld [vmem:[%s7 + $0x44] sm:$0xf]
        %v3743 = vld [vmem:[%s7 + $0x48] sm:$0xff]
        %v3744 = vld [vmem:[%s7 + $0x50] sm:$0xf]
        %v3745 = vld [vmem:[%s7 + $0x54] sm:$0xff]
        %v3746 = vld [vmem:[%s7 + $0x5c] sm:$0xf]
        %v3747 = vld [vmem:[%s7 + $0x60] sm:$0xff]
        %v3748 = vld [vmem:[%s7 + $0x68] sm:$0xf]
        %v3749 = vld [vmem:[%s7 + $0x6c] sm:$0xff]
        %v3750 = vld [vmem:[%s7 + $0x74] sm:$0xf]
        %v3751 = vld [vmem:[%s7 + $0x78] sm:$0xff]
        %v3752 = vld [vmem:[%s7 + $0x80] sm:$0xf]
        %v3753 = vld [vmem:[%s7 + $0x84] sm:$0xff]
        %v3754 = vld [vmem:[%s7 + $0x8c] sm:$0xf]
        %v3755 = vld [vmem:[%s7 + $0x90] sm:$0xff]
        %v3756 = vld [vmem:[%s7 + $0x98] sm:$0xf]
        %v3757 = vld [vmem:[%s7 + $0x9c] sm:$0xff]
        %v3758 = vld [vmem:[%s7 + $0xa4] sm:$0xf]
        %v3759 = vld [vmem:[%s7 + $0xa8] sm:$0xff]
        %v3760 = vld [vmem:[%s7 + $0xb0] sm:$0xf]
        %v3761 = vld [vmem:[%s7 + $0xb4] sm:$0xff]
        %v3762 = vld [vmem:[%s7 + $0xbc] sm:$0xf]
        %v3763 = vld [vmem:[%s7 + $0xc0] sm:$0xff]
        %v3764 = vld [vmem:[%s7 + $0xc8] sm:$0xf]
        %v3765 = vld [vmem:[%s7 + $0xcc] sm:$0xff]
        %v3766 = vld [vmem:[%s7 + $0xd4] sm:$0xf]
        %v3767 = vld [vmem:[%s7 + $0xd8] sm:$0xff]
        %v3768 = vld [vmem:[%s7 + $0xe0] sm:$0xf]
        %v3769 = vld [vmem:[%s7 + $0xe4] sm:$0xff]
        %v3770 = vld [vmem:[%s7 + $0xec] sm:$0xf]
        %v3771 = vld [vmem:[%s7 + $0xf0] sm:$0xff]
        %v3772 = vld [vmem:[%s7 + $0xf8] sm:$0xf]
        %v3773 = vld [vmem:[%s7 + $0xfc] sm:$0xff]
        %v3774 = vld [vmem:[%s7 + $0x104] sm:$0xf]
        %v3775 = vld [vmem:[%s7 + $0x108] sm:$0xff]
        %v3776 = vld [vmem:[%s7 + $0x110] sm:$0xf]
        %v3777 = vld [vmem:[%s7 + $0x114] sm:$0xff]
        %v3778 = vld [vmem:[%s7 + $0x11c] sm:$0xf]
        %v3779 = vld [vmem:[%s7 + $0x120] sm:$0xff]
        %v3780 = vld [vmem:[%s7 + $0x128] sm:$0xf]
        %v3781 = vld [vmem:[%s7 + $0x12c] sm:$0xff]
        %v3782 = vld [vmem:[%s7 + $0x134] sm:$0xf]
        %v3783 = vld [vmem:[%s7 + $0x138] sm:$0xff]
        %v3784 = vld [vmem:[%s7 + $0x140] sm:$0xf]
        %v3785 = vld [vmem:[%s7 + $0x144] sm:$0xff]
        %v3786 = vld [vmem:[%s7 + $0x14c] sm:$0xf]
        %v3787 = vld [vmem:[%s7 + $0x150] sm:$0xff]
        %v3788 = vld [vmem:[%s7 + $0x158] sm:$0xf]
        %v3789 = vld [vmem:[%s7 + $0x15c] sm:$0xff]
        %v3790 = vld [vmem:[%s7 + $0x164] sm:$0xf]
        %v3791 = vld [vmem:[%s7 + $0x168] sm:$0xff]
        %v3792 = vld [vmem:[%s7 + $0x170] sm:$0xf]
        %v3793 = vld [vmem:[%s7 + $0x174] sm:$0xff]
        %v3794 = vld [vmem:[%s7 + $0x17c] sm:$0xf]
        %v3795 = vld [vmem:[%s7 + $0x180] sm:$0xff]
        %v3796 = vld [vmem:[%s7 + $0x188] sm:$0xf]
        %v3797 = vld [vmem:[%s7 + $0x18c] sm:$0xff]
        %v3798 = vld [vmem:[%s7 + $0x194] sm:$0xf]
        %v3799 = vld [vmem:[%s7 + $0x198] sm:$0xff]
        %v3800 = vld [vmem:[%s7 + $0x1a0] sm:$0xf]
        %v3801 = vld [vmem:[%s7 + $0x1a4] sm:$0xff]
        %v3802 = vld [vmem:[%s7 + $0x1ac] sm:$0xf]
        %v3803 = vld [vmem:[%s7 + $0x1b0] sm:$0xff]
        %v3804 = vld [vmem:[%s7 + $0x1b8] sm:$0xf]
        %v3805 = vld [vmem:[%s7 + $0x1bc] sm:$0xff]
        %v3806 = vld [vmem:[%s7 + $0x1c4] sm:$0xf]
        %v3807 = vld [vmem:[%s7 + $0x1c8] sm:$0xff]
        %v3808 = vld [vmem:[%s7 + $0x1d0] sm:$0xf]
        %v3809 = vld [vmem:[%s7 + $0x1d4] sm:$0xff]
        %v3810 = vld [vmem:[%s7 + $0x1dc] sm:$0xf]
        %v3811 = vld [vmem:[%s7 + $0x1e0] sm:$0xff]
        %v3812 = vld [vmem:[%s7 + $0x1e8] sm:$0xf]
        %v3813 = vld [vmem:[%s7 + $0x1ec] sm:$0xff]
        %v3814 = vld [vmem:[%s7 + $0x1f4] sm:$0xf]
        %v3815 = vld [vmem:[%s7 + $0x1f8] sm:$0xff]
        %v3816 = vld [vmem:[%s7 + $0x200] sm:$0xf]
        %v3817 = vld [vmem:[%s7 + $0x204] sm:$0xff]
        %v3818 = vld [vmem:[%s7 + $0x20c] sm:$0xf]
        %v3819 = vld [vmem:[%s7 + $0x210] sm:$0xff]
        %v3820 = vld [vmem:[%s7 + $0x218] sm:$0xf]
        %v3821 = vld [vmem:[%s7 + $0x21c] sm:$0xff]
        %v3822 = vld [vmem:[%s7 + $0x224] sm:$0xf]
        %v3823 = vld [vmem:[%s7 + $0x228] sm:$0xff]
        %v3824 = vld [vmem:[%s7 + $0x230] sm:$0xf]
        %v3825 = vld [vmem:[%s7 + $0x234] sm:$0xff]
        %v3826 = vld [vmem:[%s7 + $0x23c] sm:$0xf]
        %v3827 = vld [vmem:[%s8] sm:$0x7]
        %v3924 = vunpack.c.l.b16 %v3731
        %v3925 = vunpack.c.h.b16 %v3731
        %v3926 = vunpack.c.l.b16 %v3732
        %v3927 = vunpack.c.l.b16 %v3733
        %v3928 = vunpack.c.h.b16 %v3733
        %v3929 = vunpack.c.l.b16 %v3734
        %v3930 = vunpack.c.l.b16 %v3735
        %v3931 = vunpack.c.h.b16 %v3735
        %v3932 = vunpack.c.l.b16 %v3736
        %v3933 = vunpack.c.l.b16 %v3737
        %v3934 = vunpack.c.h.b16 %v3737
        %v3935 = vunpack.c.l.b16 %v3738
        %v3936 = vunpack.c.l.b16 %v3739
        %v3937 = vunpack.c.h.b16 %v3739
        %v3938 = vunpack.c.l.b16 %v3740
        %v3939 = vunpack.c.l.b16 %v3741
        %v3940 = vunpack.c.h.b16 %v3741
        %v3941 = vunpack.c.l.b16 %v3742
        %v3942 = vunpack.c.l.b16 %v3743
        %v3943 = vunpack.c.h.b16 %v3743
        %v3944 = vunpack.c.l.b16 %v3744
        %v3945 = vunpack.c.l.b16 %v3745
        %v3946 = vunpack.c.h.b16 %v3745
        %v3947 = vunpack.c.l.b16 %v3746
        %v3948 = vunpack.c.l.b16 %v3747
        %v3949 = vunpack.c.h.b16 %v3747
        %v3950 = vunpack.c.l.b16 %v3748
        %v3951 = vunpack.c.l.b16 %v3749
        %v3952 = vunpack.c.h.b16 %v3749
        %v3953 = vunpack.c.l.b16 %v3750
        %v3954 = vunpack.c.l.b16 %v3751
        %v3955 = vunpack.c.h.b16 %v3751
        %v3956 = vunpack.c.l.b16 %v3752
        %v3957 = vunpack.c.l.b16 %v3753
        %v3958 = vunpack.c.h.b16 %v3753
        %v3959 = vunpack.c.l.b16 %v3754
        %v3960 = vunpack.c.l.b16 %v3755
        %v3961 = vunpack.c.h.b16 %v3755
        %v3962 = vunpack.c.l.b16 %v3756
        %v3963 = vunpack.c.l.b16 %v3757
        %v3964 = vunpack.c.h.b16 %v3757
        %v3965 = vunpack.c.l.b16 %v3758
        %v3966 = vunpack.c.l.b16 %v3759
        %v3967 = vunpack.c.h.b16 %v3759
        %v3968 = vunpack.c.l.b16 %v3760
        %v3969 = vunpack.c.l.b16 %v3761
        %v3970 = vunpack.c.h.b16 %v3761
        %v3971 = vunpack.c.l.b16 %v3762
        %v3972 = vunpack.c.l.b16 %v3763
        %v3973 = vunpack.c.h.b16 %v3763
        %v3974 = vunpack.c.l.b16 %v3764
        %v3975 = vunpack.c.l.b16 %v3765
        %v3976 = vunpack.c.h.b16 %v3765
        %v3977 = vunpack.c.l.b16 %v3766
        %v3978 = vunpack.c.l.b16 %v3767
        %v3979 = vunpack.c.h.b16 %v3767
        %v3980 = vunpack.c.l.b16 %v3768
        %v3981 = vunpack.c.l.b16 %v3769
        %v3982 = vunpack.c.h.b16 %v3769
        %v3983 = vunpack.c.l.b16 %v3770
        %v3984 = vunpack.c.l.b16 %v3771
        %v3985 = vunpack.c.h.b16 %v3771
        %v3986 = vunpack.c.l.b16 %v3772
        %v3987 = vunpack.c.l.b16 %v3773
        %v3988 = vunpack.c.h.b16 %v3773
        %v3989 = vunpack.c.l.b16 %v3774
        %v3990 = vunpack.c.l.b16 %v3775
        %v3991 = vunpack.c.h.b16 %v3775
        %v3992 = vunpack.c.l.b16 %v3776
        %v3993 = vunpack.c.l.b16 %v3777
        %v3994 = vunpack.c.h.b16 %v3777
        %v3995 = vunpack.c.l.b16 %v3778
        %v3996 = vunpack.c.l.b16 %v3779
        %v3997 = vunpack.c.h.b16 %v3779
        %v3998 = vunpack.c.l.b16 %v3780
        %v3999 = vunpack.c.l.b16 %v3781
        %v4000 = vunpack.c.h.b16 %v3781
        %v4001 = vunpack.c.l.b16 %v3782
        %v4002 = vunpack.c.l.b16 %v3783
        %v4003 = vunpack.c.h.b16 %v3783
        %v4004 = vunpack.c.l.b16 %v3784
        %v4005 = vunpack.c.l.b16 %v3785
        %v4006 = vunpack.c.h.b16 %v3785
        %v4007 = vunpack.c.l.b16 %v3786
        %v4008 = vunpack.c.l.b16 %v3787
        %v4009 = vunpack.c.h.b16 %v3787
        %v4010 = vunpack.c.l.b16 %v3788
        %v4011 = vunpack.c.l.b16 %v3789
        %v4012 = vunpack.c.h.b16 %v3789
        %v4013 = vunpack.c.l.b16 %v3790
        %v4014 = vunpack.c.l.b16 %v3791
        %v4015 = vunpack.c.h.b16 %v3791
        %v4016 = vunpack.c.l.b16 %v3792
        %v4017 = vunpack.c.l.b16 %v3793
        %v4018 = vunpack.c.h.b16 %v3793
        %v4019 = vunpack.c.l.b16 %v3794
        %v4020 = vunpack.c.l.b16 %v3795
        %v4021 = vunpack.c.h.b16 %v3795
        %v4022 = vunpack.c.l.b16 %v3796
        %v4023 = vunpack.c.l.b16 %v3797
        %v4024 = vunpack.c.h.b16 %v3797
        %v4025 = vunpack.c.l.b16 %v3798
        %v4026 = vunpack.c.l.b16 %v3799
        %v4027 = vunpack.c.h.b16 %v3799
        %v4028 = vunpack.c.l.b16 %v3800
        %v4029 = vunpack.c.l.b16 %v3801
        %v4030 = vunpack.c.h.b16 %v3801
        %v4031 = vunpack.c.l.b16 %v3802
        %v4032 = vunpack.c.l.b16 %v3803
        %v4033 = vunpack.c.h.b16 %v3803
        %v4034 = vunpack.c.l.b16 %v3804
        %v4035 = vunpack.c.l.b16 %v3805
        %v4036 = vunpack.c.h.b16 %v3805
        %v4037 = vunpack.c.l.b16 %v3806
        %v4038 = vunpack.c.l.b16 %v3807
        %v4039 = vunpack.c.h.b16 %v3807
        %v4040 = vunpack.c.l.b16 %v3808
        %v4041 = vunpack.c.l.b16 %v3809
        %v4042 = vunpack.c.h.b16 %v3809
        %v4043 = vunpack.c.l.b16 %v3810
        %v4044 = vunpack.c.l.b16 %v3811
        %v4045 = vunpack.c.h.b16 %v3811
        %v4046 = vunpack.c.l.b16 %v3812
        %v4047 = vunpack.c.l.b16 %v3813
        %v4048 = vunpack.c.h.b16 %v3813
        %v4049 = vunpack.c.l.b16 %v3814
        %v4050 = vunpack.c.l.b16 %v3815
        %v4051 = vunpack.c.h.b16 %v3815
        %v4052 = vunpack.c.l.b16 %v3816
        %v4053 = vunpack.c.l.b16 %v3817
        %v4054 = vunpack.c.h.b16 %v3817
        %v4055 = vunpack.c.l.b16 %v3818
        %v4056 = vunpack.c.l.b16 %v3819
        %v4057 = vunpack.c.h.b16 %v3819
        %v4058 = vunpack.c.l.b16 %v3820
        %v4059 = vunpack.c.l.b16 %v3821
        %v4060 = vunpack.c.h.b16 %v3821
        %v4061 = vunpack.c.l.b16 %v3822
        %v4062 = vunpack.c.l.b16 %v3823
        %v4063 = vunpack.c.h.b16 %v3823
        %v4064 = vunpack.c.l.b16 %v3824
        %v4065 = vunpack.c.l.b16 %v3825
        %v4066 = vunpack.c.h.b16 %v3825
        %v4067 = vunpack.c.l.b16 %v3826
        %v4068 = vpack.c.b16 %v3927, %v3924
        %v4069 = vpack.c.b16 %v3928, %v3925
        %v4070 = vpack.c.b16 %v3929, %v3926
        %v4071 = vpack.c.b16 %v3933, %v3930
        %v4072 = vpack.c.b16 %v3934, %v3931
        %v4073 = vpack.c.b16 %v3935, %v3932
        %v4074 = vpack.c.b16 %v3939, %v3936
        %v4075 = vpack.c.b16 %v3940, %v3937
        %v4076 = vpack.c.b16 %v3941, %v3938
        %v4077 = vpack.c.b16 %v3945, %v3942
        %v4078 = vpack.c.b16 %v3946, %v3943
        %v4079 = vpack.c.b16 %v3947, %v3944
        %v4080 = vpack.c.b16 %v3951, %v3948
        %v4081 = vpack.c.b16 %v3952, %v3949
        %v4082 = vpack.c.b16 %v3953, %v3950
        %v4083 = vpack.c.b16 %v3957, %v3954
        %v4084 = vpack.c.b16 %v3958, %v3955
        %v4085 = vpack.c.b16 %v3959, %v3956
        %v4086 = vpack.c.b16 %v3963, %v3960
        %v4087 = vpack.c.b16 %v3964, %v3961
        %v4088 = vpack.c.b16 %v3965, %v3962
        %v4089 = vpack.c.b16 %v3969, %v3966
        %v4090 = vpack.c.b16 %v3970, %v3967
        %v4091 = vpack.c.b16 %v3971, %v3968
        %v4092 = vpack.c.b16 %v3975, %v3972
        %v4093 = vpack.c.b16 %v3976, %v3973
        %v4094 = vpack.c.b16 %v3977, %v3974
        %v4095 = vpack.c.b16 %v3981, %v3978
        %v4096 = vpack.c.b16 %v3982, %v3979
        %v4097 = vpack.c.b16 %v3983, %v3980
        %v4098 = vpack.c.b16 %v3987, %v3984
        %v4099 = vpack.c.b16 %v3988, %v3985
        %v4100 = vpack.c.b16 %v3989, %v3986
        %v4101 = vpack.c.b16 %v3993, %v3990
        %v4102 = vpack.c.b16 %v3994, %v3991
        %v4103 = vpack.c.b16 %v3995, %v3992
        %v4104 = vpack.c.b16 %v3999, %v3996
        %v4105 = vpack.c.b16 %v4000, %v3997
        %v4106 = vpack.c.b16 %v4001, %v3998
        %v4107 = vpack.c.b16 %v4005, %v4002
        %v4108 = vpack.c.b16 %v4006, %v4003
        %v4109 = vpack.c.b16 %v4007, %v4004
        %v4110 = vpack.c.b16 %v4011, %v4008
        %v4111 = vpack.c.b16 %v4012, %v4009
        %v4112 = vpack.c.b16 %v4013, %v4010
        %v4113 = vpack.c.b16 %v4017, %v4014
        %v4114 = vpack.c.b16 %v4018, %v4015
        %v4115 = vpack.c.b16 %v4019, %v4016
        %v4116 = vpack.c.b16 %v4023, %v4020
        %v4117 = vpack.c.b16 %v4024, %v4021
        %v4118 = vpack.c.b16 %v4025, %v4022
        %v4119 = vpack.c.b16 %v4029, %v4026
        %v4120 = vpack.c.b16 %v4030, %v4027
        %v4121 = vpack.c.b16 %v4031, %v4028
        %v4122 = vpack.c.b16 %v4035, %v4032
        %v4123 = vpack.c.b16 %v4036, %v4033
        %v4124 = vpack.c.b16 %v4037, %v4034
        %v4125 = vpack.c.b16 %v4041, %v4038
        %v4126 = vpack.c.b16 %v4042, %v4039
        %v4127 = vpack.c.b16 %v4043, %v4040
        %v4128 = vpack.c.b16 %v4047, %v4044
        %v4129 = vpack.c.b16 %v4048, %v4045
        %v4130 = vpack.c.b16 %v4049, %v4046
        %v4131 = vpack.c.b16 %v4053, %v4050
        %v4132 = vpack.c.b16 %v4054, %v4051
        %v4133 = vpack.c.b16 %v4055, %v4052
        %v4134 = vpack.c.b16 %v4059, %v4056
        %v4135 = vpack.c.b16 %v4060, %v4057
        %v4136 = vpack.c.b16 %v4061, %v4058
        %v4137 = vpack.c.b16 %v4065, %v4062
        %v4138 = vpack.c.b16 %v4066, %v4063
        %v4139 = vpack.c.b16 %v4067, %v4064
        %v4213 = vlaneseq
        %v4214 = vshrl.u32 %v4213, 7
        %v4215 = vsub.s32 0, %v4214
        %v4216 = vrot.slane %v3827, %v4215
        %v4217 = vlaneseq
        %v4218 = vshrl.u32 %v4217, 7
        %v4219 = vsub.s32 1, %v4218
        %v4220 = vrot.slane %v3827, %v4219
        %v4221 = vlaneseq
        %v4222 = vshrl.u32 %v4221, 7
        %v4223 = vsub.s32 2, %v4222
        %v4224 = vrot.slane %v3827, %v4223
        %4228 = vmatprep.subr.bf16.mxu0 %v4090
        %4229 = vmatpush1.bf16.msra.mxu0 %v4089
        %4230 = vmatprep.subr.bf16.mxu0 %v4087
        %4231 = vmatpush1.bf16.msra.mxu0 %v4086
        %4232 = vmatprep.subr.bf16.mxu0 %v4084
        %4233 = vmatpush1.bf16.msra.mxu0 %v4083
        %4234 = vmatprep.subr.bf16.mxu0 %v4081
        %4235 = vmatpush1.bf16.msra.mxu0 %v4080
        %4236 = vmatprep.subr.bf16.mxu0 %v4078
        %4237 = vmatpush1.bf16.msra.mxu0 %v4077
        %4238 = vmatprep.subr.bf16.mxu0 %v4075
        %4239 = vmatpush1.bf16.msra.mxu0 %v4074
        %4240 = vmatprep.subr.bf16.mxu0 %v4072
        %4241 = vmatpush1.bf16.msra.mxu0 %v4071
        %4242 = vmatprep.subr.bf16.mxu0 %v4069
        %4243 = vmatpush1.bf16.msra.mxu0 %v4068
        %4244 = vmatprep.subr.bf16.mxu0 %v4114
        %4245 = vmatpush2.bf16.msra.mxu0 %v4113
        %4246 = vmatprep.subr.bf16.mxu0 %v4111
        %4247 = vmatpush2.bf16.msra.mxu0 %v4110
        %4248 = vmatprep.subr.bf16.mxu0 %v4108
        %4249 = vmatpush2.bf16.msra.mxu0 %v4107
        %4250 = vmatprep.subr.bf16.mxu0 %v4105
        %4251 = vmatpush2.bf16.msra.mxu0 %v4104
        %4252 = vmatprep.subr.bf16.mxu0 %v4102
        %4253 = vmatpush2.bf16.msra.mxu0 %v4101
        %4254 = vmatprep.subr.bf16.mxu0 %v4099
        %4255 = vmatpush2.bf16.msra.mxu0 %v4098
        %4256 = vmatprep.subr.bf16.mxu0 %v4096
        %4257 = vmatpush2.bf16.msra.mxu0 %v4095
        %4258 = vmatprep.subr.bf16.mxu0 %v4093
        %4259 = vmatpush2.bf16.msra.mxu0 %v4092
        %4260 = vmatprep.mubr.bf16.mxu0 %v3729
        %4261 = vmatmul.mubr.bf16.gmra.mxu0 %v3728
        %v4262 = vpop.f32.mrf.mxu0
        %v4263 = vadd.f32 %v4216, %v4262
        %v4264 = vpop.f32.mrf.mxu0
        %v4265 = vadd.f32 %v4220, %v4264
        %v4266 = vpop.f32.mrf.mxu0
        %v4267 = vpop.f32.mrf.mxu0
        %4268 = vdwg.mxu0
        %4269 = vmatprep.subr.bf16.mxu0 %v4138
        %4270 = vmatpush1.bf16.msra.mxu0 %v4137
        %4271 = vmatprep.subr.bf16.mxu0 %v4135
        %4272 = vmatpush1.bf16.msra.mxu0 %v4134
        %4273 = vmatprep.subr.bf16.mxu0 %v4132
        %4274 = vmatpush1.bf16.msra.mxu0 %v4131
        %4275 = vmatprep.subr.bf16.mxu0 %v4129
        %4276 = vmatpush1.bf16.msra.mxu0 %v4128
        %4277 = vmatprep.subr.bf16.mxu0 %v4126
        %4278 = vmatpush1.bf16.msra.mxu0 %v4125
        %4279 = vmatprep.subr.bf16.mxu0 %v4123
        %4280 = vmatpush1.bf16.msra.mxu0 %v4122
        %4281 = vmatprep.subr.bf16.mxu0 %v4120
        %4282 = vmatpush1.bf16.msra.mxu0 %v4119
        %4283 = vmatprep.subr.bf16.mxu0 %v4117
        %4284 = vmatpush1.bf16.msra.mxu0 %v4116
        %4285 = vmatprep.subr.bf16.mxu0 0
        %4286 = vmatpush2.bf16.msra.mxu0 0
        %4287 = vmatprep.subr.bf16.mxu0 0
        %4288 = vmatpush2.bf16.msra.mxu0 0
        %4289 = vmatprep.subr.bf16.mxu0 0
        %4290 = vmatpush2.bf16.msra.mxu0 0
        %4291 = vmatprep.subr.bf16.mxu0 0
        %4292 = vmatpush2.bf16.msra.mxu0 0
        %4293 = vmatprep.subr.bf16.mxu0 0
        %4294 = vmatpush2.bf16.msra.mxu0 0
        %4295 = vmatprep.subr.bf16.mxu0 0
        %4296 = vmatpush2.bf16.msra.mxu0 0
        %4297 = vmatprep.subr.bf16.mxu0 0
        %4298 = vmatpush2.bf16.msra.mxu0 0
        %4299 = vmatprep.subr.bf16.mxu0 0
        %4300 = vmatpush2.bf16.msra.mxu0 0
        %4301 = vmatprep.mubr.bf16.mxu0 0
        %4302 = vmatmul.mubr.bf16.gmra.mxu0 %v3730
        %v4303 = vpop.f32.mrf.mxu0
        %v4304 = vadd.f32 %v4263, %v4303
        %v4305 = vpop.f32.mrf.mxu0
        %v4306 = vadd.f32 %v4265, %v4305
        %v4307 = vpop.f32.mrf.mxu0
        %v4308 = vpop.f32.mrf.mxu0
        %4309 = vdwg.mxu0
        %4310 = vmatprep.subr.bf16.mxu0 0
        %4311 = vmatpush1.bf16.msra.mxu0 %v4091
        %4312 = vmatprep.subr.bf16.mxu0 0
        %4313 = vmatpush1.bf16.msra.mxu0 %v4088
        %4314 = vmatprep.subr.bf16.mxu0 0
        %4315 = vmatpush1.bf16.msra.mxu0 %v4085
        %4316 = vmatprep.subr.bf16.mxu0 0
        %4317 = vmatpush1.bf16.msra.mxu0 %v4082
        %4318 = vmatprep.subr.bf16.mxu0 0
        %4319 = vmatpush1.bf16.msra.mxu0 %v4079
        %4320 = vmatprep.subr.bf16.mxu0 0
        %4321 = vmatpush1.bf16.msra.mxu0 %v4076
        %4322 = vmatprep.subr.bf16.mxu0 0
        %4323 = vmatpush1.bf16.msra.mxu0 %v4073
        %4324 = vmatprep.subr.bf16.mxu0 0
        %4325 = vmatpush1.bf16.msra.mxu0 %v4070
        %4326 = vmatprep.subr.bf16.mxu0 0
        %4327 = vmatpush2.bf16.msra.mxu0 %v4115
        %4328 = vmatprep.subr.bf16.mxu0 0
        %4329 = vmatpush2.bf16.msra.mxu0 %v4112
        %4330 = vmatprep.subr.bf16.mxu0 0
        %4331 = vmatpush2.bf16.msra.mxu0 %v4109
        %4332 = vmatprep.subr.bf16.mxu0 0
        %4333 = vmatpush2.bf16.msra.mxu0 %v4106
        %4334 = vmatprep.subr.bf16.mxu0 0
        %4335 = vmatpush2.bf16.msra.mxu0 %v4103
        %4336 = vmatprep.subr.bf16.mxu0 0
        %4337 = vmatpush2.bf16.msra.mxu0 %v4100
        %4338 = vmatprep.subr.bf16.mxu0 0
        %4339 = vmatpush2.bf16.msra.mxu0 %v4097
        %4340 = vmatprep.subr.bf16.mxu0 0
        %4341 = vmatpush2.bf16.msra.mxu0 %v4094
        %4342 = vmatprep.mubr.bf16.mxu0 %v3729
        %4343 = vmatmul.mubr.bf16.gmra.mxu0 %v3728
        %v4344 = vpop.f32.mrf.mxu0
        %v4345 = vadd.f32 %v4224, %v4344
        %v4346 = vpop.f32.mrf.mxu0
        %v4347 = vpop.f32.mrf.mxu0
        %v4348 = vpop.f32.mrf.mxu0
        %4349 = vdwg.mxu0
        %4350 = vmatprep.subr.bf16.mxu0 0
        %4351 = vmatpush1.bf16.msra.mxu0 %v4139
        %4352 = vmatprep.subr.bf16.mxu0 0
        %4353 = vmatpush1.bf16.msra.mxu0 %v4136
        %4354 = vmatprep.subr.bf16.mxu0 0
        %4355 = vmatpush1.bf16.msra.mxu0 %v4133
        %4356 = vmatprep.subr.bf16.mxu0 0
        %4357 = vmatpush1.bf16.msra.mxu0 %v4130
        %4358 = vmatprep.subr.bf16.mxu0 0
        %4359 = vmatpush1.bf16.msra.mxu0 %v4127
        %4360 = vmatprep.subr.bf16.mxu0 0
        %4361 = vmatpush1.bf16.msra.mxu0 %v4124
        %4362 = vmatprep.subr.bf16.mxu0 0
        %4363 = vmatpush1.bf16.msra.mxu0 %v4121
        %4364 = vmatprep.subr.bf16.mxu0 0
        %4365 = vmatpush1.bf16.msra.mxu0 %v4118
        %4366 = vmatprep.subr.bf16.mxu0 0
        %4367 = vmatpush2.bf16.msra.mxu0 0
        %4368 = vmatprep.subr.bf16.mxu0 0
        %4369 = vmatpush2.bf16.msra.mxu0 0
        %4370 = vmatprep.subr.bf16.mxu0 0
        %4371 = vmatpush2.bf16.msra.mxu0 0
        %4372 = vmatprep.subr.bf16.mxu0 0
        %4373 = vmatpush2.bf16.msra.mxu0 0
        %4374 = vmatprep.subr.bf16.mxu0 0
        %4375 = vmatpush2.bf16.msra.mxu0 0
        %4376 = vmatprep.subr.bf16.mxu0 0
        %4377 = vmatpush2.bf16.msra.mxu0 0
        %4378 = vmatprep.subr.bf16.mxu0 0
        %4379 = vmatpush2.bf16.msra.mxu0 0
        %4380 = vmatprep.subr.bf16.mxu0 0
        %4381 = vmatpush2.bf16.msra.mxu0 0
        %4382 = vmatprep.mubr.bf16.mxu0 0
        %4383 = vmatmul.mubr.bf16.gmra.mxu0 %v3730
        %v4384 = vpop.f32.mrf.mxu0
        %v4385 = vadd.f32 %v4345, %v4384
        %v4386 = vpop.f32.mrf.mxu0
        %v4387 = vpop.f32.mrf.mxu0
        %v4388 = vpop.f32.mrf.mxu0
        %4389 = vdwg.mxu0
        %v4390 = vmax.f32 %v4304, 0.0
        %v4391 = vmax.f32 %v4306, 0.0
        %v4392 = vmax.f32 %v4385, 0.0
        %v4393 = vpack.c.bf16 %v4390, %v4390
        %v4394 = vpack.c.bf16 %v4391, %v4391
        %v4395 = vpack.c.bf16 %v4392, %v4392
        %v4396 = vld [vmem:[%s9] sm:$0xff]
        %v4397 = vld [vmem:[%s9 + $0x8] sm:$0xff]
        %v4398 = vld [vmem:[%s9 + $0x10] sm:$0xff]
        %v4399 = vld [vmem:[%s9 + $0x18] sm:$0xff]
        %v4400 = vld [vmem:[%s9 + $0x20] sm:$0xff]
        %v4401 = vld [vmem:[%s9 + $0x28] sm:$0xff]
        %v4402 = vld [vmem:[%s9 + $0x30] sm:$0xff]
        %v4403 = vld [vmem:[%s9 + $0x38] sm:$0xff]
        %v4404 = vld [vmem:[%s9 + $0x40] sm:$0xff]
        %v4405 = vld [vmem:[%s9 + $0x48] sm:$0xff]
        %v4406 = vld [vmem:[%s9 + $0x50] sm:$0xff]
        %v4407 = vld [vmem:[%s9 + $0x58] sm:$0xff]
        %v4408 = vld [vmem:[%s9 + $0x60] sm:$0xff]
        %v4409 = vld [vmem:[%s9 + $0x68] sm:$0xff]
        %v4410 = vld [vmem:[%s9 + $0x70] sm:$0xff]
        %v4411 = vld [vmem:[%s9 + $0x78] sm:$0xff]
        %v4412 = vld [vmem:[%s9 + $0x80] sm:$0xff]
        %v4413 = vld [vmem:[%s9 + $0x88] sm:$0xff]
        %v4414 = vld [vmem:[%s9 + $0x90] sm:$0xff]
        %v4415 = vld [vmem:[%s9 + $0x98] sm:$0xff]
        %v4416 = vld [vmem:[%s9 + $0xa0] sm:$0xff]
        %v4417 = vld [vmem:[%s9 + $0xa8] sm:$0xff]
        %v4418 = vld [vmem:[%s9 + $0xb0] sm:$0xff]
        %v4419 = vld [vmem:[%s9 + $0xb8] sm:$0xff]
        %v4420 = vld [vmem:[%s9 + $0xc0] sm:$0xff]
        %v4421 = vld [vmem:[%s9 + $0xc8] sm:$0xff]
        %v4422 = vld [vmem:[%s9 + $0xd0] sm:$0xff]
        %v4423 = vld [vmem:[%s9 + $0xd8] sm:$0xff]
        %v4424 = vld [vmem:[%s9 + $0xe0] sm:$0xff]
        %v4425 = vld [vmem:[%s9 + $0xe8] sm:$0xff]
        %v4426 = vld [vmem:[%s9 + $0xf0] sm:$0xff]
        %v4427 = vld [vmem:[%s9 + $0xf8] sm:$0xff]
        %v4428 = vld [vmem:[%s9 + $0x100] sm:$0xff]
        %v4429 = vld [vmem:[%s9 + $0x108] sm:$0xff]
        %v4430 = vld [vmem:[%s9 + $0x110] sm:$0xff]
        %v4431 = vld [vmem:[%s9 + $0x118] sm:$0xff]
        %v4432 = vld [vmem:[%s9 + $0x120] sm:$0xff]
        %v4433 = vld [vmem:[%s9 + $0x128] sm:$0xff]
        %v4434 = vld [vmem:[%s9 + $0x130] sm:$0xff]
        %v4435 = vld [vmem:[%s9 + $0x138] sm:$0xff]
        %v4436 = vld [vmem:[%s9 + $0x140] sm:$0xff]
        %v4437 = vld [vmem:[%s9 + $0x148] sm:$0xff]
        %v4438 = vld [vmem:[%s9 + $0x150] sm:$0xff]
        %v4439 = vld [vmem:[%s9 + $0x158] sm:$0xff]
        %v4440 = vld [vmem:[%s9 + $0x160] sm:$0xff]
        %v4441 = vld [vmem:[%s9 + $0x168] sm:$0xff]
        %v4442 = vld [vmem:[%s9 + $0x170] sm:$0xff]
        %v4443 = vld [vmem:[%s9 + $0x178] sm:$0xff]
        %v4444 = vld [vmem:[%s10] sm:$0x3]
        %v4493 = vunpack.c.l.b16 %v4396
        %v4494 = vunpack.c.h.b16 %v4396
        %v4495 = vunpack.c.l.b16 %v4397
        %v4496 = vunpack.c.h.b16 %v4397
        %v4497 = vunpack.c.l.b16 %v4398
        %v4498 = vunpack.c.h.b16 %v4398
        %v4499 = vunpack.c.l.b16 %v4399
        %v4500 = vunpack.c.h.b16 %v4399
        %v4501 = vunpack.c.l.b16 %v4400
        %v4502 = vunpack.c.h.b16 %v4400
        %v4503 = vunpack.c.l.b16 %v4401
        %v4504 = vunpack.c.h.b16 %v4401
        %v4505 = vunpack.c.l.b16 %v4402
        %v4506 = vunpack.c.h.b16 %v4402
        %v4507 = vunpack.c.l.b16 %v4403
        %v4508 = vunpack.c.h.b16 %v4403
        %v4509 = vunpack.c.l.b16 %v4404
        %v4510 = vunpack.c.h.b16 %v4404
        %v4511 = vunpack.c.l.b16 %v4405
        %v4512 = vunpack.c.h.b16 %v4405
        %v4513 = vunpack.c.l.b16 %v4406
        %v4514 = vunpack.c.h.b16 %v4406
        %v4515 = vunpack.c.l.b16 %v4407
        %v4516 = vunpack.c.h.b16 %v4407
        %v4517 = vunpack.c.l.b16 %v4408
        %v4518 = vunpack.c.h.b16 %v4408
        %v4519 = vunpack.c.l.b16 %v4409
        %v4520 = vunpack.c.h.b16 %v4409
        %v4521 = vunpack.c.l.b16 %v4410
        %v4522 = vunpack.c.h.b16 %v4410
        %v4523 = vunpack.c.l.b16 %v4411
        %v4524 = vunpack.c.h.b16 %v4411
        %v4525 = vunpack.c.l.b16 %v4412
        %v4526 = vunpack.c.h.b16 %v4412
        %v4527 = vunpack.c.l.b16 %v4413
        %v4528 = vunpack.c.h.b16 %v4413
        %v4529 = vunpack.c.l.b16 %v4414
        %v4530 = vunpack.c.h.b16 %v4414
        %v4531 = vunpack.c.l.b16 %v4415
        %v4532 = vunpack.c.h.b16 %v4415
        %v4533 = vunpack.c.l.b16 %v4416
        %v4534 = vunpack.c.h.b16 %v4416
        %v4535 = vunpack.c.l.b16 %v4417
        %v4536 = vunpack.c.h.b16 %v4417
        %v4537 = vunpack.c.l.b16 %v4418
        %v4538 = vunpack.c.h.b16 %v4418
        %v4539 = vunpack.c.l.b16 %v4419
        %v4540 = vunpack.c.h.b16 %v4419
        %v4541 = vunpack.c.l.b16 %v4420
        %v4542 = vunpack.c.h.b16 %v4420
        %v4543 = vunpack.c.l.b16 %v4421
        %v4544 = vunpack.c.h.b16 %v4421
        %v4545 = vunpack.c.l.b16 %v4422
        %v4546 = vunpack.c.h.b16 %v4422
        %v4547 = vunpack.c.l.b16 %v4423
        %v4548 = vunpack.c.h.b16 %v4423
        %v4549 = vunpack.c.l.b16 %v4424
        %v4550 = vunpack.c.h.b16 %v4424
        %v4551 = vunpack.c.l.b16 %v4425
        %v4552 = vunpack.c.h.b16 %v4425
        %v4553 = vunpack.c.l.b16 %v4426
        %v4554 = vunpack.c.h.b16 %v4426
        %v4555 = vunpack.c.l.b16 %v4427
        %v4556 = vunpack.c.h.b16 %v4427
        %v4557 = vunpack.c.l.b16 %v4428
        %v4558 = vunpack.c.h.b16 %v4428
        %v4559 = vunpack.c.l.b16 %v4429
        %v4560 = vunpack.c.h.b16 %v4429
        %v4561 = vunpack.c.l.b16 %v4430
        %v4562 = vunpack.c.h.b16 %v4430
        %v4563 = vunpack.c.l.b16 %v4431
        %v4564 = vunpack.c.h.b16 %v4431
        %v4565 = vunpack.c.l.b16 %v4432
        %v4566 = vunpack.c.h.b16 %v4432
        %v4567 = vunpack.c.l.b16 %v4433
        %v4568 = vunpack.c.h.b16 %v4433
        %v4569 = vunpack.c.l.b16 %v4434
        %v4570 = vunpack.c.h.b16 %v4434
        %v4571 = vunpack.c.l.b16 %v4435
        %v4572 = vunpack.c.h.b16 %v4435
        %v4573 = vunpack.c.l.b16 %v4436
        %v4574 = vunpack.c.h.b16 %v4436
        %v4575 = vunpack.c.l.b16 %v4437
        %v4576 = vunpack.c.h.b16 %v4437
        %v4577 = vunpack.c.l.b16 %v4438
        %v4578 = vunpack.c.h.b16 %v4438
        %v4579 = vunpack.c.l.b16 %v4439
        %v4580 = vunpack.c.h.b16 %v4439
        %v4581 = vunpack.c.l.b16 %v4440
        %v4582 = vunpack.c.h.b16 %v4440
        %v4583 = vunpack.c.l.b16 %v4441
        %v4584 = vunpack.c.h.b16 %v4441
        %v4585 = vunpack.c.l.b16 %v4442
        %v4586 = vunpack.c.h.b16 %v4442
        %v4587 = vunpack.c.l.b16 %v4443
        %v4588 = vunpack.c.h.b16 %v4443
        %v4589 = vpack.c.b16 %v4495, %v4493
        %v4590 = vpack.c.b16 %v4496, %v4494
        %v4591 = vpack.c.b16 %v4499, %v4497
        %v4592 = vpack.c.b16 %v4500, %v4498
        %v4593 = vpack.c.b16 %v4503, %v4501
        %v4594 = vpack.c.b16 %v4504, %v4502
        %v4595 = vpack.c.b16 %v4507, %v4505
        %v4596 = vpack.c.b16 %v4508, %v4506
        %v4597 = vpack.c.b16 %v4511, %v4509
        %v4598 = vpack.c.b16 %v4512, %v4510
        %v4599 = vpack.c.b16 %v4515, %v4513
        %v4600 = vpack.c.b16 %v4516, %v4514
        %v4601 = vpack.c.b16 %v4519, %v4517
        %v4602 = vpack.c.b16 %v4520, %v4518
        %v4603 = vpack.c.b16 %v4523, %v4521
        %v4604 = vpack.c.b16 %v4524, %v4522
        %v4605 = vpack.c.b16 %v4527, %v4525
        %v4606 = vpack.c.b16 %v4528, %v4526
        %v4607 = vpack.c.b16 %v4531, %v4529
        %v4608 = vpack.c.b16 %v4532, %v4530
        %v4609 = vpack.c.b16 %v4535, %v4533
        %v4610 = vpack.c.b16 %v4536, %v4534
        %v4611 = vpack.c.b16 %v4539, %v4537
        %v4612 = vpack.c.b16 %v4540, %v4538
        %v4613 = vpack.c.b16 %v4543, %v4541
        %v4614 = vpack.c.b16 %v4544, %v4542
        %v4615 = vpack.c.b16 %v4547, %v4545
        %v4616 = vpack.c.b16 %v4548, %v4546
        %v4617 = vpack.c.b16 %v4551, %v4549
        %v4618 = vpack.c.b16 %v4552, %v4550
        %v4619 = vpack.c.b16 %v4555, %v4553
        %v4620 = vpack.c.b16 %v4556, %v4554
        %v4621 = vpack.c.b16 %v4559, %v4557
        %v4622 = vpack.c.b16 %v4560, %v4558
        %v4623 = vpack.c.b16 %v4563, %v4561
        %v4624 = vpack.c.b16 %v4564, %v4562
        %v4625 = vpack.c.b16 %v4567, %v4565
        %v4626 = vpack.c.b16 %v4568, %v4566
        %v4627 = vpack.c.b16 %v4571, %v4569
        %v4628 = vpack.c.b16 %v4572, %v4570
        %v4629 = vpack.c.b16 %v4575, %v4573
        %v4630 = vpack.c.b16 %v4576, %v4574
        %v4631 = vpack.c.b16 %v4579, %v4577
        %v4632 = vpack.c.b16 %v4580, %v4578
        %v4633 = vpack.c.b16 %v4583, %v4581
        %v4634 = vpack.c.b16 %v4584, %v4582
        %v4635 = vpack.c.b16 %v4587, %v4585
        %v4636 = vpack.c.b16 %v4588, %v4586
        %v4686 = vlaneseq
        %v4687 = vshrl.u32 %v4686, 7
        %v4688 = vsub.s32 0, %v4687
        %v4689 = vrot.slane %v4444, %v4688
        %v4690 = vlaneseq
        %v4691 = vshrl.u32 %v4690, 7
        %v4692 = vsub.s32 1, %v4691
        %v4693 = vrot.slane %v4444, %v4692
        %4696 = vmatprep.subr.bf16.mxu0 %v4604
        %4697 = vmatpush1.bf16.msra.mxu0 %v4603
        %4698 = vmatprep.subr.bf16.mxu0 %v4602
        %4699 = vmatpush1.bf16.msra.mxu0 %v4601
        %4700 = vmatprep.subr.bf16.mxu0 %v4600
        %4701 = vmatpush1.bf16.msra.mxu0 %v4599
        %4702 = vmatprep.subr.bf16.mxu0 %v4598
        %4703 = vmatpush1.bf16.msra.mxu0 %v4597
        %4704 = vmatprep.subr.bf16.mxu0 %v4596
        %4705 = vmatpush1.bf16.msra.mxu0 %v4595
        %4706 = vmatprep.subr.bf16.mxu0 %v4594
        %4707 = vmatpush1.bf16.msra.mxu0 %v4593
        %4708 = vmatprep.subr.bf16.mxu0 %v4592
        %4709 = vmatpush1.bf16.msra.mxu0 %v4591
        %4710 = vmatprep.subr.bf16.mxu0 %v4590
        %4711 = vmatpush1.bf16.msra.mxu0 %v4589
        %4712 = vmatprep.subr.bf16.mxu0 %v4620
        %4713 = vmatpush2.bf16.msra.mxu0 %v4619
        %4714 = vmatprep.subr.bf16.mxu0 %v4618
        %4715 = vmatpush2.bf16.msra.mxu0 %v4617
        %4716 = vmatprep.subr.bf16.mxu0 %v4616
        %4717 = vmatpush2.bf16.msra.mxu0 %v4615
        %4718 = vmatprep.subr.bf16.mxu0 %v4614
        %4719 = vmatpush2.bf16.msra.mxu0 %v4613
        %4720 = vmatprep.subr.bf16.mxu0 %v4612
        %4721 = vmatpush2.bf16.msra.mxu0 %v4611
        %4722 = vmatprep.subr.bf16.mxu0 %v4610
        %4723 = vmatpush2.bf16.msra.mxu0 %v4609
        %4724 = vmatprep.subr.bf16.mxu0 %v4608
        %4725 = vmatpush2.bf16.msra.mxu0 %v4607
        %4726 = vmatprep.subr.bf16.mxu0 %v4606
        %4727 = vmatpush2.bf16.msra.mxu0 %v4605
        %4728 = vmatprep.mubr.bf16.mxu0 %v4394
        %4729 = vmatmul.mubr.bf16.gmra.mxu0 %v4393
        %v4730 = vpop.f32.mrf.mxu0
        %v4731 = vadd.f32 %v4689, %v4730
        %v4732 = vpop.f32.mrf.mxu0
        %v4733 = vadd.f32 %v4693, %v4732
        %v4734 = vpop.f32.mrf.mxu0
        %v4735 = vpop.f32.mrf.mxu0
        %4736 = vdwg.mxu0
        %4737 = vmatprep.subr.bf16.mxu0 %v4636
        %4738 = vmatpush1.bf16.msra.mxu0 %v4635
        %4739 = vmatprep.subr.bf16.mxu0 %v4634
        %4740 = vmatpush1.bf16.msra.mxu0 %v4633
        %4741 = vmatprep.subr.bf16.mxu0 %v4632
        %4742 = vmatpush1.bf16.msra.mxu0 %v4631
        %4743 = vmatprep.subr.bf16.mxu0 %v4630
        %4744 = vmatpush1.bf16.msra.mxu0 %v4629
        %4745 = vmatprep.subr.bf16.mxu0 %v4628
        %4746 = vmatpush1.bf16.msra.mxu0 %v4627
        %4747 = vmatprep.subr.bf16.mxu0 %v4626
        %4748 = vmatpush1.bf16.msra.mxu0 %v4625
        %4749 = vmatprep.subr.bf16.mxu0 %v4624
        %4750 = vmatpush1.bf16.msra.mxu0 %v4623
        %4751 = vmatprep.subr.bf16.mxu0 %v4622
        %4752 = vmatpush1.bf16.msra.mxu0 %v4621
        %4753 = vmatprep.subr.bf16.mxu0 0
        %4754 = vmatpush2.bf16.msra.mxu0 0
        %4755 = vmatprep.subr.bf16.mxu0 0
        %4756 = vmatpush2.bf16.msra.mxu0 0
        %4757 = vmatprep.subr.bf16.mxu0 0
        %4758 = vmatpush2.bf16.msra.mxu0 0
        %4759 = vmatprep.subr.bf16.mxu0 0
        %4760 = vmatpush2.bf16.msra.mxu0 0
        %4761 = vmatprep.subr.bf16.mxu0 0
        %4762 = vmatpush2.bf16.msra.mxu0 0
        %4763 = vmatprep.subr.bf16.mxu0 0
        %4764 = vmatpush2.bf16.msra.mxu0 0
        %4765 = vmatprep.subr.bf16.mxu0 0
        %4766 = vmatpush2.bf16.msra.mxu0 0
        %4767 = vmatprep.subr.bf16.mxu0 0
        %4768 = vmatpush2.bf16.msra.mxu0 0
        %4769 = vmatprep.mubr.bf16.mxu0 0
        %4770 = vmatmul.mubr.bf16.gmra.mxu0 %v4395
        %v4771 = vpop.f32.mrf.mxu0
        %v4772 = vadd.f32 %v4731, %v4771
        %v4773 = vpop.f32.mrf.mxu0
        %v4774 = vadd.f32 %v4733, %v4773
        %v4775 = vpop.f32.mrf.mxu0
        %v4776 = vpop.f32.mrf.mxu0
        %4777 = vdwg.mxu0
        %v4778 = vmax.f32 %v4772, 0.0
        %v4779 = vmax.f32 %v4774, 0.0
        %v4780 = vpack.c.bf16 %v4778, %v4778
        %v4781 = vpack.c.bf16 %v4779, %v4779
        %v4782 = vld [vmem:[%s11] sm:$0xff]
        %v4783 = vld [vmem:[%s11 + $0x8] sm:$0xff]
        %v4784 = vld [vmem:[%s11 + $0x10] sm:$0xff]
        %v4785 = vld [vmem:[%s11 + $0x18] sm:$0xff]
        %v4786 = vld [vmem:[%s11 + $0x20] sm:$0xff]
        %v4787 = vld [vmem:[%s11 + $0x28] sm:$0xff]
        %v4788 = vld [vmem:[%s11 + $0x30] sm:$0xff]
        %v4789 = vld [vmem:[%s11 + $0x38] sm:$0xff]
        %v4790 = vld [vmem:[%s11 + $0x40] sm:$0xff]
        %v4791 = vld [vmem:[%s11 + $0x48] sm:$0xff]
        %v4792 = vld [vmem:[%s11 + $0x50] sm:$0xff]
        %v4793 = vld [vmem:[%s11 + $0x58] sm:$0xff]
        %v4794 = vld [vmem:[%s11 + $0x60] sm:$0xff]
        %v4795 = vld [vmem:[%s11 + $0x68] sm:$0xff]
        %v4796 = vld [vmem:[%s11 + $0x70] sm:$0xff]
        %v4797 = vld [vmem:[%s11 + $0x78] sm:$0xff]
        %v4798 = vld [vmem:[%s11 + $0x80] sm:$0xff]
        %v4799 = vld [vmem:[%s11 + $0x88] sm:$0xff]
        %v4800 = vld [vmem:[%s11 + $0x90] sm:$0xff]
        %v4801 = vld [vmem:[%s11 + $0x98] sm:$0xff]
        %v4802 = vld [vmem:[%s11 + $0xa0] sm:$0xff]
        %v4803 = vld [vmem:[%s11 + $0xa8] sm:$0xff]
        %v4804 = vld [vmem:[%s11 + $0xb0] sm:$0xff]
        %v4805 = vld [vmem:[%s11 + $0xb8] sm:$0xff]
        %v4806 = vld [vmem:[%s11 + $0xc0] sm:$0xff]
        %v4807 = vld [vmem:[%s11 + $0xc8] sm:$0xff]
        %v4808 = vld [vmem:[%s11 + $0xd0] sm:$0xff]
        %v4809 = vld [vmem:[%s11 + $0xd8] sm:$0xff]
        %v4810 = vld [vmem:[%s11 + $0xe0] sm:$0xff]
        %v4811 = vld [vmem:[%s11 + $0xe8] sm:$0xff]
        %v4812 = vld [vmem:[%s11 + $0xf0] sm:$0xff]
        %v4813 = vld [vmem:[%s11 + $0xf8] sm:$0xff]
        %v4814 = vld [vmem:[%s12] sm:$0x3]
        %v4847 = vunpack.c.l.b16 %v4782
        %v4848 = vunpack.c.h.b16 %v4782
        %v4849 = vunpack.c.l.b16 %v4783
        %v4850 = vunpack.c.h.b16 %v4783
        %v4851 = vunpack.c.l.b16 %v4784
        %v4852 = vunpack.c.h.b16 %v4784
        %v4853 = vunpack.c.l.b16 %v4785
        %v4854 = vunpack.c.h.b16 %v4785
        %v4855 = vunpack.c.l.b16 %v4786
        %v4856 = vunpack.c.h.b16 %v4786
        %v4857 = vunpack.c.l.b16 %v4787
        %v4858 = vunpack.c.h.b16 %v4787
        %v4859 = vunpack.c.l.b16 %v4788
        %v4860 = vunpack.c.h.b16 %v4788
        %v4861 = vunpack.c.l.b16 %v4789
        %v4862 = vunpack.c.h.b16 %v4789
        %v4863 = vunpack.c.l.b16 %v4790
        %v4864 = vunpack.c.h.b16 %v4790
        %v4865 = vunpack.c.l.b16 %v4791
        %v4866 = vunpack.c.h.b16 %v4791
        %v4867 = vunpack.c.l.b16 %v4792
        %v4868 = vunpack.c.h.b16 %v4792
        %v4869 = vunpack.c.l.b16 %v4793
        %v4870 = vunpack.c.h.b16 %v4793
        %v4871 = vunpack.c.l.b16 %v4794
        %v4872 = vunpack.c.h.b16 %v4794
        %v4873 = vunpack.c.l.b16 %v4795
        %v4874 = vunpack.c.h.b16 %v4795
        %v4875 = vunpack.c.l.b16 %v4796
        %v4876 = vunpack.c.h.b16 %v4796
        %v4877 = vunpack.c.l.b16 %v4797
        %v4878 = vunpack.c.h.b16 %v4797
        %v4879 = vunpack.c.l.b16 %v4798
        %v4880 = vunpack.c.h.b16 %v4798
        %v4881 = vunpack.c.l.b16 %v4799
        %v4882 = vunpack.c.h.b16 %v4799
        %v4883 = vunpack.c.l.b16 %v4800
        %v4884 = vunpack.c.h.b16 %v4800
        %v4885 = vunpack.c.l.b16 %v4801
        %v4886 = vunpack.c.h.b16 %v4801
        %v4887 = vunpack.c.l.b16 %v4802
        %v4888 = vunpack.c.h.b16 %v4802
        %v4889 = vunpack.c.l.b16 %v4803
        %v4890 = vunpack.c.h.b16 %v4803
        %v4891 = vunpack.c.l.b16 %v4804
        %v4892 = vunpack.c.h.b16 %v4804
        %v4893 = vunpack.c.l.b16 %v4805
        %v4894 = vunpack.c.h.b16 %v4805
        %v4895 = vunpack.c.l.b16 %v4806
        %v4896 = vunpack.c.h.b16 %v4806
        %v4897 = vunpack.c.l.b16 %v4807
        %v4898 = vunpack.c.h.b16 %v4807
        %v4899 = vunpack.c.l.b16 %v4808
        %v4900 = vunpack.c.h.b16 %v4808
        %v4901 = vunpack.c.l.b16 %v4809
        %v4902 = vunpack.c.h.b16 %v4809
        %v4903 = vunpack.c.l.b16 %v4810
        %v4904 = vunpack.c.h.b16 %v4810
        %v4905 = vunpack.c.l.b16 %v4811
        %v4906 = vunpack.c.h.b16 %v4811
        %v4907 = vunpack.c.l.b16 %v4812
        %v4908 = vunpack.c.h.b16 %v4812
        %v4909 = vunpack.c.l.b16 %v4813
        %v4910 = vunpack.c.h.b16 %v4813
        %v4911 = vpack.c.b16 %v4849, %v4847
        %v4912 = vpack.c.b16 %v4850, %v4848
        %v4913 = vpack.c.b16 %v4853, %v4851
        %v4914 = vpack.c.b16 %v4854, %v4852
        %v4915 = vpack.c.b16 %v4857, %v4855
        %v4916 = vpack.c.b16 %v4858, %v4856
        %v4917 = vpack.c.b16 %v4861, %v4859
        %v4918 = vpack.c.b16 %v4862, %v4860
        %v4919 = vpack.c.b16 %v4865, %v4863
        %v4920 = vpack.c.b16 %v4866, %v4864
        %v4921 = vpack.c.b16 %v4869, %v4867
        %v4922 = vpack.c.b16 %v4870, %v4868
        %v4923 = vpack.c.b16 %v4873, %v4871
        %v4924 = vpack.c.b16 %v4874, %v4872
        %v4925 = vpack.c.b16 %v4877, %v4875
        %v4926 = vpack.c.b16 %v4878, %v4876
        %v4927 = vpack.c.b16 %v4881, %v4879
        %v4928 = vpack.c.b16 %v4882, %v4880
        %v4929 = vpack.c.b16 %v4885, %v4883
        %v4930 = vpack.c.b16 %v4886, %v4884
        %v4931 = vpack.c.b16 %v4889, %v4887
        %v4932 = vpack.c.b16 %v4890, %v4888
        %v4933 = vpack.c.b16 %v4893, %v4891
        %v4934 = vpack.c.b16 %v4894, %v4892
        %v4935 = vpack.c.b16 %v4897, %v4895
        %v4936 = vpack.c.b16 %v4898, %v4896
        %v4937 = vpack.c.b16 %v4901, %v4899
        %v4938 = vpack.c.b16 %v4902, %v4900
        %v4939 = vpack.c.b16 %v4905, %v4903
        %v4940 = vpack.c.b16 %v4906, %v4904
        %v4941 = vpack.c.b16 %v4909, %v4907
        %v4942 = vpack.c.b16 %v4910, %v4908
        %v4976 = vlaneseq
        %v4977 = vshrl.u32 %v4976, 7
        %v4978 = vsub.s32 0, %v4977
        %v4979 = vrot.slane %v4814, %v4978
        %v4980 = vlaneseq
        %v4981 = vshrl.u32 %v4980, 7
        %v4982 = vsub.s32 1, %v4981
        %v4983 = vrot.slane %v4814, %v4982
        %4986 = vmatprep.subr.bf16.mxu0 %v4926
        %4987 = vmatpush1.bf16.msra.mxu0 %v4925
        %4988 = vmatprep.subr.bf16.mxu0 %v4924
        %4989 = vmatpush1.bf16.msra.mxu0 %v4923
        %4990 = vmatprep.subr.bf16.mxu0 %v4922
        %4991 = vmatpush1.bf16.msra.mxu0 %v4921
        %4992 = vmatprep.subr.bf16.mxu0 %v4920
        %4993 = vmatpush1.bf16.msra.mxu0 %v4919
        %4994 = vmatprep.subr.bf16.mxu0 %v4918
        %4995 = vmatpush1.bf16.msra.mxu0 %v4917
        %4996 = vmatprep.subr.bf16.mxu0 %v4916
        %4997 = vmatpush1.bf16.msra.mxu0 %v4915
        %4998 = vmatprep.subr.bf16.mxu0 %v4914
        %4999 = vmatpush1.bf16.msra.mxu0 %v4913
        %5000 = vmatprep.subr.bf16.mxu0 %v4912
        %5001 = vmatpush1.bf16.msra.mxu0 %v4911
        %5002 = vmatprep.subr.bf16.mxu0 %v4942
        %5003 = vmatpush2.bf16.msra.mxu0 %v4941
        %5004 = vmatprep.subr.bf16.mxu0 %v4940
        %5005 = vmatpush2.bf16.msra.mxu0 %v4939
        %5006 = vmatprep.subr.bf16.mxu0 %v4938
        %5007 = vmatpush2.bf16.msra.mxu0 %v4937
        %5008 = vmatprep.subr.bf16.mxu0 %v4936
        %5009 = vmatpush2.bf16.msra.mxu0 %v4935
        %5010 = vmatprep.subr.bf16.mxu0 %v4934
        %5011 = vmatpush2.bf16.msra.mxu0 %v4933
        %5012 = vmatprep.subr.bf16.mxu0 %v4932
        %5013 = vmatpush2.bf16.msra.mxu0 %v4931
        %5014 = vmatprep.subr.bf16.mxu0 %v4930
        %5015 = vmatpush2.bf16.msra.mxu0 %v4929
        %5016 = vmatprep.subr.bf16.mxu0 %v4928
        %5017 = vmatpush2.bf16.msra.mxu0 %v4927
        %5018 = vmatprep.mubr.bf16.mxu0 %v4781
        %5019 = vmatmul.mubr.bf16.gmra.mxu0 %v4780
        %v5020 = vpop.f32.mrf.mxu0
        %v5021 = vadd.f32 %v4979, %v5020
        %v5022 = vpop.f32.mrf.mxu0
        %v5023 = vadd.f32 %v4983, %v5022
        %v5024 = vpop.f32.mrf.mxu0
        %v5025 = vpop.f32.mrf.mxu0
        %5026 = vdwg.mxu0
        %v5027 = vmax.f32 %v5021, 0.0
        %v5028 = vmax.f32 %v5023, 0.0
        %v5029 = vpack.c.bf16 %v5027, %v5027
        %v5030 = vpack.c.bf16 %v5028, %v5028
        %v5031 = vld [vmem:[%s13] sm:$0xff]
        %v5032 = vld [vmem:[%s13 + $0x8] sm:$0xff]
        %v5033 = vld [vmem:[%s13 + $0x10] sm:$0xff]
        %v5034 = vld [vmem:[%s13 + $0x18] sm:$0xff]
        %v5035 = vld [vmem:[%s13 + $0x20] sm:$0xff]
        %v5036 = vld [vmem:[%s13 + $0x28] sm:$0xff]
        %v5037 = vld [vmem:[%s13 + $0x30] sm:$0xff]
        %v5038 = vld [vmem:[%s13 + $0x38] sm:$0xff]
        %v5039 = vld [vmem:[%s13 + $0x40] sm:$0xff]
        %v5040 = vld [vmem:[%s13 + $0x48] sm:$0xff]
        %v5041 = vld [vmem:[%s13 + $0x50] sm:$0xff]
        %v5042 = vld [vmem:[%s13 + $0x58] sm:$0xff]
        %v5043 = vld [vmem:[%s13 + $0x60] sm:$0xff]
        %v5044 = vld [vmem:[%s13 + $0x68] sm:$0xff]
        %v5045 = vld [vmem:[%s13 + $0x70] sm:$0xff]
        %v5046 = vld [vmem:[%s13 + $0x78] sm:$0xff]
        %v5047 = vld [vmem:[%s13 + $0x80] sm:$0xff]
        %v5048 = vld [vmem:[%s13 + $0x88] sm:$0xff]
        %v5049 = vld [vmem:[%s13 + $0x90] sm:$0xff]
        %v5050 = vld [vmem:[%s13 + $0x98] sm:$0xff]
        %v5051 = vld [vmem:[%s13 + $0xa0] sm:$0xff]
        %v5052 = vld [vmem:[%s13 + $0xa8] sm:$0xff]
        %v5053 = vld [vmem:[%s13 + $0xb0] sm:$0xff]
        %v5054 = vld [vmem:[%s13 + $0xb8] sm:$0xff]
        %v5055 = vld [vmem:[%s13 + $0xc0] sm:$0xff]
        %v5056 = vld [vmem:[%s13 + $0xc8] sm:$0xff]
        %v5057 = vld [vmem:[%s13 + $0xd0] sm:$0xff]
        %v5058 = vld [vmem:[%s13 + $0xd8] sm:$0xff]
        %v5059 = vld [vmem:[%s13 + $0xe0] sm:$0xff]
        %v5060 = vld [vmem:[%s13 + $0xe8] sm:$0xff]
        %v5061 = vld [vmem:[%s13 + $0xf0] sm:$0xff]
        %v5062 = vld [vmem:[%s13 + $0xf8] sm:$0xff]
        %v5063 = vld [vmem:[%s14] sm:$0x3]
        %v5096 = vunpack.c.l.b16 %v5031
        %v5097 = vunpack.c.h.b16 %v5031
        %v5098 = vunpack.c.l.b16 %v5032
        %v5099 = vunpack.c.h.b16 %v5032
        %v5100 = vunpack.c.l.b16 %v5033
        %v5101 = vunpack.c.h.b16 %v5033
        %v5102 = vunpack.c.l.b16 %v5034
        %v5103 = vunpack.c.h.b16 %v5034
        %v5104 = vunpack.c.l.b16 %v5035
        %v5105 = vunpack.c.h.b16 %v5035
        %v5106 = vunpack.c.l.b16 %v5036
        %v5107 = vunpack.c.h.b16 %v5036
        %v5108 = vunpack.c.l.b16 %v5037
        %v5109 = vunpack.c.h.b16 %v5037
        %v5110 = vunpack.c.l.b16 %v5038
        %v5111 = vunpack.c.h.b16 %v5038
        %v5112 = vunpack.c.l.b16 %v5039
        %v5113 = vunpack.c.h.b16 %v5039
        %v5114 = vunpack.c.l.b16 %v5040
        %v5115 = vunpack.c.h.b16 %v5040
        %v5116 = vunpack.c.l.b16 %v5041
        %v5117 = vunpack.c.h.b16 %v5041
        %v5118 = vunpack.c.l.b16 %v5042
        %v5119 = vunpack.c.h.b16 %v5042
        %v5120 = vunpack.c.l.b16 %v5043
        %v5121 = vunpack.c.h.b16 %v5043
        %v5122 = vunpack.c.l.b16 %v5044
        %v5123 = vunpack.c.h.b16 %v5044
        %v5124 = vunpack.c.l.b16 %v5045
        %v5125 = vunpack.c.h.b16 %v5045
        %v5126 = vunpack.c.l.b16 %v5046
        %v5127 = vunpack.c.h.b16 %v5046
        %v5128 = vunpack.c.l.b16 %v5047
        %v5129 = vunpack.c.h.b16 %v5047
        %v5130 = vunpack.c.l.b16 %v5048
        %v5131 = vunpack.c.h.b16 %v5048
        %v5132 = vunpack.c.l.b16 %v5049
        %v5133 = vunpack.c.h.b16 %v5049
        %v5134 = vunpack.c.l.b16 %v5050
        %v5135 = vunpack.c.h.b16 %v5050
        %v5136 = vunpack.c.l.b16 %v5051
        %v5137 = vunpack.c.h.b16 %v5051
        %v5138 = vunpack.c.l.b16 %v5052
        %v5139 = vunpack.c.h.b16 %v5052
        %v5140 = vunpack.c.l.b16 %v5053
        %v5141 = vunpack.c.h.b16 %v5053
        %v5142 = vunpack.c.l.b16 %v5054
        %v5143 = vunpack.c.h.b16 %v5054
        %v5144 = vunpack.c.l.b16 %v5055
        %v5145 = vunpack.c.h.b16 %v5055
        %v5146 = vunpack.c.l.b16 %v5056
        %v5147 = vunpack.c.h.b16 %v5056
        %v5148 = vunpack.c.l.b16 %v5057
        %v5149 = vunpack.c.h.b16 %v5057
        %v5150 = vunpack.c.l.b16 %v5058
        %v5151 = vunpack.c.h.b16 %v5058
        %v5152 = vunpack.c.l.b16 %v5059
        %v5153 = vunpack.c.h.b16 %v5059
        %v5154 = vunpack.c.l.b16 %v5060
        %v5155 = vunpack.c.h.b16 %v5060
        %v5156 = vunpack.c.l.b16 %v5061
        %v5157 = vunpack.c.h.b16 %v5061
        %v5158 = vunpack.c.l.b16 %v5062
        %v5159 = vunpack.c.h.b16 %v5062
        %v5160 = vpack.c.b16 %v5098, %v5096
        %v5161 = vpack.c.b16 %v5099, %v5097
        %v5162 = vpack.c.b16 %v5102, %v5100
        %v5163 = vpack.c.b16 %v5103, %v5101
        %v5164 = vpack.c.b16 %v5106, %v5104
        %v5165 = vpack.c.b16 %v5107, %v5105
        %v5166 = vpack.c.b16 %v5110, %v5108
        %v5167 = vpack.c.b16 %v5111, %v5109
        %v5168 = vpack.c.b16 %v5114, %v5112
        %v5169 = vpack.c.b16 %v5115, %v5113
        %v5170 = vpack.c.b16 %v5118, %v5116
        %v5171 = vpack.c.b16 %v5119, %v5117
        %v5172 = vpack.c.b16 %v5122, %v5120
        %v5173 = vpack.c.b16 %v5123, %v5121
        %v5174 = vpack.c.b16 %v5126, %v5124
        %v5175 = vpack.c.b16 %v5127, %v5125
        %v5176 = vpack.c.b16 %v5130, %v5128
        %v5177 = vpack.c.b16 %v5131, %v5129
        %v5178 = vpack.c.b16 %v5134, %v5132
        %v5179 = vpack.c.b16 %v5135, %v5133
        %v5180 = vpack.c.b16 %v5138, %v5136
        %v5181 = vpack.c.b16 %v5139, %v5137
        %v5182 = vpack.c.b16 %v5142, %v5140
        %v5183 = vpack.c.b16 %v5143, %v5141
        %v5184 = vpack.c.b16 %v5146, %v5144
        %v5185 = vpack.c.b16 %v5147, %v5145
        %v5186 = vpack.c.b16 %v5150, %v5148
        %v5187 = vpack.c.b16 %v5151, %v5149
        %v5188 = vpack.c.b16 %v5154, %v5152
        %v5189 = vpack.c.b16 %v5155, %v5153
        %v5190 = vpack.c.b16 %v5158, %v5156
        %v5191 = vpack.c.b16 %v5159, %v5157
        %v5225 = vlaneseq
        %v5226 = vshrl.u32 %v5225, 7
        %v5227 = vsub.s32 0, %v5226
        %v5228 = vrot.slane %v5063, %v5227
        %v5229 = vlaneseq
        %v5230 = vshrl.u32 %v5229, 7
        %v5231 = vsub.s32 1, %v5230
        %v5232 = vrot.slane %v5063, %v5231
        %5235 = vmatprep.subr.bf16.mxu0 %v5175
        %5236 = vmatpush1.bf16.msra.mxu0 %v5174
        %5237 = vmatprep.subr.bf16.mxu0 %v5173
        %5238 = vmatpush1.bf16.msra.mxu0 %v5172
        %5239 = vmatprep.subr.bf16.mxu0 %v5171
        %5240 = vmatpush1.bf16.msra.mxu0 %v5170
        %5241 = vmatprep.subr.bf16.mxu0 %v5169
        %5242 = vmatpush1.bf16.msra.mxu0 %v5168
        %5243 = vmatprep.subr.bf16.mxu0 %v5167
        %5244 = vmatpush1.bf16.msra.mxu0 %v5166
        %5245 = vmatprep.subr.bf16.mxu0 %v5165
        %5246 = vmatpush1.bf16.msra.mxu0 %v5164
        %5247 = vmatprep.subr.bf16.mxu0 %v5163
        %5248 = vmatpush1.bf16.msra.mxu0 %v5162
        %5249 = vmatprep.subr.bf16.mxu0 %v5161
        %5250 = vmatpush1.bf16.msra.mxu0 %v5160
        %5251 = vmatprep.subr.bf16.mxu0 %v5191
        %5252 = vmatpush2.bf16.msra.mxu0 %v5190
        %5253 = vmatprep.subr.bf16.mxu0 %v5189
        %5254 = vmatpush2.bf16.msra.mxu0 %v5188
        %5255 = vmatprep.subr.bf16.mxu0 %v5187
        %5256 = vmatpush2.bf16.msra.mxu0 %v5186
        %5257 = vmatprep.subr.bf16.mxu0 %v5185
        %5258 = vmatpush2.bf16.msra.mxu0 %v5184
        %5259 = vmatprep.subr.bf16.mxu0 %v5183
        %5260 = vmatpush2.bf16.msra.mxu0 %v5182
        %5261 = vmatprep.subr.bf16.mxu0 %v5181
        %5262 = vmatpush2.bf16.msra.mxu0 %v5180
        %5263 = vmatprep.subr.bf16.mxu0 %v5179
        %5264 = vmatpush2.bf16.msra.mxu0 %v5178
        %5265 = vmatprep.subr.bf16.mxu0 %v5177
        %5266 = vmatpush2.bf16.msra.mxu0 %v5176
        %5267 = vmatprep.mubr.bf16.mxu0 %v5030
        %5268 = vmatmul.mubr.bf16.gmra.mxu0 %v5029
        %v5269 = vpop.f32.mrf.mxu0
        %v5270 = vadd.f32 %v5228, %v5269
        %v5271 = vpop.f32.mrf.mxu0
        %v5272 = vadd.f32 %v5232, %v5271
        %v5273 = vpop.f32.mrf.mxu0
        %v5274 = vpop.f32.mrf.mxu0
        %5275 = vdwg.mxu0
        %v5276 = vmax.f32 %v5270, 0.0
        %v5277 = vmax.f32 %v5272, 0.0
        %v5278 = vpack.c.bf16 %v5276, %v5276
        %v5279 = vpack.c.bf16 %v5277, %v5277
        %v5280 = vld [vmem:[%s15] sm:$0xf]
        %v5281 = vld [vmem:[%s15 + $0x4] sm:$0xf]
        %v5282 = vld [vmem:[%s15 + $0x8] sm:$0xf]
        %v5283 = vld [vmem:[%s15 + $0xc] sm:$0xf]
        %v5284 = vld [vmem:[%s15 + $0x10] sm:$0xf]
        %v5285 = vld [vmem:[%s15 + $0x14] sm:$0xf]
        %v5286 = vld [vmem:[%s15 + $0x18] sm:$0xf]
        %v5287 = vld [vmem:[%s15 + $0x1c] sm:$0xf]
        %v5288 = vld [vmem:[%s15 + $0x20] sm:$0xf]
        %v5289 = vld [vmem:[%s15 + $0x24] sm:$0xf]
        %v5290 = vld [vmem:[%s15 + $0x28] sm:$0xf]
        %v5291 = vld [vmem:[%s15 + $0x2c] sm:$0xf]
        %v5292 = vld [vmem:[%s15 + $0x30] sm:$0xf]
        %v5293 = vld [vmem:[%s15 + $0x34] sm:$0xf]
        %v5294 = vld [vmem:[%s15 + $0x38] sm:$0xf]
        %v5295 = vld [vmem:[%s15 + $0x3c] sm:$0xf]
        %v5296 = vld [vmem:[%s15 + $0x40] sm:$0xf]
        %v5297 = vld [vmem:[%s15 + $0x44] sm:$0xf]
        %v5298 = vld [vmem:[%s15 + $0x48] sm:$0xf]
        %v5299 = vld [vmem:[%s15 + $0x4c] sm:$0xf]
        %v5300 = vld [vmem:[%s15 + $0x50] sm:$0xf]
        %v5301 = vld [vmem:[%s15 + $0x54] sm:$0xf]
        %v5302 = vld [vmem:[%s15 + $0x58] sm:$0xf]
        %v5303 = vld [vmem:[%s15 + $0x5c] sm:$0xf]
        %v5304 = vld [vmem:[%s15 + $0x60] sm:$0xf]
        %v5305 = vld [vmem:[%s15 + $0x64] sm:$0xf]
        %v5306 = vld [vmem:[%s15 + $0x68] sm:$0xf]
        %v5307 = vld [vmem:[%s15 + $0x6c] sm:$0xf]
        %v5308 = vld [vmem:[%s15 + $0x70] sm:$0xf]
        %v5309 = vld [vmem:[%s15 + $0x74] sm:$0xf]
        %v5310 = vld [vmem:[%s15 + $0x78] sm:$0xf]
        %v5311 = vld [vmem:[%s15 + $0x7c] sm:$0xf]
        %v5312 = vld [vmem:[%s16] sm:$0x1]
        %v5345 = vunpack.c.l.b16 %v5280
        %v5346 = vunpack.c.l.b16 %v5281
        %v5347 = vunpack.c.l.b16 %v5282
        %v5348 = vunpack.c.l.b16 %v5283
        %v5349 = vunpack.c.l.b16 %v5284
        %v5350 = vunpack.c.l.b16 %v5285
        %v5351 = vunpack.c.l.b16 %v5286
        %v5352 = vunpack.c.l.b16 %v5287
        %v5353 = vunpack.c.l.b16 %v5288
        %v5354 = vunpack.c.l.b16 %v5289
        %v5355 = vunpack.c.l.b16 %v5290
        %v5356 = vunpack.c.l.b16 %v5291
        %v5357 = vunpack.c.l.b16 %v5292
        %v5358 = vunpack.c.l.b16 %v5293
        %v5359 = vunpack.c.l.b16 %v5294
        %v5360 = vunpack.c.l.b16 %v5295
        %v5361 = vunpack.c.l.b16 %v5296
        %v5362 = vunpack.c.l.b16 %v5297
        %v5363 = vunpack.c.l.b16 %v5298
        %v5364 = vunpack.c.l.b16 %v5299
        %v5365 = vunpack.c.l.b16 %v5300
        %v5366 = vunpack.c.l.b16 %v5301
        %v5367 = vunpack.c.l.b16 %v5302
        %v5368 = vunpack.c.l.b16 %v5303
        %v5369 = vunpack.c.l.b16 %v5304
        %v5370 = vunpack.c.l.b16 %v5305
        %v5371 = vunpack.c.l.b16 %v5306
        %v5372 = vunpack.c.l.b16 %v5307
        %v5373 = vunpack.c.l.b16 %v5308
        %v5374 = vunpack.c.l.b16 %v5309
        %v5375 = vunpack.c.l.b16 %v5310
        %v5376 = vunpack.c.l.b16 %v5311
        %v5377 = vpack.c.b16 %v5346, %v5345
        %v5378 = vpack.c.b16 %v5348, %v5347
        %v5379 = vpack.c.b16 %v5350, %v5349
        %v5380 = vpack.c.b16 %v5352, %v5351
        %v5381 = vpack.c.b16 %v5354, %v5353
        %v5382 = vpack.c.b16 %v5356, %v5355
        %v5383 = vpack.c.b16 %v5358, %v5357
        %v5384 = vpack.c.b16 %v5360, %v5359
        %v5385 = vpack.c.b16 %v5362, %v5361
        %v5386 = vpack.c.b16 %v5364, %v5363
        %v5387 = vpack.c.b16 %v5366, %v5365
        %v5388 = vpack.c.b16 %v5368, %v5367
        %v5389 = vpack.c.b16 %v5370, %v5369
        %v5390 = vpack.c.b16 %v5372, %v5371
        %v5391 = vpack.c.b16 %v5374, %v5373
        %v5392 = vpack.c.b16 %v5376, %v5375
        %5409 = vmatprep.subr.bf16.mxu0 0
        %5410 = vmatpush1.bf16.msra.mxu0 %v5384
        %5411 = vmatprep.subr.bf16.mxu0 0
        %5412 = vmatpush1.bf16.msra.mxu0 %v5383
        %5413 = vmatprep.subr.bf16.mxu0 0
        %5414 = vmatpush1.bf16.msra.mxu0 %v5382
        %5415 = vmatprep.subr.bf16.mxu0 0
        %5416 = vmatpush1.bf16.msra.mxu0 %v5381
        %5417 = vmatprep.subr.bf16.mxu0 0
        %5418 = vmatpush1.bf16.msra.mxu0 %v5380
        %5419 = vmatprep.subr.bf16.mxu0 0
        %5420 = vmatpush1.bf16.msra.mxu0 %v5379
        %5421 = vmatprep.subr.bf16.mxu0 0
        %5422 = vmatpush1.bf16.msra.mxu0 %v5378
        %5423 = vmatprep.subr.bf16.mxu0 0
        %5424 = vmatpush1.bf16.msra.mxu0 %v5377
        %5425 = vmatprep.subr.bf16.mxu0 0
        %5426 = vmatpush2.bf16.msra.mxu0 %v5392
        %5427 = vmatprep.subr.bf16.mxu0 0
        %5428 = vmatpush2.bf16.msra.mxu0 %v5391
        %5429 = vmatprep.subr.bf16.mxu0 0
        %5430 = vmatpush2.bf16.msra.mxu0 %v5390
        %5431 = vmatprep.subr.bf16.mxu0 0
        %5432 = vmatpush2.bf16.msra.mxu0 %v5389
        %5433 = vmatprep.subr.bf16.mxu0 0
        %5434 = vmatpush2.bf16.msra.mxu0 %v5388
        %5435 = vmatprep.subr.bf16.mxu0 0
        %5436 = vmatpush2.bf16.msra.mxu0 %v5387
        %5437 = vmatprep.subr.bf16.mxu0 0
        %5438 = vmatpush2.bf16.msra.mxu0 %v5386
        %5439 = vmatprep.subr.bf16.mxu0 0
        %5440 = vmatpush2.bf16.msra.mxu0 %v5385
        %5441 = vmatprep.mubr.bf16.mxu0 %v5279
        %5442 = vmatmul.mubr.bf16.gmra.mxu0 %v5278
        %v5443 = vpop.f32.mrf.mxu0
        %v5444 = vadd.f32 %v5312, %v5443
        %v5445 = vpop.f32.mrf.mxu0
        %v5446 = vpop.f32.mrf.mxu0
        %v5447 = vpop.f32.mrf.mxu0
        %5448 = vdwg.mxu0
        %5449 = vst [vmem:[%s540] sm:$0x1] %v5444
        %s5450 = sand.u32 %s401, 1
        %s5451 = scalar_lea.sflag [#allocation4], %s5450
        %s5452 = sand.u32 %s401, 1
        %s5453 = scalar_lea.vmem [#allocation3], %s5452
        // Predicated region
        $region89: #{alexnet_forward.1} parent=87 // pred_check
          %p5454 = pneg %p411
        $region90: #{alexnet_forward.1} parent=87 // pred_check_branch
          %5456 = sbr.rel (%p5454) target = $region92
        $region91: #{alexnet_forward.1} parent=87 // pred_region
          %s5458 = ssub.s32 16, 16
          %5459 = vsyncadd %s5451, %s5458
          %s5460 = smul.addr %s31, 16
          %s5461 = scalar_lea.hbm %s17, %s5460
          %s5463 = sshll.u32 %s5453, 4
          %s5464 = int_to_ptr.vmem [resolvable:$true] %s5463
          %5466 = dma.vmem_to_hbm [thread:$0]  %s5464, 16, %s5461, %s5451
        $region92: #{alexnet_forward.1} parent=87 // pred_fallthru
          _
      $region88: #{alexnet_forward.1} parent=5 // pred_fallthru
        _
      %p5467 = scmp.le.s32.totalorder 2, %s26
      // Predicated region
      $region93: #{alexnet_forward.1} parent=5 // pred_check
        %p5468 = pneg %p5467
      $region94: #{alexnet_forward.1} parent=5 // pred_check_branch
        %5470 = sbr.rel (%p5468) target = $region96
      $region95: #{alexnet_forward.1} parent=5 // pred_region
        %s5471 = ssub.s32 %s26, 2
        // Predicated region
        $region97: #{alexnet_forward.1} parent=95 // pred_check
          %p5472 = pneg %p417
        $region98: #{alexnet_forward.1} parent=95 // pred_check_branch
          %5474 = sbr.rel (%p5472) target = $region100
        $region99: #{alexnet_forward.1} parent=95 // pred_region
          %s5475 = sand.u32 %s402, 1
          %s5476 = scalar_lea.sflag [#allocation4], %s5475
          %s5477 = sand.u32 %s402, 1
          %s5478 = scalar_lea.vmem [#allocation3], %s5477
          %5479 = dma.done %s5476, 16
        $region100: #{alexnet_forward.1} parent=95 // pred_fallthru
          _
      $region96: #{alexnet_forward.1} parent=5 // pred_fallthru
        _
    $region6: #{alexnet_forward.1} parent=1 // loop_footer
      %s30 = sadd.s32 1, %s26
    $region7: #{alexnet_forward.1} parent=1 // loop_footer_branch
      %25 = sbr.rel target = $region3
    $region8: #{alexnet_forward.1} parent=1 // loop_exit
      _
    %5480 = vsyncpa [#allocation4], 1
    %s5481 = scalar_lea.sflag [#allocation4], 1
    %5482 = vsyncpa %s5481, 1

</llo_original>
